<compile_context>
chip_gen: v7x
topology: tpu7x:2x2x1
jax: 0.10.0
libtpu: 0.0.40
codegen_flags: <defaults>
</compile_context>

<pallas_src>
import jax
import jax.numpy as jnp
from jax import lax
from jax.experimental import pallas as pl
from jax.experimental.pallas import tpu as pltpu

INPUT_SIZE = 20
HIDDEN = 64
NUM_CLASSES = 5
OUT_PAD = 128  # lane-dense padded head width; sliced back to NUM_CLASSES in wrapper


def _lstm_head_kernel(x_ref, wbig_ref, wx_ref, bbig_ref, wout_ref, bout_ref,
                      out_ref, addend_ref):
    H = HIDDEN
    T, B, _ = x_ref.shape

    wx = wx_ref[...]                                        # (I, 8H)
    b_big = jnp.broadcast_to(bbig_ref[...], (B, 8 * H))     # hoisted once

    # ---- One-time precompute (off the recurrent chain) ----------------------
    # addend[t] = x(t+1) @ Wx_big + b_big:
    #   layer-2 gate columns -> b2                  (Wx_big is zero there)
    #   layer-1 gate columns -> x(t+1)@W_ih1 + b1   (non-recurrent part of
    #                                                gates1(t+1))
    # Slot T-1 only needs its layer-2 half (= b2); its layer-1 half feeds an
    # unused h1(T), so b_big alone is fine (and finite).
    # NOTE(v7x scaling): this whole-sequence-resident scratch is T*8*8H*4 bytes;
    # for large T chunk the sequence instead (see vmem_limit comment below).
    for t in range(T - 1):                                  # static, one-time
        addend_ref[t] = (jnp.dot(x_ref[t + 1], wx,
                                 preferred_element_type=jnp.float32) + b_big)
    addend_ref[T - 1] = b_big

    # ---- Initial carry: h_cat = [h2(-1)=0 | h1(0)], c_cat = [0 | c1(0)] ------
    g0 = jnp.dot(x_ref[0], wx, preferred_element_type=jnp.float32) + b_big
    sg0 = jax.nn.sigmoid(g0[:, :6 * H])
    tg0 = jnp.tanh(g0[:, 6 * H:])
    c0 = sg0[:, :2 * H] * tg0                               # f * c(-1) == 0
    h0 = sg0[:, 4 * H:6 * H] * jnp.tanh(c0)
    hi_mask = (lax.broadcasted_iota(jnp.int32, (B, 2 * H), 1) >= H
               ).astype(jnp.float32)                        # keep layer-1 half only
    h_cat0 = h0 * hi_mask
    c_cat0 = c0 * hi_mask

    w_big = wbig_ref[...]                                   # (2H, 8H), hoisted

    # TODO(synk): if the bundle dump shows W_big being re-pushed into the MXU
    # every unrolled step, drive the MXU explicitly (pltpu.matmul_push_rhs once
    # before the loop, matmul_acc_lhs / matmul_pop per step).

    def step(t, carry):
        # carry: h_cat = [h2(t-1) | h1(t)], c_cat = [c2(t-1) | c1(t)]
        h_cat, c_cat = carry
        g = jnp.dot(h_cat, w_big,
                    preferred_element_type=jnp.float32) + addend_ref[t]
        # Column layout [i2|i1 | f2|f1 | o2|o1 | g2|g1]: one sigmoid slab + one
        # tanh slab covers both cells; all slice starts are vreg-aligned.
        sg = jax.nn.sigmoid(g[:, :6 * H])
        tg = jnp.tanh(g[:, 6 * H:])
        c_new = sg[:, 2 * H:4 * H] * c_cat + sg[:, :2 * H] * tg
        h_new = sg[:, 4 * H:6 * H] * jnp.tanh(c_new)        # = [h2(t) | h1(t+1)]
        return h_new, c_new

    unroll = True if T <= 32 else 4                         # avoid code blow-up at large T
    h_cat, _ = lax.fori_loop(0, T, step, (h_cat0, c_cat0), unroll=unroll)

    # Linear head on h2 at the last time step (padded to 128 lanes).
    out_ref[...] = (jnp.dot(h_cat[:, :H], wout_ref[...],
                            preferred_element_type=jnp.float32) + bout_ref[...])


def _gate_blocks(w):
    """Split (R, 4H) with PyTorch column order [i|f|g|o] into (i, f, o, g)."""
    H = HIDDEN
    return w[:, 0:H], w[:, H:2 * H], w[:, 3 * H:4 * H], w[:, 2 * H:3 * H]


def rnn_forward(x, params):
    """x: (B, T, INPUT_SIZE) float32 (batch_first, like PyTorch). Returns (B, 5)."""
    wih1, whh1, b1, wih2, whh2, b2, wout, bout = params
    B, T, I = x.shape
    assert I == INPUT_SIZE
    H = HIDDEN

    x_tm = jnp.transpose(x, (1, 0, 2))                      # (T, B, I) time-major

    # --- Skew-fused recurrent weight W_big: (2H, 8H) ------------------------
    # Columns interleaved per gate type: [i2|i1 | f2|f1 | o2|o1 | g2|g1].
    i2h, f2h, o2h, g2h = _gate_blocks(whh2)                 # rows 0:H   (x h2(t-1))
    i2x, f2x, o2x, g2x = _gate_blocks(wih2)                 # rows H:2H  (x h1(t))
    i1h, f1h, o1h, g1h = _gate_blocks(whh1)                 # rows H:2H  (x h1(t))
    zhh = jnp.zeros((H, H), jnp.float32)
    w_big = jnp.concatenate([
        jnp.concatenate([i2h, zhh, f2h, zhh, o2h, zhh, g2h, zhh], axis=1),
        jnp.concatenate([i2x, i1h, f2x, f1h, o2x, o1h, g2x, g1h], axis=1),
    ], axis=0)                                              # (2H, 8H)

    # --- Input-projection weight / bias in the same interleaved layout ------
    i1x, f1x, o1x, g1x = _gate_blocks(wih1)
    zi = jnp.zeros((I, H), jnp.float32)
    wx_big = jnp.concatenate([zi, i1x, zi, f1x, zi, o1x, zi, g1x], axis=1)  # (I, 8H)
    i2b, f2b, o2b, g2b = _gate_blocks(b2)
    i1b, f1b, o1b, g1b = _gate_blocks(b1)
    b_big = jnp.concatenate([i2b, i1b, f2b, f1b, o2b, o1b, g2b, g1b],
                            axis=1)                          # (1, 8H)

    # --- Lane-dense padded head ----------------------------------------------
    wout_p = jnp.zeros((H, OUT_PAD), jnp.float32).at[:, :NUM_CLASSES].set(wout)
    bout_p = jnp.zeros((1, OUT_PAD), jnp.float32).at[:, :NUM_CLASSES].set(bout)

    flops = int(T * 2 * B * (2 * H) * (8 * H)               # fused recurrent matmul
                + (T + 1) * 2 * B * I * (8 * H)             # addend precompute + init
                + 2 * B * H * OUT_PAD)                      # head
    transcendentals = int((T + 1) * B * 10 * H)             # sigmoid(6H)+tanh(2H)+tanh(2H)
    bytes_accessed = int(4 * (x_tm.size + w_big.size + wx_big.size + b_big.size
                              + wout_p.size + bout_p.size + B * OUT_PAD))

    # Explicit VMEM budget: x (double-buffered) + addend scratch + weights.
    # Scaling note: addend is T * 8(sublane-padded B) * 8H * 4 bytes; on v7x
    # (64 MiB physical VMEM) chunk the sequence over T before this gets large.
    bpad = 8
    vmem_bytes = 4 * (2 * T * bpad * 128                    # x_tm, padded, x2 buffers
                      + T * bpad * 8 * H                    # addend scratch
                      + 2 * (2 * H + 24 + bpad) * 8 * H     # w_big + wx_big + b_big
                      + 2 * (H + bpad) * OUT_PAD            # head weights
                      + 2 * bpad * OUT_PAD)                 # output
    vmem_limit = min(max(vmem_bytes + (2 << 20), 16 << 20), 64 << 20)

    # TODO(synk): for large B, split the batch across TensorCores (leading
    # parallel grid axis of size num_cores); at B=2 it is a no-op.
    grid_spec = pltpu.PrefetchScalarGridSpec(
        num_scalar_prefetch=0,
        grid=(1,),  # whole sequence resident; recurrence loops inside the kernel
        in_specs=[
            pl.BlockSpec((T, B, I), lambda i: (0, 0, 0)),        # x (time-major)
            pl.BlockSpec((2 * H, 8 * H), lambda i: (0, 0)),      # skew-fused W_big
            pl.BlockSpec((I, 8 * H), lambda i: (0, 0)),          # Wx_big (x projection)
            pl.BlockSpec((1, 8 * H), lambda i: (0, 0)),          # interleaved biases
            pl.BlockSpec((H, OUT_PAD), lambda i: (0, 0)),        # W_out (padded)
            pl.BlockSpec((1, OUT_PAD), lambda i: (0, 0)),        # b_out (padded)
        ],
        out_specs=pl.BlockSpec((B, OUT_PAD), lambda i: (0, 0)),
        scratch_shapes=[pltpu.VMEM((T, B, 8 * H), jnp.float32)],  # per-step addend
    )

    out_padded = pl.pallas_call(
        _lstm_head_kernel,
        out_shape=jax.ShapeDtypeStruct((B, OUT_PAD), jnp.float32),
        grid_spec=grid_spec,
        compiler_params=pltpu.CompilerParams(
            dimension_semantics=("arbitrary",),
            vmem_limit_bytes=int(vmem_limit)),
        cost_estimate=pl.CostEstimate(flops=flops,
                                      transcendentals=transcendentals,
                                      bytes_accessed=bytes_accessed),
    )(x_tm, w_big, wx_big, b_big, wout_p, bout_p)

    return out_padded[:, :NUM_CLASSES]


def rnn_forward_ref(x, params):
    """Pure-JAX reference (same math as the PyTorch module) for validation."""
    wih1, whh1, b1, wih2, whh2, b2, wout, bout = params
    B = x.shape[0]
    H = HIDDEN

    def cell(xt, h, c, wih, whh, b):
        gates = xt @ wih + h @ whh + b
        i = jax.nn.sigmoid(gates[:, :H])
        f = jax.nn.sigmoid(gates[:, H:2 * H])
        g = jnp.tanh(gates[:, 2 * H:3 * H])
        o = jax.nn.sigmoid(gates[:, 3 * H:])
        c = f * c + i * g
        h = o * jnp.tanh(c)
        return h, c

    def step(carry, xt):
        h1, c1, h2, c2 = carry
        h1, c1 = cell(xt, h1, c1, wih1, whh1, b1)
        h2, c2 = cell(h1, h2, c2, wih2, whh2, b2)
        return (h1, c1, h2, c2), None

    init = tuple(jnp.zeros((B, H), jnp.float32) for _ in range(4))
    (h1, c1, h2, c2), _ = lax.scan(step, init, jnp.transpose(x, (1, 0, 2)))
    return h2 @ wout + bout


def init_params(key):
    """Deterministic synthetic init mimicking PyTorch's U(-1/sqrt(H), 1/sqrt(H)).

    NOTE: b1 / b2 here are the COMBINED biases (bias_ih + bias_hh). When
    importing real PyTorch weights, sum the two bias vectors per layer first.
    """
    k = 1.0 / jnp.sqrt(jnp.float32(HIDDEN))
    keys = jax.random.split(key, 8)

    def u(kk, shape):
        return jax.random.uniform(kk, shape, jnp.float32, minval=-k, maxval=k)

    wih1 = u(keys[0], (INPUT_SIZE, 4 * HIDDEN))
    whh1 = u(keys[1], (HIDDEN, 4 * HIDDEN))
    b1 = u(keys[2], (1, 4 * HIDDEN))
    wih2 = u(keys[3], (HIDDEN, 4 * HIDDEN))
    whh2 = u(keys[4], (HIDDEN, 4 * HIDDEN))
    b2 = u(keys[5], (1, 4 * HIDDEN))
    wout = u(keys[6], (HIDDEN, NUM_CLASSES))
    bout = u(keys[7], (1, NUM_CLASSES))
    return (wih1, whh1, b1, wih2, whh2, b2, wout, bout)


if __name__ == "__main__":
    B, T = 2, 8
    key = jax.random.PRNGKey(0)
    kx, kp = jax.random.split(key)
    x = jax.random.normal(kx, (B, T, INPUT_SIZE), dtype=jnp.float32)
    params = init_params(kp)

    out = rnn_forward(x, params)
    out = jax.block_until_ready(out)

    ref = rnn_forward_ref(x, params)
    assert out.shape == (B, NUM_CLASSES)
    assert jnp.allclose(out, ref, atol=5e-5, rtol=5e-5), (out, ref)
    print("KERNEL_OK")
</pallas_src>

<mosaic_0001>
module attributes {stable_mosaic.version = 11 : i64} {
  func.func @_lstm_head_kernel(%arg0: i32, %arg1: memref<8x2x20xf32, #tpu.memory_space<vmem>>, %arg2: memref<128x512xf32, #tpu.memory_space<vmem>>, %arg3: memref<20x512xf32, #tpu.memory_space<vmem>>, %arg4: memref<1x512xf32, #tpu.memory_space<vmem>>, %arg5: memref<64x128xf32, #tpu.memory_space<vmem>>, %arg6: memref<1x128xf32, #tpu.memory_space<vmem>>, %arg7: memref<2x128xf32, #tpu.memory_space<vmem>>, %arg8: memref<8x2x512xf32, #tpu.memory_space<vmem>>) attributes {dimension_semantics = [#tpu.dimension_semantics<arbitrary>], iteration_bounds = array<i64: 1>, scalar_prefetch = 0 : i64, scratch_operands = 1 : i64, tpu.core_type = #tpu.core_type<tc>, window_params = [{pipeline_mode = #tpu.pipeline_mode<synchronous>, transform_indices = @transform_0, window_bounds = array<i64: 8, 2, 20>}, {pipeline_mode = #tpu.pipeline_mode<synchronous>, transform_indices = @transform_1, window_bounds = array<i64: 128, 512>}, {pipeline_mode = #tpu.pipeline_mode<synchronous>, transform_indices = @transform_2, window_bounds = array<i64: 20, 512>}, {pipeline_mode = #tpu.pipeline_mode<synchronous>, transform_indices = @transform_3, window_bounds = array<i64: 1, 512>}, {pipeline_mode = #tpu.pipeline_mode<synchronous>, transform_indices = @transform_4, window_bounds = array<i64: 64, 128>}, {pipeline_mode = #tpu.pipeline_mode<synchronous>, transform_indices = @transform_5, window_bounds = array<i64: 1, 128>}, {pipeline_mode = #tpu.pipeline_mode<synchronous>, transform_indices = @transform_6, window_bounds = array<i64: 2, 128>}]} {
    %c0 = arith.constant 0 : index
    %c0_0 = arith.constant 0 : index
    %0 = vector.load %arg3[%c0, %c0_0] : memref<20x512xf32, #tpu.memory_space<vmem>>, vector<20x512xf32>
    %c0_1 = arith.constant 0 : index
    %c0_2 = arith.constant 0 : index
    %1 = vector.load %arg4[%c0_1, %c0_2] : memref<1x512xf32, #tpu.memory_space<vmem>>, vector<1x512xf32>
    %2 = vector.shape_cast %1 : vector<1x512xf32> to vector<1x512xf32>
    %3 = vector.broadcast %2 : vector<1x512xf32> to vector<2x512xf32>
    %c1 = arith.constant 1 : index
    %c0_3 = arith.constant 0 : index
    %c0_4 = arith.constant 0 : index
    %4 = vector.load %arg1[%c1, %c0_3, %c0_4] : memref<8x2x20xf32, #tpu.memory_space<vmem>>, vector<1x2x20xf32>
    %5 = vector.shape_cast %4 : vector<1x2x20xf32> to vector<2x20xf32>
    %cst = arith.constant dense<0.000000e+00> : vector<2x512xf32>
    %6 = tpu.matmul %5, %0, %cst {dimension_numbers = #tpu.dot_dimension_numbers<[1], [0], [0], [1], [0, 0, 1, 1], [], []>} : vector<2x20xf32>, vector<20x512xf32>, vector<2x512xf32> -> vector<2x512xf32>
    %7 = arith.addf %6, %3 : vector<2x512xf32>
    %c0_5 = arith.constant 0 : index
    %c0_6 = arith.constant 0 : index
    %c0_7 = arith.constant 0 : index
    %8 = vector.load %arg8[%c0_5, %c0_6, %c0_7] : memref<8x2x512xf32, #tpu.memory_space<vmem>>, vector<1x2x512xf32>
    %9 = vector.shape_cast %8 : vector<1x2x512xf32> to vector<2x512xf32>
    %10 = vector.shape_cast %7 : vector<2x512xf32> to vector<1x2x512xf32>
    tpu.vector_store %arg8[%c0_5, %c0_6, %c0_7], %10 {strides = array<i32>} : memref<8x2x512xf32, #tpu.memory_space<vmem>>, vector<1x2x512xf32>,
    %c2 = arith.constant 2 : index
    %c0_8 = arith.constant 0 : index
    %c0_9 = arith.constant 0 : index
    %11 = vector.load %arg1[%c2, %c0_8, %c0_9] : memref<8x2x20xf32, #tpu.memory_space<vmem>>, vector<1x2x20xf32>
    %12 = vector.shape_cast %11 : vector<1x2x20xf32> to vector<2x20xf32>
    %cst_10 = arith.constant dense<0.000000e+00> : vector<2x512xf32>
    %13 = tpu.matmul %12, %0, %cst_10 {dimension_numbers = #tpu.dot_dimension_numbers<[1], [0], [0], [1], [0, 0, 1, 1], [], []>} : vector<2x20xf32>, vector<20x512xf32>, vector<2x512xf32> -> vector<2x512xf32>
    %14 = arith.addf %13, %3 : vector<2x512xf32>
    %c1_11 = arith.constant 1 : index
    %c0_12 = arith.constant 0 : index
    %c0_13 = arith.constant 0 : index
    %15 = vector.load %arg8[%c1_11, %c0_12, %c0_13] : memref<8x2x512xf32, #tpu.memory_space<vmem>>, vector<1x2x512xf32>
    %16 = vector.shape_cast %15 : vector<1x2x512xf32> to vector<2x512xf32>
    %17 = vector.shape_cast %14 : vector<2x512xf32> to vector<1x2x512xf32>
    tpu.vector_store %arg8[%c1_11, %c0_12, %c0_13], %17 {strides = array<i32>} : memref<8x2x512xf32, #tpu.memory_space<vmem>>, vector<1x2x512xf32>,
    %c3 = arith.constant 3 : index
    %c0_14 = arith.constant 0 : index
    %c0_15 = arith.constant 0 : index
    %18 = vector.load %arg1[%c3, %c0_14, %c0_15] : memref<8x2x20xf32, #tpu.memory_space<vmem>>, vector<1x2x20xf32>
    %19 = vector.shape_cast %18 : vector<1x2x20xf32> to vector<2x20xf32>
    %cst_16 = arith.constant dense<0.000000e+00> : vector<2x512xf32>
    %20 = tpu.matmul %19, %0, %cst_16 {dimension_numbers = #tpu.dot_dimension_numbers<[1], [0], [0], [1], [0, 0, 1, 1], [], []>} : vector<2x20xf32>, vector<20x512xf32>, vector<2x512xf32> -> vector<2x512xf32>
    %21 = arith.addf %20, %3 : vector<2x512xf32>
    %c2_17 = arith.constant 2 : index
    %c0_18 = arith.constant 0 : index
    %c0_19 = arith.constant 0 : index
    %22 = vector.load %arg8[%c2_17, %c0_18, %c0_19] : memref<8x2x512xf32, #tpu.memory_space<vmem>>, vector<1x2x512xf32>
    %23 = vector.shape_cast %22 : vector<1x2x512xf32> to vector<2x512xf32>
    %24 = vector.shape_cast %21 : vector<2x512xf32> to vector<1x2x512xf32>
    tpu.vector_store %arg8[%c2_17, %c0_18, %c0_19], %24 {strides = array<i32>} : memref<8x2x512xf32, #tpu.memory_space<vmem>>, vector<1x2x512xf32>,
    %c4 = arith.constant 4 : index
    %c0_20 = arith.constant 0 : index
    %c0_21 = arith.constant 0 : index
    %25 = vector.load %arg1[%c4, %c0_20, %c0_21] : memref<8x2x20xf32, #tpu.memory_space<vmem>>, vector<1x2x20xf32>
    %26 = vector.shape_cast %25 : vector<1x2x20xf32> to vector<2x20xf32>
    %cst_22 = arith.constant dense<0.000000e+00> : vector<2x512xf32>
    %27 = tpu.matmul %26, %0, %cst_22 {dimension_numbers = #tpu.dot_dimension_numbers<[1], [0], [0], [1], [0, 0, 1, 1], [], []>} : vector<2x20xf32>, vector<20x512xf32>, vector<2x512xf32> -> vector<2x512xf32>
    %28 = arith.addf %27, %3 : vector<2x512xf32>
    %c3_23 = arith.constant 3 : index
    %c0_24 = arith.constant 0 : index
    %c0_25 = arith.constant 0 : index
    %29 = vector.load %arg8[%c3_23, %c0_24, %c0_25] : memref<8x2x512xf32, #tpu.memory_space<vmem>>, vector<1x2x512xf32>
    %30 = vector.shape_cast %29 : vector<1x2x512xf32> to vector<2x512xf32>
    %31 = vector.shape_cast %28 : vector<2x512xf32> to vector<1x2x512xf32>
    tpu.vector_store %arg8[%c3_23, %c0_24, %c0_25], %31 {strides = array<i32>} : memref<8x2x512xf32, #tpu.memory_space<vmem>>, vector<1x2x512xf32>,
    %c5 = arith.constant 5 : index
    %c0_26 = arith.constant 0 : index
    %c0_27 = arith.constant 0 : index
    %32 = vector.load %arg1[%c5, %c0_26, %c0_27] : memref<8x2x20xf32, #tpu.memory_space<vmem>>, vector<1x2x20xf32>
    %33 = vector.shape_cast %32 : vector<1x2x20xf32> to vector<2x20xf32>
    %cst_28 = arith.constant dense<0.000000e+00> : vector<2x512xf32>
    %34 = tpu.matmul %33, %0, %cst_28 {dimension_numbers = #tpu.dot_dimension_numbers<[1], [0], [0], [1], [0, 0, 1, 1], [], []>} : vector<2x20xf32>, vector<20x512xf32>, vector<2x512xf32> -> vector<2x512xf32>
    %35 = arith.addf %34, %3 : vector<2x512xf32>
    %c4_29 = arith.constant 4 : index
    %c0_30 = arith.constant 0 : index
    %c0_31 = arith.constant 0 : index
    %36 = vector.load %arg8[%c4_29, %c0_30, %c0_31] : memref<8x2x512xf32, #tpu.memory_space<vmem>>, vector<1x2x512xf32>
    %37 = vector.shape_cast %36 : vector<1x2x512xf32> to vector<2x512xf32>
    %38 = vector.shape_cast %35 : vector<2x512xf32> to vector<1x2x512xf32>
    tpu.vector_store %arg8[%c4_29, %c0_30, %c0_31], %38 {strides = array<i32>} : memref<8x2x512xf32, #tpu.memory_space<vmem>>, vector<1x2x512xf32>,
    %c6 = arith.constant 6 : index
    %c0_32 = arith.constant 0 : index
    %c0_33 = arith.constant 0 : index
    %39 = vector.load %arg1[%c6, %c0_32, %c0_33] : memref<8x2x20xf32, #tpu.memory_space<vmem>>, vector<1x2x20xf32>
    %40 = vector.shape_cast %39 : vector<1x2x20xf32> to vector<2x20xf32>
    %cst_34 = arith.constant dense<0.000000e+00> : vector<2x512xf32>
    %41 = tpu.matmul %40, %0, %cst_34 {dimension_numbers = #tpu.dot_dimension_numbers<[1], [0], [0], [1], [0, 0, 1, 1], [], []>} : vector<2x20xf32>, vector<20x512xf32>, vector<2x512xf32> -> vector<2x512xf32>
    %42 = arith.addf %41, %3 : vector<2x512xf32>
    %c5_35 = arith.constant 5 : index
    %c0_36 = arith.constant 0 : index
    %c0_37 = arith.constant 0 : index
    %43 = vector.load %arg8[%c5_35, %c0_36, %c0_37] : memref<8x2x512xf32, #tpu.memory_space<vmem>>, vector<1x2x512xf32>
    %44 = vector.shape_cast %43 : vector<1x2x512xf32> to vector<2x512xf32>
    %45 = vector.shape_cast %42 : vector<2x512xf32> to vector<1x2x512xf32>
    tpu.vector_store %arg8[%c5_35, %c0_36, %c0_37], %45 {strides = array<i32>} : memref<8x2x512xf32, #tpu.memory_space<vmem>>, vector<1x2x512xf32>,
    %c7 = arith.constant 7 : index
    %c0_38 = arith.constant 0 : index
    %c0_39 = arith.constant 0 : index
    %46 = vector.load %arg1[%c7, %c0_38, %c0_39] : memref<8x2x20xf32, #tpu.memory_space<vmem>>, vector<1x2x20xf32>
    %47 = vector.shape_cast %46 : vector<1x2x20xf32> to vector<2x20xf32>
    %cst_40 = arith.constant dense<0.000000e+00> : vector<2x512xf32>
    %48 = tpu.matmul %47, %0, %cst_40 {dimension_numbers = #tpu.dot_dimension_numbers<[1], [0], [0], [1], [0, 0, 1, 1], [], []>} : vector<2x20xf32>, vector<20x512xf32>, vector<2x512xf32> -> vector<2x512xf32>
    %49 = arith.addf %48, %3 : vector<2x512xf32>
    %c6_41 = arith.constant 6 : index
    %c0_42 = arith.constant 0 : index
    %c0_43 = arith.constant 0 : index
    %50 = vector.load %arg8[%c6_41, %c0_42, %c0_43] : memref<8x2x512xf32, #tpu.memory_space<vmem>>, vector<1x2x512xf32>
    %51 = vector.shape_cast %50 : vector<1x2x512xf32> to vector<2x512xf32>
    %52 = vector.shape_cast %49 : vector<2x512xf32> to vector<1x2x512xf32>
    tpu.vector_store %arg8[%c6_41, %c0_42, %c0_43], %52 {strides = array<i32>} : memref<8x2x512xf32, #tpu.memory_space<vmem>>, vector<1x2x512xf32>,
    %c7_44 = arith.constant 7 : index
    %c0_45 = arith.constant 0 : index
    %c0_46 = arith.constant 0 : index
    %53 = vector.load %arg8[%c7_44, %c0_45, %c0_46] : memref<8x2x512xf32, #tpu.memory_space<vmem>>, vector<1x2x512xf32>
    %54 = vector.shape_cast %53 : vector<1x2x512xf32> to vector<2x512xf32>
    %55 = vector.shape_cast %3 : vector<2x512xf32> to vector<1x2x512xf32>
    tpu.vector_store %arg8[%c7_44, %c0_45, %c0_46], %55 {strides = array<i32>} : memref<8x2x512xf32, #tpu.memory_space<vmem>>, vector<1x2x512xf32>,
    %c0_47 = arith.constant 0 : index
    %c0_48 = arith.constant 0 : index
    %c0_49 = arith.constant 0 : index
    %56 = vector.load %arg1[%c0_47, %c0_48, %c0_49] : memref<8x2x20xf32, #tpu.memory_space<vmem>>, vector<1x2x20xf32>
    %57 = vector.shape_cast %56 : vector<1x2x20xf32> to vector<2x20xf32>
    %cst_50 = arith.constant dense<0.000000e+00> : vector<2x512xf32>
    %58 = tpu.matmul %57, %0, %cst_50 {dimension_numbers = #tpu.dot_dimension_numbers<[1], [0], [0], [1], [0, 0, 1, 1], [], []>} : vector<2x20xf32>, vector<20x512xf32>, vector<2x512xf32> -> vector<2x512xf32>
    %59 = arith.addf %58, %3 : vector<2x512xf32>
    %60 = vector.extract_strided_slice %59 {offsets = [0, 0], sizes = [2, 384], strides = [1, 1]} : vector<2x512xf32> to vector<2x384xf32>
    %61 = arith.negf %60 : vector<2x384xf32>
    %62 = math.exp %61 : vector<2x384xf32>
    %cst_51 = arith.constant 1.000000e+00 : f32
    %63 = vector.broadcast %cst_51 : f32 to vector<2x384xf32>
    %64 = arith.addf %63, %62 : vector<2x384xf32>
    %65 = arith.divf %63, %64 : vector<2x384xf32>
    %66 = vector.extract_strided_slice %59 {offsets = [0, 384], sizes = [2, 128], strides = [1, 1]} : vector<2x512xf32> to vector<2x128xf32>
    %67 = math.tanh %66 : vector<2x128xf32>
    %68 = vector.extract_strided_slice %65 {offsets = [0, 0], sizes = [2, 128], strides = [1, 1]} : vector<2x384xf32> to vector<2x128xf32>
    %69 = arith.mulf %68, %67 : vector<2x128xf32>
    %70 = vector.extract_strided_slice %65 {offsets = [0, 256], sizes = [2, 128], strides = [1, 1]} : vector<2x384xf32> to vector<2x128xf32>
    %71 = math.tanh %69 : vector<2x128xf32>
    %72 = arith.mulf %70, %71 : vector<2x128xf32>
    %73 = tpu.iota {dimensions = array<i32: 1>} : vector<2x128xi32>
    %c64_i32 = arith.constant 64 : i32
    %74 = vector.broadcast %c64_i32 : i32 to vector<2x128xi32>
    %75 = arith.cmpi sge, %73, %74 : vector<2x128xi32>
    %76 = arith.extui %75 : vector<2x128xi1> to vector<2x128xi32>
    %77 = arith.sitofp %76 : vector<2x128xi32> to vector<2x128xf32>
    %78 = arith.mulf %72, %77 : vector<2x128xf32>
    %79 = arith.mulf %69, %77 : vector<2x128xf32>
    %c0_52 = arith.constant 0 : index
    %c0_53 = arith.constant 0 : index
    %80 = vector.load %arg2[%c0_52, %c0_53] : memref<128x512xf32, #tpu.memory_space<vmem>>, vector<128x512xf32>
    %c0_i32 = arith.constant 0 : i32
    %cst_54 = arith.constant dense<0.000000e+00> : vector<2x512xf32>
    %81 = tpu.matmul %78, %80, %cst_54 {dimension_numbers = #tpu.dot_dimension_numbers<[1], [0], [0], [1], [0, 0, 1, 1], [], []>} : vector<2x128xf32>, vector<128x512xf32>, vector<2x512xf32> -> vector<2x512xf32>
    %82 = arith.index_cast %c0_i32 : i32 to index
    %c0_55 = arith.constant 0 : index
    %c0_56 = arith.constant 0 : index
    %83 = vector.load %arg8[%82, %c0_55, %c0_56] : memref<8x2x512xf32, #tpu.memory_space<vmem>>, vector<1x2x512xf32>
    %84 = vector.shape_cast %83 : vector<1x2x512xf32> to vector<2x512xf32>
    %85 = arith.addf %81, %84 : vector<2x512xf32>
    %86 = vector.extract_strided_slice %85 {offsets = [0, 0], sizes = [2, 384], strides = [1, 1]} : vector<2x512xf32> to vector<2x384xf32>
    %87 = arith.negf %86 : vector<2x384xf32>
    %88 = math.exp %87 : vector<2x384xf32>
    %cst_57 = arith.constant 1.000000e+00 : f32
    %89 = vector.broadcast %cst_57 : f32 to vector<2x384xf32>
    %90 = arith.addf %89, %88 : vector<2x384xf32>
    %91 = arith.divf %89, %90 : vector<2x384xf32>
    %92 = vector.extract_strided_slice %85 {offsets = [0, 384], sizes = [2, 128], strides = [1, 1]} : vector<2x512xf32> to vector<2x128xf32>
    %93 = math.tanh %92 : vector<2x128xf32>
    %94 = vector.extract_strided_slice %91 {offsets = [0, 128], sizes = [2, 128], strides = [1, 1]} : vector<2x384xf32> to vector<2x128xf32>
    %95 = arith.mulf %94, %79 : vector<2x128xf32>
    %96 = vector.extract_strided_slice %91 {offsets = [0, 0], sizes = [2, 128], strides = [1, 1]} : vector<2x384xf32> to vector<2x128xf32>
    %97 = arith.mulf %96, %93 : vector<2x128xf32>
    %98 = arith.addf %95, %97 : vector<2x128xf32>
    %99 = vector.extract_strided_slice %91 {offsets = [0, 256], sizes = [2, 128], strides = [1, 1]} : vector<2x384xf32> to vector<2x128xf32>
    %100 = math.tanh %98 : vector<2x128xf32>
    %101 = arith.mulf %99, %100 : vector<2x128xf32>
    %c1_i32 = arith.constant 1 : i32
    %cst_58 = arith.constant dense<0.000000e+00> : vector<2x512xf32>
    %102 = tpu.matmul %101, %80, %cst_58 {dimension_numbers = #tpu.dot_dimension_numbers<[1], [0], [0], [1], [0, 0, 1, 1], [], []>} : vector<2x128xf32>, vector<128x512xf32>, vector<2x512xf32> -> vector<2x512xf32>
    %103 = arith.index_cast %c1_i32 : i32 to index
    %c0_59 = arith.constant 0 : index
    %c0_60 = arith.constant 0 : index
    %104 = vector.load %arg8[%103, %c0_59, %c0_60] : memref<8x2x512xf32, #tpu.memory_space<vmem>>, vector<1x2x512xf32>
    %105 = vector.shape_cast %104 : vector<1x2x512xf32> to vector<2x512xf32>
    %106 = arith.addf %102, %105 : vector<2x512xf32>
    %107 = vector.extract_strided_slice %106 {offsets = [0, 0], sizes = [2, 384], strides = [1, 1]} : vector<2x512xf32> to vector<2x384xf32>
    %108 = arith.negf %107 : vector<2x384xf32>
    %109 = math.exp %108 : vector<2x384xf32>
    %cst_61 = arith.constant 1.000000e+00 : f32
    %110 = vector.broadcast %cst_61 : f32 to vector<2x384xf32>
    %111 = arith.addf %110, %109 : vector<2x384xf32>
    %112 = arith.divf %110, %111 : vector<2x384xf32>
    %113 = vector.extract_strided_slice %106 {offsets = [0, 384], sizes = [2, 128], strides = [1, 1]} : vector<2x512xf32> to vector<2x128xf32>
    %114 = math.tanh %113 : vector<2x128xf32>
    %115 = vector.extract_strided_slice %112 {offsets = [0, 128], sizes = [2, 128], strides = [1, 1]} : vector<2x384xf32> to vector<2x128xf32>
    %116 = arith.mulf %115, %98 : vector<2x128xf32>
    %117 = vector.extract_strided_slice %112 {offsets = [0, 0], sizes = [2, 128], strides = [1, 1]} : vector<2x384xf32> to vector<2x128xf32>
    %118 = arith.mulf %117, %114 : vector<2x128xf32>
    %119 = arith.addf %116, %118 : vector<2x128xf32>
    %120 = vector.extract_strided_slice %112 {offsets = [0, 256], sizes = [2, 128], strides = [1, 1]} : vector<2x384xf32> to vector<2x128xf32>
    %121 = math.tanh %119 : vector<2x128xf32>
    %122 = arith.mulf %120, %121 : vector<2x128xf32>
    %c2_i32 = arith.constant 2 : i32
    %cst_62 = arith.constant dense<0.000000e+00> : vector<2x512xf32>
    %123 = tpu.matmul %122, %80, %cst_62 {dimension_numbers = #tpu.dot_dimension_numbers<[1], [0], [0], [1], [0, 0, 1, 1], [], []>} : vector<2x128xf32>, vector<128x512xf32>, vector<2x512xf32> -> vector<2x512xf32>
    %124 = arith.index_cast %c2_i32 : i32 to index
    %c0_63 = arith.constant 0 : index
    %c0_64 = arith.constant 0 : index
    %125 = vector.load %arg8[%124, %c0_63, %c0_64] : memref<8x2x512xf32, #tpu.memory_space<vmem>>, vector<1x2x512xf32>
    %126 = vector.shape_cast %125 : vector<1x2x512xf32> to vector<2x512xf32>
    %127 = arith.addf %123, %126 : vector<2x512xf32>
    %128 = vector.extract_strided_slice %127 {offsets = [0, 0], sizes = [2, 384], strides = [1, 1]} : vector<2x512xf32> to vector<2x384xf32>
    %129 = arith.negf %128 : vector<2x384xf32>
    %130 = math.exp %129 : vector<2x384xf32>
    %cst_65 = arith.constant 1.000000e+00 : f32
    %131 = vector.broadcast %cst_65 : f32 to vector<2x384xf32>
    %132 = arith.addf %131, %130 : vector<2x384xf32>
    %133 = arith.divf %131, %132 : vector<2x384xf32>
    %134 = vector.extract_strided_slice %127 {offsets = [0, 384], sizes = [2, 128], strides = [1, 1]} : vector<2x512xf32> to vector<2x128xf32>
    %135 = math.tanh %134 : vector<2x128xf32>
    %136 = vector.extract_strided_slice %133 {offsets = [0, 128], sizes = [2, 128], strides = [1, 1]} : vector<2x384xf32> to vector<2x128xf32>
    %137 = arith.mulf %136, %119 : vector<2x128xf32>
    %138 = vector.extract_strided_slice %133 {offsets = [0, 0], sizes = [2, 128], strides = [1, 1]} : vector<2x384xf32> to vector<2x128xf32>
    %139 = arith.mulf %138, %135 : vector<2x128xf32>
    %140 = arith.addf %137, %139 : vector<2x128xf32>
    %141 = vector.extract_strided_slice %133 {offsets = [0, 256], sizes = [2, 128], strides = [1, 1]} : vector<2x384xf32> to vector<2x128xf32>
    %142 = math.tanh %140 : vector<2x128xf32>
    %143 = arith.mulf %141, %142 : vector<2x128xf32>
    %c3_i32 = arith.constant 3 : i32
    %cst_66 = arith.constant dense<0.000000e+00> : vector<2x512xf32>
    %144 = tpu.matmul %143, %80, %cst_66 {dimension_numbers = #tpu.dot_dimension_numbers<[1], [0], [0], [1], [0, 0, 1, 1], [], []>} : vector<2x128xf32>, vector<128x512xf32>, vector<2x512xf32> -> vector<2x512xf32>
    %145 = arith.index_cast %c3_i32 : i32 to index
    %c0_67 = arith.constant 0 : index
    %c0_68 = arith.constant 0 : index
    %146 = vector.load %arg8[%145, %c0_67, %c0_68] : memref<8x2x512xf32, #tpu.memory_space<vmem>>, vector<1x2x512xf32>
    %147 = vector.shape_cast %146 : vector<1x2x512xf32> to vector<2x512xf32>
    %148 = arith.addf %144, %147 : vector<2x512xf32>
    %149 = vector.extract_strided_slice %148 {offsets = [0, 0], sizes = [2, 384], strides = [1, 1]} : vector<2x512xf32> to vector<2x384xf32>
    %150 = arith.negf %149 : vector<2x384xf32>
    %151 = math.exp %150 : vector<2x384xf32>
    %cst_69 = arith.constant 1.000000e+00 : f32
    %152 = vector.broadcast %cst_69 : f32 to vector<2x384xf32>
    %153 = arith.addf %152, %151 : vector<2x384xf32>
    %154 = arith.divf %152, %153 : vector<2x384xf32>
    %155 = vector.extract_strided_slice %148 {offsets = [0, 384], sizes = [2, 128], strides = [1, 1]} : vector<2x512xf32> to vector<2x128xf32>
    %156 = math.tanh %155 : vector<2x128xf32>
    %157 = vector.extract_strided_slice %154 {offsets = [0, 128], sizes = [2, 128], strides = [1, 1]} : vector<2x384xf32> to vector<2x128xf32>
    %158 = arith.mulf %157, %140 : vector<2x128xf32>
    %159 = vector.extract_strided_slice %154 {offsets = [0, 0], sizes = [2, 128], strides = [1, 1]} : vector<2x384xf32> to vector<2x128xf32>
    %160 = arith.mulf %159, %156 : vector<2x128xf32>
    %161 = arith.addf %158, %160 : vector<2x128xf32>
    %162 = vector.extract_strided_slice %154 {offsets = [0, 256], sizes = [2, 128], strides = [1, 1]} : vector<2x384xf32> to vector<2x128xf32>
    %163 = math.tanh %161 : vector<2x128xf32>
    %164 = arith.mulf %162, %163 : vector<2x128xf32>
    %c4_i32 = arith.constant 4 : i32
    %cst_70 = arith.constant dense<0.000000e+00> : vector<2x512xf32>
    %165 = tpu.matmul %164, %80, %cst_70 {dimension_numbers = #tpu.dot_dimension_numbers<[1], [0], [0], [1], [0, 0, 1, 1], [], []>} : vector<2x128xf32>, vector<128x512xf32>, vector<2x512xf32> -> vector<2x512xf32>
    %166 = arith.index_cast %c4_i32 : i32 to index
    %c0_71 = arith.constant 0 : index
    %c0_72 = arith.constant 0 : index
    %167 = vector.load %arg8[%166, %c0_71, %c0_72] : memref<8x2x512xf32, #tpu.memory_space<vmem>>, vector<1x2x512xf32>
    %168 = vector.shape_cast %167 : vector<1x2x512xf32> to vector<2x512xf32>
    %169 = arith.addf %165, %168 : vector<2x512xf32>
    %170 = vector.extract_strided_slice %169 {offsets = [0, 0], sizes = [2, 384], strides = [1, 1]} : vector<2x512xf32> to vector<2x384xf32>
    %171 = arith.negf %170 : vector<2x384xf32>
    %172 = math.exp %171 : vector<2x384xf32>
    %cst_73 = arith.constant 1.000000e+00 : f32
    %173 = vector.broadcast %cst_73 : f32 to vector<2x384xf32>
    %174 = arith.addf %173, %172 : vector<2x384xf32>
    %175 = arith.divf %173, %174 : vector<2x384xf32>
    %176 = vector.extract_strided_slice %169 {offsets = [0, 384], sizes = [2, 128], strides = [1, 1]} : vector<2x512xf32> to vector<2x128xf32>
    %177 = math.tanh %176 : vector<2x128xf32>
    %178 = vector.extract_strided_slice %175 {offsets = [0, 128], sizes = [2, 128], strides = [1, 1]} : vector<2x384xf32> to vector<2x128xf32>
    %179 = arith.mulf %178, %161 : vector<2x128xf32>
    %180 = vector.extract_strided_slice %175 {offsets = [0, 0], sizes = [2, 128], strides = [1, 1]} : vector<2x384xf32> to vector<2x128xf32>
    %181 = arith.mulf %180, %177 : vector<2x128xf32>
    %182 = arith.addf %179, %181 : vector<2x128xf32>
    %183 = vector.extract_strided_slice %175 {offsets = [0, 256], sizes = [2, 128], strides = [1, 1]} : vector<2x384xf32> to vector<2x128xf32>
    %184 = math.tanh %182 : vector<2x128xf32>
    %185 = arith.mulf %183, %184 : vector<2x128xf32>
    %c5_i32 = arith.constant 5 : i32
    %cst_74 = arith.constant dense<0.000000e+00> : vector<2x512xf32>
    %186 = tpu.matmul %185, %80, %cst_74 {dimension_numbers = #tpu.dot_dimension_numbers<[1], [0], [0], [1], [0, 0, 1, 1], [], []>} : vector<2x128xf32>, vector<128x512xf32>, vector<2x512xf32> -> vector<2x512xf32>
    %187 = arith.index_cast %c5_i32 : i32 to index
    %c0_75 = arith.constant 0 : index
    %c0_76 = arith.constant 0 : index
    %188 = vector.load %arg8[%187, %c0_75, %c0_76] : memref<8x2x512xf32, #tpu.memory_space<vmem>>, vector<1x2x512xf32>
    %189 = vector.shape_cast %188 : vector<1x2x512xf32> to vector<2x512xf32>
    %190 = arith.addf %186, %189 : vector<2x512xf32>
    %191 = vector.extract_strided_slice %190 {offsets = [0, 0], sizes = [2, 384], strides = [1, 1]} : vector<2x512xf32> to vector<2x384xf32>
    %192 = arith.negf %191 : vector<2x384xf32>
    %193 = math.exp %192 : vector<2x384xf32>
    %cst_77 = arith.constant 1.000000e+00 : f32
    %194 = vector.broadcast %cst_77 : f32 to vector<2x384xf32>
    %195 = arith.addf %194, %193 : vector<2x384xf32>
    %196 = arith.divf %194, %195 : vector<2x384xf32>
    %197 = vector.extract_strided_slice %190 {offsets = [0, 384], sizes = [2, 128], strides = [1, 1]} : vector<2x512xf32> to vector<2x128xf32>
    %198 = math.tanh %197 : vector<2x128xf32>
    %199 = vector.extract_strided_slice %196 {offsets = [0, 128], sizes = [2, 128], strides = [1, 1]} : vector<2x384xf32> to vector<2x128xf32>
    %200 = arith.mulf %199, %182 : vector<2x128xf32>
    %201 = vector.extract_strided_slice %196 {offsets = [0, 0], sizes = [2, 128], strides = [1, 1]} : vector<2x384xf32> to vector<2x128xf32>
    %202 = arith.mulf %201, %198 : vector<2x128xf32>
    %203 = arith.addf %200, %202 : vector<2x128xf32>
    %204 = vector.extract_strided_slice %196 {offsets = [0, 256], sizes = [2, 128], strides = [1, 1]} : vector<2x384xf32> to vector<2x128xf32>
    %205 = math.tanh %203 : vector<2x128xf32>
    %206 = arith.mulf %204, %205 : vector<2x128xf32>
    %c6_i32 = arith.constant 6 : i32
    %cst_78 = arith.constant dense<0.000000e+00> : vector<2x512xf32>
    %207 = tpu.matmul %206, %80, %cst_78 {dimension_numbers = #tpu.dot_dimension_numbers<[1], [0], [0], [1], [0, 0, 1, 1], [], []>} : vector<2x128xf32>, vector<128x512xf32>, vector<2x512xf32> -> vector<2x512xf32>
    %208 = arith.index_cast %c6_i32 : i32 to index
    %c0_79 = arith.constant 0 : index
    %c0_80 = arith.constant 0 : index
    %209 = vector.load %arg8[%208, %c0_79, %c0_80] : memref<8x2x512xf32, #tpu.memory_space<vmem>>, vector<1x2x512xf32>
    %210 = vector.shape_cast %209 : vector<1x2x512xf32> to vector<2x512xf32>
    %211 = arith.addf %207, %210 : vector<2x512xf32>
    %212 = vector.extract_strided_slice %211 {offsets = [0, 0], sizes = [2, 384], strides = [1, 1]} : vector<2x512xf32> to vector<2x384xf32>
    %213 = arith.negf %212 : vector<2x384xf32>
    %214 = math.exp %213 : vector<2x384xf32>
    %cst_81 = arith.constant 1.000000e+00 : f32
    %215 = vector.broadcast %cst_81 : f32 to vector<2x384xf32>
    %216 = arith.addf %215, %214 : vector<2x384xf32>
    %217 = arith.divf %215, %216 : vector<2x384xf32>
    %218 = vector.extract_strided_slice %211 {offsets = [0, 384], sizes = [2, 128], strides = [1, 1]} : vector<2x512xf32> to vector<2x128xf32>
    %219 = math.tanh %218 : vector<2x128xf32>
    %220 = vector.extract_strided_slice %217 {offsets = [0, 128], sizes = [2, 128], strides = [1, 1]} : vector<2x384xf32> to vector<2x128xf32>
    %221 = arith.mulf %220, %203 : vector<2x128xf32>
    %222 = vector.extract_strided_slice %217 {offsets = [0, 0], sizes = [2, 128], strides = [1, 1]} : vector<2x384xf32> to vector<2x128xf32>
    %223 = arith.mulf %222, %219 : vector<2x128xf32>
    %224 = arith.addf %221, %223 : vector<2x128xf32>
    %225 = vector.extract_strided_slice %217 {offsets = [0, 256], sizes = [2, 128], strides = [1, 1]} : vector<2x384xf32> to vector<2x128xf32>
    %226 = math.tanh %224 : vector<2x128xf32>
    %227 = arith.mulf %225, %226 : vector<2x128xf32>
    %c7_i32 = arith.constant 7 : i32
    %cst_82 = arith.constant dense<0.000000e+00> : vector<2x512xf32>
    %228 = tpu.matmul %227, %80, %cst_82 {dimension_numbers = #tpu.dot_dimension_numbers<[1], [0], [0], [1], [0, 0, 1, 1], [], []>} : vector<2x128xf32>, vector<128x512xf32>, vector<2x512xf32> -> vector<2x512xf32>
    %229 = arith.index_cast %c7_i32 : i32 to index
    %c0_83 = arith.constant 0 : index
    %c0_84 = arith.constant 0 : index
    %230 = vector.load %arg8[%229, %c0_83, %c0_84] : memref<8x2x512xf32, #tpu.memory_space<vmem>>, vector<1x2x512xf32>
    %231 = vector.shape_cast %230 : vector<1x2x512xf32> to vector<2x512xf32>
    %232 = arith.addf %228, %231 : vector<2x512xf32>
    %233 = vector.extract_strided_slice %232 {offsets = [0, 0], sizes = [2, 384], strides = [1, 1]} : vector<2x512xf32> to vector<2x384xf32>
    %234 = arith.negf %233 : vector<2x384xf32>
    %235 = math.exp %234 : vector<2x384xf32>
    %cst_85 = arith.constant 1.000000e+00 : f32
    %236 = vector.broadcast %cst_85 : f32 to vector<2x384xf32>
    %237 = arith.addf %236, %235 : vector<2x384xf32>
    %238 = arith.divf %236, %237 : vector<2x384xf32>
    %239 = vector.extract_strided_slice %232 {offsets = [0, 384], sizes = [2, 128], strides = [1, 1]} : vector<2x512xf32> to vector<2x128xf32>
    %240 = math.tanh %239 : vector<2x128xf32>
    %241 = vector.extract_strided_slice %238 {offsets = [0, 128], sizes = [2, 128], strides = [1, 1]} : vector<2x384xf32> to vector<2x128xf32>
    %242 = arith.mulf %241, %224 : vector<2x128xf32>
    %243 = vector.extract_strided_slice %238 {offsets = [0, 0], sizes = [2, 128], strides = [1, 1]} : vector<2x384xf32> to vector<2x128xf32>
    %244 = arith.mulf %243, %240 : vector<2x128xf32>
    %245 = arith.addf %242, %244 : vector<2x128xf32>
    %246 = vector.extract_strided_slice %238 {offsets = [0, 256], sizes = [2, 128], strides = [1, 1]} : vector<2x384xf32> to vector<2x128xf32>
    %247 = math.tanh %245 : vector<2x128xf32>
    %248 = arith.mulf %246, %247 : vector<2x128xf32>
    %c8_i32 = arith.constant 8 : i32
    %249 = vector.extract_strided_slice %248 {offsets = [0, 0], sizes = [2, 64], strides = [1, 1]} : vector<2x128xf32> to vector<2x64xf32>
    %c0_86 = arith.constant 0 : index
    %c0_87 = arith.constant 0 : index
    %250 = vector.load %arg5[%c0_86, %c0_87] : memref<64x128xf32, #tpu.memory_space<vmem>>, vector<64x128xf32>
    %cst_88 = arith.constant dense<0.000000e+00> : vector<2x128xf32>
    %251 = tpu.matmul %249, %250, %cst_88 {dimension_numbers = #tpu.dot_dimension_numbers<[1], [0], [0], [1], [0, 0, 1, 1], [], []>} : vector<2x64xf32>, vector<64x128xf32>, vector<2x128xf32> -> vector<2x128xf32>
    %c0_89 = arith.constant 0 : index
    %c0_90 = arith.constant 0 : index
    %252 = vector.load %arg6[%c0_89, %c0_90] : memref<1x128xf32, #tpu.memory_space<vmem>>, vector<1x128xf32>
    %253 = vector.broadcast %252 : vector<1x128xf32> to vector<2x128xf32>
    %254 = arith.addf %251, %253 : vector<2x128xf32>
    %c0_91 = arith.constant 0 : index
    %c0_92 = arith.constant 0 : index
    %255 = vector.load %arg7[%c0_91, %c0_92] : memref<2x128xf32, #tpu.memory_space<vmem>>, vector<2x128xf32>
    tpu.vector_store %arg7[%c0_91, %c0_92], %254 {strides = array<i32>} : memref<2x128xf32, #tpu.memory_space<vmem>>, vector<2x128xf32>,
    return
  }
  func.func @transform_0(%arg0: i32) -> (i32, i32, i32) {
    %c0_i32 = arith.constant 0 : i32
    %c0_i32_0 = arith.constant 0 : i32
    %c0_i32_1 = arith.constant 0 : i32
    %c0_i32_2 = arith.constant 0 : i32
    return %c0_i32, %c0_i32_0, %c0_i32_1 : i32, i32, i32
  }
  func.func @transform_1(%arg0: i32) -> (i32, i32) {
    %c0_i32 = arith.constant 0 : i32
    %c0_i32_0 = arith.constant 0 : i32
    %c0_i32_1 = arith.constant 0 : i32
    return %c0_i32, %c0_i32_0 : i32, i32
  }
  func.func @transform_2(%arg0: i32) -> (i32, i32) {
    %c0_i32 = arith.constant 0 : i32
    %c0_i32_0 = arith.constant 0 : i32
    %c0_i32_1 = arith.constant 0 : i32
    return %c0_i32, %c0_i32_0 : i32, i32
  }
  func.func @transform_3(%arg0: i32) -> (i32, i32) {
    %c0_i32 = arith.constant 0 : i32
    %c0_i32_0 = arith.constant 0 : i32
    %c0_i32_1 = arith.constant 0 : i32
    return %c0_i32, %c0_i32_0 : i32, i32
  }
  func.func @transform_4(%arg0: i32) -> (i32, i32) {
    %c0_i32 = arith.constant 0 : i32
    %c0_i32_0 = arith.constant 0 : i32
    %c0_i32_1 = arith.constant 0 : i32
    return %c0_i32, %c0_i32_0 : i32, i32
  }
  func.func @transform_5(%arg0: i32) -> (i32, i32) {
    %c0_i32 = arith.constant 0 : i32
    %c0_i32_0 = arith.constant 0 : i32
    %c0_i32_1 = arith.constant 0 : i32
    return %c0_i32, %c0_i32_0 : i32, i32
  }
  func.func @transform_6(%arg0: i32) -> (i32, i32) {
    %c0_i32 = arith.constant 0 : i32
    %c0_i32_0 = arith.constant 0 : i32
    %c0_i32_1 = arith.constant 0 : i32
    return %c0_i32, %c0_i32_0 : i32, i32
  }
}

</mosaic_0001>

<llo_original>
// kernel: tpu_custom_call.1
$region0: #{tpu_custom_call.1}
  #allocation0 [shape = 'u32[]', space=smem, size = 0x4, offset = 0x4, fixed_abs, tag = 'smem constant byte address 0x4 - core index']
  #allocation1 [shape = 'u32[144,128]{1,0:T(1,128)}', space=vmem, size = 0x12000, scoped, tag = 'internal scratch']
  #allocation2 [shape = 'f32[8,2,512]{2,1,0:T(2,128)}', space=vmem, size = 0x8000, scoped, tag = 'scratch operand']
  %s0 = inlined_call_operand.hbm [shape: f32[8,2,20], index: 0, kind: input, shape index: {}]
  %s1 = inlined_call_operand.hbm [shape: f32[128,512], index: 1, kind: input, shape index: {}]
  %s2 = inlined_call_operand.hbm [shape: f32[20,512], index: 2, kind: input, shape index: {}]
  %s3 = inlined_call_operand.vmem [shape: f32[1,512], index: 3, kind: input, shape index: {}]
  %s4 = inlined_call_operand.hbm [shape: f32[64,128], index: 4, kind: input, shape index: {}]
  %s5 = inlined_call_operand.vmem [shape: f32[1,128], index: 5, kind: input, shape index: {}]
  %s6 = inlined_call_operand.hbm [shape: f32[2,128], index: 6, kind: output, shape index: {}]
  %s7 = sld [smem:[#allocation0]]
  $region50: #{tpu_custom_call.1} parent=0
    _
  %s9 = ssub.s32 1, %s7
  %s10 = scalar_select 0, %s9, %s7
  $region1: #{tpu_custom_call.1} parent=0
    #allocation3 [shape = 'u8[8192]{0}', space=vmem, size = 0x2000, scoped, tag = 'input window, operand 0, single buffered']
    #allocation4 [shape = 's32[1]{0}', space=sflag, size = 0x4, scoped, tag = 'scoped memory for tpu_custom_call.1']
    #allocation5 [shape = 's32[1]{0}', space=sflag, size = 0x4, scoped, tag = 'scoped memory for tpu_custom_call.1']
    #allocation6 [shape = 'u8[262144]{0}', space=vmem, size = 0x40000, scoped, tag = 'input window, operand 1, single buffered']
    #allocation7 [shape = 's32[1]{0}', space=sflag, size = 0x4, scoped, tag = 'scoped memory for tpu_custom_call.1']
    #allocation8 [shape = 'u8[49152]{0}', space=vmem, size = 0xc000, scoped, tag = 'input window, operand 2, single buffered']
    #allocation9 [shape = 'u8[32768]{0}', space=vmem, size = 0x8000, scoped, tag = 'input window, operand 4, single buffered']
    #allocation10 [shape = 's32[1]{0}', space=sflag, size = 0x4, scoped, tag = 'scoped memory for tpu_custom_call.1']
    #allocation11 [shape = 'u8[1024]{0}', space=vmem, size = 0x400, scoped, tag = 'output window, operand 0, single buffered']
    %11 = vsyncpa [#allocation4], 0
    %12 = vsyncpa [#allocation7], 0
    %13 = vsyncpa [#allocation10], 0
    %14 = vsyncpa [#allocation5], 0
    // Predicated region
    $region2: #{tpu_custom_call.1} parent=1 // pred_check
      _
    $region3: #{tpu_custom_call.1} parent=1 // pred_check_branch
      %16 = sbr.rel (0) target = $region5
    $region4: #{tpu_custom_call.1} parent=1 // pred_region
      %s18 = ssub.s32 256, 256
      %19 = vsyncadd [#allocation4], %s18
      %s20 = sshll.u32 [#allocation3], 4
      %s21 = int_to_ptr.vmem [resolvable:$true] %s20
      %26 = dma.hbm_to_vmem [thread:$0]  %s0, 256, %s21, [#allocation4], 32, 32, 2
    $region5: #{tpu_custom_call.1} parent=1 // pred_fallthru
      _
    // Predicated region
    $region6: #{tpu_custom_call.1} parent=1 // pred_check
      _
    $region7: #{tpu_custom_call.1} parent=1 // pred_check_branch
      %28 = sbr.rel (0) target = $region9
    $region8: #{tpu_custom_call.1} parent=1 // pred_region
      %s30 = ssub.s32 8192, 8192
      %31 = vsyncadd [#allocation7], %s30
      %s32 = sshll.u32 [#allocation6], 4
      %s33 = int_to_ptr.vmem [resolvable:$true] %s32
      %38 = dma.hbm_to_vmem [thread:$0]  %s1, 8192, %s33, [#allocation7], 512, 512, 32
    $region9: #{tpu_custom_call.1} parent=1 // pred_fallthru
      _
    // Predicated region
    $region10: #{tpu_custom_call.1} parent=1 // pred_check
      _
    $region11: #{tpu_custom_call.1} parent=1 // pred_check_branch
      %40 = sbr.rel (0) target = $region13
    $region12: #{tpu_custom_call.1} parent=1 // pred_region
      %s42 = ssub.s32 1536, 1536
      %43 = vsyncadd [#allocation7], %s42
      %s44 = sshll.u32 [#allocation8], 4
      %s45 = int_to_ptr.vmem [resolvable:$true] %s44
      %50 = dma.hbm_to_vmem [thread:$0]  %s2, 1536, %s45, [#allocation7], 512, 512, 32
    $region13: #{tpu_custom_call.1} parent=1 // pred_fallthru
      _
    // Predicated region
    $region14: #{tpu_custom_call.1} parent=1 // pred_check
      _
    $region15: #{tpu_custom_call.1} parent=1 // pred_check_branch
      %52 = sbr.rel (0) target = $region17
    $region16: #{tpu_custom_call.1} parent=1 // pred_region
      _
    $region17: #{tpu_custom_call.1} parent=1 // pred_fallthru
      _
    // Predicated region
    $region18: #{tpu_custom_call.1} parent=1 // pred_check
      _
    $region19: #{tpu_custom_call.1} parent=1 // pred_check_branch
      %54 = sbr.rel (0) target = $region21
    $region20: #{tpu_custom_call.1} parent=1 // pred_region
      %s56 = ssub.s32 1024, 1024
      %57 = vsyncadd [#allocation10], %s56
      %s58 = sshll.u32 [#allocation9], 4
      %s59 = int_to_ptr.vmem [resolvable:$true] %s58
      %64 = dma.hbm_to_vmem [thread:$0]  %s4, 1024, %s59, [#allocation10], 128, 128, 8
    $region21: #{tpu_custom_call.1} parent=1 // pred_fallthru
      _
    // Predicated region
    $region22: #{tpu_custom_call.1} parent=1 // pred_check
      _
    $region23: #{tpu_custom_call.1} parent=1 // pred_check_branch
      %66 = sbr.rel (0) target = $region25
    $region24: #{tpu_custom_call.1} parent=1 // pred_region
      _
    $region25: #{tpu_custom_call.1} parent=1 // pred_fallthru
      _
    // Predicated region
    $region26: #{tpu_custom_call.1} parent=1 // pred_check
      _
    $region27: #{tpu_custom_call.1} parent=1 // pred_check_branch
      %68 = sbr.rel (0) target = $region29
    $region28: #{tpu_custom_call.1} parent=1 // pred_region
      %69 = dma.done [#allocation4], 256
    $region29: #{tpu_custom_call.1} parent=1 // pred_fallthru
      _
    // Predicated region
    $region30: #{tpu_custom_call.1} parent=1 // pred_check
      _
    $region31: #{tpu_custom_call.1} parent=1 // pred_check_branch
      %71 = sbr.rel (0) target = $region33
    $region32: #{tpu_custom_call.1} parent=1 // pred_region
      %72 = dma.done [#allocation7], 8192
    $region33: #{tpu_custom_call.1} parent=1 // pred_fallthru
      _
    // Predicated region
    $region34: #{tpu_custom_call.1} parent=1 // pred_check
      _
    $region35: #{tpu_custom_call.1} parent=1 // pred_check_branch
      %74 = sbr.rel (0) target = $region37
    $region36: #{tpu_custom_call.1} parent=1 // pred_region
      %75 = dma.done [#allocation7], 1536
    $region37: #{tpu_custom_call.1} parent=1 // pred_fallthru
      _
    // Predicated region
    $region38: #{tpu_custom_call.1} parent=1 // pred_check
      _
    $region39: #{tpu_custom_call.1} parent=1 // pred_check_branch
      %77 = sbr.rel (0) target = $region41
    $region40: #{tpu_custom_call.1} parent=1 // pred_region
      %78 = dma.done [#allocation10], 1024
    $region41: #{tpu_custom_call.1} parent=1 // pred_fallthru
      _
    %v79 = vld [vmem:[#allocation8] sm:$0xff]
    %v80 = vld [vmem:[#allocation8 + $0x8] sm:$0xff]
    %v81 = vld [vmem:[#allocation8 + $0x10] sm:$0xff]
    %v82 = vld [vmem:[#allocation8 + $0x18] sm:$0xff]
    %v83 = vld [vmem:[#allocation8 + $0x20] sm:$0xff]
    %v84 = vld [vmem:[#allocation8 + $0x28] sm:$0xff]
    %v85 = vld [vmem:[#allocation8 + $0x30] sm:$0xff]
    %v86 = vld [vmem:[#allocation8 + $0x38] sm:$0xff]
    %v87 = vld [vmem:[#allocation8 + $0x40] sm:$0xf]
    %v88 = vld [vmem:[#allocation8 + $0x48] sm:$0xf]
    %v89 = vld [vmem:[#allocation8 + $0x50] sm:$0xf]
    %v90 = vld [vmem:[#allocation8 + $0x58] sm:$0xf]
    %v91 = vld [vmem:[%s3] sm:$0xf]
    %v93 = vlaneseq
    %v94 = vshrl.u32 %v93, 7
    %v95 = vsub.s32 0, %v94
    %v96 = vrot.slane %v91, %v95
    %v97 = vlaneseq
    %v98 = vshrl.u32 %v97, 7
    %v99 = vsub.s32 1, %v98
    %v100 = vrot.slane %v91, %v99
    %v101 = vlaneseq
    %v102 = vshrl.u32 %v101, 7
    %v103 = vsub.s32 2, %v102
    %v104 = vrot.slane %v91, %v103
    %v105 = vlaneseq
    %v106 = vshrl.u32 %v105, 7
    %v107 = vsub.s32 3, %v106
    %v108 = vrot.slane %v91, %v107
    %s113 = scalar_lea.vmem [#allocation3], 2
    %v114 = vld [vmem:[%s113] sm:$0x3]
    %vm115 = vcmask 162816
    %v117 = vsel %vm115, %v114, 0
    %vm119 = vcmask 1043456
    %v121 = vsel %vm119, %v87, 0
    %v124 = vsel %vm119, %v88, 0
    %v127 = vsel %vm119, %v89, 0
    %v130 = vsel %vm119, %v90, 0
    %132 = vmatprep.subr.mxu0 %v80
    %133 = vmatpush1.msra.mxu0 %v79
    %134 = vmatprep.subr.mxu0 %v84
    %135 = vmatpush1.msra.mxu0 %v83
    %136 = vmatprep.subr.mxu0 %v124
    %137 = vmatpush1.msra.mxu0 %v121
    %138 = vmatprep.subr.mxu0 0.0
    %139 = vmatpush1.msra.mxu0 0.0
    %140 = vmatprep.subr.mxu0 0.0
    %141 = vmatpush1.msra.mxu0 0.0
    %142 = vmatprep.subr.mxu0 0.0
    %143 = vmatpush1.msra.mxu0 0.0
    %144 = vmatprep.subr.mxu0 0.0
    %145 = vmatpush1.msra.mxu0 0.0
    %146 = vmatprep.subr.mxu0 0.0
    %147 = vmatpush1.msra.mxu0 0.0
    %148 = vmatprep.subr.mxu0 0.0
    %149 = vmatpush1.msra.mxu0 0.0
    %150 = vmatprep.subr.mxu0 0.0
    %151 = vmatpush1.msra.mxu0 0.0
    %152 = vmatprep.subr.mxu0 0.0
    %153 = vmatpush1.msra.mxu0 0.0
    %154 = vmatprep.subr.mxu0 0.0
    %155 = vmatpush1.msra.mxu0 0.0
    %156 = vmatprep.subr.mxu0 0.0
    %157 = vmatpush1.msra.mxu0 0.0
    %158 = vmatprep.subr.mxu0 0.0
    %159 = vmatpush1.msra.mxu0 0.0
    %160 = vmatprep.subr.mxu0 0.0
    %161 = vmatpush1.msra.mxu0 0.0
    %162 = vmatprep.subr.mxu0 0.0
    %163 = vmatpush1.msra.mxu0 0.0
    %164 = vmatprep.subr.mxu0 0.0
    %165 = vmatpush1.msra.mxu0 0.0
    %166 = vmatprep.subr.mxu0 0.0
    %167 = vmatpush1.msra.mxu0 0.0
    %168 = vmatprep.subr.mxu0 0.0
    %169 = vmatpush1.msra.mxu0 0.0
    %170 = vmatprep.subr.mxu0 0.0
    %171 = vmatpush1.msra.mxu0 0.0
    %172 = vmatprep.subr.mxu0 0.0
    %173 = vmatpush1.msra.mxu0 0.0
    %174 = vmatprep.subr.mxu0 0.0
    %175 = vmatpush1.msra.mxu0 0.0
    %176 = vmatprep.subr.mxu0 0.0
    %177 = vmatpush1.msra.mxu0 0.0
    %178 = vmatprep.subr.mxu0 0.0
    %179 = vmatpush1.msra.mxu0 0.0
    %180 = vmatprep.subr.mxu0 0.0
    %181 = vmatpush1.msra.mxu0 0.0
    %182 = vmatprep.subr.mxu0 0.0
    %183 = vmatpush1.msra.mxu0 0.0
    %184 = vmatprep.subr.mxu0 0.0
    %185 = vmatpush1.msra.mxu0 0.0
    %186 = vmatprep.subr.mxu0 0.0
    %187 = vmatpush1.msra.mxu0 0.0
    %188 = vmatprep.subr.mxu0 0.0
    %189 = vmatpush1.msra.mxu0 0.0
    %190 = vmatprep.subr.mxu0 0.0
    %191 = vmatpush1.msra.mxu0 0.0
    %192 = vmatprep.subr.mxu0 0.0
    %193 = vmatpush1.msra.mxu0 0.0
    %194 = vmatprep.subr.mxu0 0.0
    %195 = vmatpush1.msra.mxu0 0.0
    %196 = vmatprep.mubr.f32.mxu0 0.0
    %197 = vmatmul.mubr.f32.gmra.mrb[0].mxu0 %v117
    %v198 = vpop.f32.mrb[0].mxu0
    %v199 = vadd.f32 %v96, %v198
    %v200 = vpop.f32.mrb[0].mxu0
    %v201 = vadd.f32 %v100, %v200
    %202 = vdwg.mxu0
    %203 = vmatprep.subr.mxu0 %v82
    %204 = vmatpush1.msra.mxu0 %v81
    %205 = vmatprep.subr.mxu0 %v86
    %206 = vmatpush1.msra.mxu0 %v85
    %207 = vmatprep.subr.mxu0 %v130
    %208 = vmatpush1.msra.mxu0 %v127
    %209 = vmatprep.subr.mxu0 0.0
    %210 = vmatpush1.msra.mxu0 0.0
    %211 = vmatprep.subr.mxu0 0.0
    %212 = vmatpush1.msra.mxu0 0.0
    %213 = vmatprep.subr.mxu0 0.0
    %214 = vmatpush1.msra.mxu0 0.0
    %215 = vmatprep.subr.mxu0 0.0
    %216 = vmatpush1.msra.mxu0 0.0
    %217 = vmatprep.subr.mxu0 0.0
    %218 = vmatpush1.msra.mxu0 0.0
    %219 = vmatprep.subr.mxu0 0.0
    %220 = vmatpush1.msra.mxu0 0.0
    %221 = vmatprep.subr.mxu0 0.0
    %222 = vmatpush1.msra.mxu0 0.0
    %223 = vmatprep.subr.mxu0 0.0
    %224 = vmatpush1.msra.mxu0 0.0
    %225 = vmatprep.subr.mxu0 0.0
    %226 = vmatpush1.msra.mxu0 0.0
    %227 = vmatprep.subr.mxu0 0.0
    %228 = vmatpush1.msra.mxu0 0.0
    %229 = vmatprep.subr.mxu0 0.0
    %230 = vmatpush1.msra.mxu0 0.0
    %231 = vmatprep.subr.mxu0 0.0
    %232 = vmatpush1.msra.mxu0 0.0
    %233 = vmatprep.subr.mxu0 0.0
    %234 = vmatpush1.msra.mxu0 0.0
    %235 = vmatprep.subr.mxu0 0.0
    %236 = vmatpush1.msra.mxu0 0.0
    %237 = vmatprep.subr.mxu0 0.0
    %238 = vmatpush1.msra.mxu0 0.0
    %239 = vmatprep.subr.mxu0 0.0
    %240 = vmatpush1.msra.mxu0 0.0
    %241 = vmatprep.subr.mxu0 0.0
    %242 = vmatpush1.msra.mxu0 0.0
    %243 = vmatprep.subr.mxu0 0.0
    %244 = vmatpush1.msra.mxu0 0.0
    %245 = vmatprep.subr.mxu0 0.0
    %246 = vmatpush1.msra.mxu0 0.0
    %247 = vmatprep.subr.mxu0 0.0
    %248 = vmatpush1.msra.mxu0 0.0
    %249 = vmatprep.subr.mxu0 0.0
    %250 = vmatpush1.msra.mxu0 0.0
    %251 = vmatprep.subr.mxu0 0.0
    %252 = vmatpush1.msra.mxu0 0.0
    %253 = vmatprep.subr.mxu0 0.0
    %254 = vmatpush1.msra.mxu0 0.0
    %255 = vmatprep.subr.mxu0 0.0
    %256 = vmatpush1.msra.mxu0 0.0
    %257 = vmatprep.subr.mxu0 0.0
    %258 = vmatpush1.msra.mxu0 0.0
    %259 = vmatprep.subr.mxu0 0.0
    %260 = vmatpush1.msra.mxu0 0.0
    %261 = vmatprep.subr.mxu0 0.0
    %262 = vmatpush1.msra.mxu0 0.0
    %263 = vmatprep.subr.mxu0 0.0
    %264 = vmatpush1.msra.mxu0 0.0
    %265 = vmatprep.subr.mxu0 0.0
    %266 = vmatpush1.msra.mxu0 0.0
    %267 = vmatprep.mubr.f32.mxu0 0.0
    %268 = vmatmul.mubr.f32.gmra.mrb[0].mxu0 %v117
    %v269 = vpop.f32.mrb[0].mxu0
    %v270 = vadd.f32 %v104, %v269
    %v271 = vpop.f32.mrb[0].mxu0
    %v272 = vadd.f32 %v108, %v271
    %273 = vdwg.mxu0
    %v278 = vcombine.low %v199, %v201
    %v279 = vcombine.low %v270, %v272
    %v281 = vunpack.c.l.s4 1983009808
    %v282 = vunpack.c.0.s8 %v281
    %v283 = vlaneseq
    %v284 = vshrl.u32 %v283, 7
    %v285 = vsub.s32 %v282, %v284
    %v286 = vrot.slane %v278, %v285
    %v288 = vunpack.c.l.s4 1983009808
    %v289 = vunpack.c.0.s8 %v288
    %v290 = vlaneseq
    %v291 = vshrl.u32 %v290, 7
    %v292 = vsub.s32 %v289, %v291
    %v293 = vrot.slane %v279, %v292
    %v294 = vcombine.low %v286, %v293
    %296 = vst [vmem:[#allocation2] sm:$0xff] %v294
    %s297 = scalar_lea.vmem [#allocation3], 4
    %v298 = vld [vmem:[%s297] sm:$0x3]
    %v300 = vsel %vm115, %v298, 0
    %302 = vmatprep.subr.mxu0 %v80
    %303 = vmatpush1.msra.mxu0 %v79
    %304 = vmatprep.subr.mxu0 %v84
    %305 = vmatpush1.msra.mxu0 %v83
    %306 = vmatprep.subr.mxu0 %v124
    %307 = vmatpush1.msra.mxu0 %v121
    %308 = vmatprep.subr.mxu0 0.0
    %309 = vmatpush1.msra.mxu0 0.0
    %310 = vmatprep.subr.mxu0 0.0
    %311 = vmatpush1.msra.mxu0 0.0
    %312 = vmatprep.subr.mxu0 0.0
    %313 = vmatpush1.msra.mxu0 0.0
    %314 = vmatprep.subr.mxu0 0.0
    %315 = vmatpush1.msra.mxu0 0.0
    %316 = vmatprep.subr.mxu0 0.0
    %317 = vmatpush1.msra.mxu0 0.0
    %318 = vmatprep.subr.mxu0 0.0
    %319 = vmatpush1.msra.mxu0 0.0
    %320 = vmatprep.subr.mxu0 0.0
    %321 = vmatpush1.msra.mxu0 0.0
    %322 = vmatprep.subr.mxu0 0.0
    %323 = vmatpush1.msra.mxu0 0.0
    %324 = vmatprep.subr.mxu0 0.0
    %325 = vmatpush1.msra.mxu0 0.0
    %326 = vmatprep.subr.mxu0 0.0
    %327 = vmatpush1.msra.mxu0 0.0
    %328 = vmatprep.subr.mxu0 0.0
    %329 = vmatpush1.msra.mxu0 0.0
    %330 = vmatprep.subr.mxu0 0.0
    %331 = vmatpush1.msra.mxu0 0.0
    %332 = vmatprep.subr.mxu0 0.0
    %333 = vmatpush1.msra.mxu0 0.0
    %334 = vmatprep.subr.mxu0 0.0
    %335 = vmatpush1.msra.mxu0 0.0
    %336 = vmatprep.subr.mxu0 0.0
    %337 = vmatpush1.msra.mxu0 0.0
    %338 = vmatprep.subr.mxu0 0.0
    %339 = vmatpush1.msra.mxu0 0.0
    %340 = vmatprep.subr.mxu0 0.0
    %341 = vmatpush1.msra.mxu0 0.0
    %342 = vmatprep.subr.mxu0 0.0
    %343 = vmatpush1.msra.mxu0 0.0
    %344 = vmatprep.subr.mxu0 0.0
    %345 = vmatpush1.msra.mxu0 0.0
    %346 = vmatprep.subr.mxu0 0.0
    %347 = vmatpush1.msra.mxu0 0.0
    %348 = vmatprep.subr.mxu0 0.0
    %349 = vmatpush1.msra.mxu0 0.0
    %350 = vmatprep.subr.mxu0 0.0
    %351 = vmatpush1.msra.mxu0 0.0
    %352 = vmatprep.subr.mxu0 0.0
    %353 = vmatpush1.msra.mxu0 0.0
    %354 = vmatprep.subr.mxu0 0.0
    %355 = vmatpush1.msra.mxu0 0.0
    %356 = vmatprep.subr.mxu0 0.0
    %357 = vmatpush1.msra.mxu0 0.0
    %358 = vmatprep.subr.mxu0 0.0
    %359 = vmatpush1.msra.mxu0 0.0
    %360 = vmatprep.subr.mxu0 0.0
    %361 = vmatpush1.msra.mxu0 0.0
    %362 = vmatprep.subr.mxu0 0.0
    %363 = vmatpush1.msra.mxu0 0.0
    %364 = vmatprep.subr.mxu0 0.0
    %365 = vmatpush1.msra.mxu0 0.0
    %366 = vmatprep.mubr.f32.mxu0 0.0
    %367 = vmatmul.mubr.f32.gmra.mrb[0].mxu0 %v300
    %v368 = vpop.f32.mrb[0].mxu0
    %v369 = vadd.f32 %v96, %v368
    %v370 = vpop.f32.mrb[0].mxu0
    %v371 = vadd.f32 %v100, %v370
    %372 = vdwg.mxu0
    %373 = vmatprep.subr.mxu0 %v82
    %374 = vmatpush1.msra.mxu0 %v81
    %375 = vmatprep.subr.mxu0 %v86
    %376 = vmatpush1.msra.mxu0 %v85
    %377 = vmatprep.subr.mxu0 %v130
    %378 = vmatpush1.msra.mxu0 %v127
    %379 = vmatprep.subr.mxu0 0.0
    %380 = vmatpush1.msra.mxu0 0.0
    %381 = vmatprep.subr.mxu0 0.0
    %382 = vmatpush1.msra.mxu0 0.0
    %383 = vmatprep.subr.mxu0 0.0
    %384 = vmatpush1.msra.mxu0 0.0
    %385 = vmatprep.subr.mxu0 0.0
    %386 = vmatpush1.msra.mxu0 0.0
    %387 = vmatprep.subr.mxu0 0.0
    %388 = vmatpush1.msra.mxu0 0.0
    %389 = vmatprep.subr.mxu0 0.0
    %390 = vmatpush1.msra.mxu0 0.0
    %391 = vmatprep.subr.mxu0 0.0
    %392 = vmatpush1.msra.mxu0 0.0
    %393 = vmatprep.subr.mxu0 0.0
    %394 = vmatpush1.msra.mxu0 0.0
    %395 = vmatprep.subr.mxu0 0.0
    %396 = vmatpush1.msra.mxu0 0.0
    %397 = vmatprep.subr.mxu0 0.0
    %398 = vmatpush1.msra.mxu0 0.0
    %399 = vmatprep.subr.mxu0 0.0
    %400 = vmatpush1.msra.mxu0 0.0
    %401 = vmatprep.subr.mxu0 0.0
    %402 = vmatpush1.msra.mxu0 0.0
    %403 = vmatprep.subr.mxu0 0.0
    %404 = vmatpush1.msra.mxu0 0.0
    %405 = vmatprep.subr.mxu0 0.0
    %406 = vmatpush1.msra.mxu0 0.0
    %407 = vmatprep.subr.mxu0 0.0
    %408 = vmatpush1.msra.mxu0 0.0
    %409 = vmatprep.subr.mxu0 0.0
    %410 = vmatpush1.msra.mxu0 0.0
    %411 = vmatprep.subr.mxu0 0.0
    %412 = vmatpush1.msra.mxu0 0.0
    %413 = vmatprep.subr.mxu0 0.0
    %414 = vmatpush1.msra.mxu0 0.0
    %415 = vmatprep.subr.mxu0 0.0
    %416 = vmatpush1.msra.mxu0 0.0
    %417 = vmatprep.subr.mxu0 0.0
    %418 = vmatpush1.msra.mxu0 0.0
    %419 = vmatprep.subr.mxu0 0.0
    %420 = vmatpush1.msra.mxu0 0.0
    %421 = vmatprep.subr.mxu0 0.0
    %422 = vmatpush1.msra.mxu0 0.0
    %423 = vmatprep.subr.mxu0 0.0
    %424 = vmatpush1.msra.mxu0 0.0
    %425 = vmatprep.subr.mxu0 0.0
    %426 = vmatpush1.msra.mxu0 0.0
    %427 = vmatprep.subr.mxu0 0.0
    %428 = vmatpush1.msra.mxu0 0.0
    %429 = vmatprep.subr.mxu0 0.0
    %430 = vmatpush1.msra.mxu0 0.0
    %431 = vmatprep.subr.mxu0 0.0
    %432 = vmatpush1.msra.mxu0 0.0
    %433 = vmatprep.subr.mxu0 0.0
    %434 = vmatpush1.msra.mxu0 0.0
    %435 = vmatprep.subr.mxu0 0.0
    %436 = vmatpush1.msra.mxu0 0.0
    %437 = vmatprep.mubr.f32.mxu0 0.0
    %438 = vmatmul.mubr.f32.gmra.mrb[0].mxu0 %v300
    %v439 = vpop.f32.mrb[0].mxu0
    %v440 = vadd.f32 %v104, %v439
    %v441 = vpop.f32.mrb[0].mxu0
    %v442 = vadd.f32 %v108, %v441
    %443 = vdwg.mxu0
    %v448 = vcombine.low %v369, %v371
    %v449 = vcombine.low %v440, %v442
    %v451 = vunpack.c.l.s4 1983009808
    %v452 = vunpack.c.0.s8 %v451
    %v453 = vlaneseq
    %v454 = vshrl.u32 %v453, 7
    %v455 = vsub.s32 %v452, %v454
    %v456 = vrot.slane %v448, %v455
    %v458 = vunpack.c.l.s4 1983009808
    %v459 = vunpack.c.0.s8 %v458
    %v460 = vlaneseq
    %v461 = vshrl.u32 %v460, 7
    %v462 = vsub.s32 %v459, %v461
    %v463 = vrot.slane %v449, %v462
    %v464 = vcombine.low %v456, %v463
    %s466 = scalar_lea.vmem [#allocation2], 8
    %467 = vst [vmem:[%s466] sm:$0xff] %v464
    %s468 = scalar_lea.vmem [#allocation3], 6
    %v469 = vld [vmem:[%s468] sm:$0x3]
    %v471 = vsel %vm115, %v469, 0
    %473 = vmatprep.subr.mxu0 %v80
    %474 = vmatpush1.msra.mxu0 %v79
    %475 = vmatprep.subr.mxu0 %v84
    %476 = vmatpush1.msra.mxu0 %v83
    %477 = vmatprep.subr.mxu0 %v124
    %478 = vmatpush1.msra.mxu0 %v121
    %479 = vmatprep.subr.mxu0 0.0
    %480 = vmatpush1.msra.mxu0 0.0
    %481 = vmatprep.subr.mxu0 0.0
    %482 = vmatpush1.msra.mxu0 0.0
    %483 = vmatprep.subr.mxu0 0.0
    %484 = vmatpush1.msra.mxu0 0.0
    %485 = vmatprep.subr.mxu0 0.0
    %486 = vmatpush1.msra.mxu0 0.0
    %487 = vmatprep.subr.mxu0 0.0
    %488 = vmatpush1.msra.mxu0 0.0
    %489 = vmatprep.subr.mxu0 0.0
    %490 = vmatpush1.msra.mxu0 0.0
    %491 = vmatprep.subr.mxu0 0.0
    %492 = vmatpush1.msra.mxu0 0.0
    %493 = vmatprep.subr.mxu0 0.0
    %494 = vmatpush1.msra.mxu0 0.0
    %495 = vmatprep.subr.mxu0 0.0
    %496 = vmatpush1.msra.mxu0 0.0
    %497 = vmatprep.subr.mxu0 0.0
    %498 = vmatpush1.msra.mxu0 0.0
    %499 = vmatprep.subr.mxu0 0.0
    %500 = vmatpush1.msra.mxu0 0.0
    %501 = vmatprep.subr.mxu0 0.0
    %502 = vmatpush1.msra.mxu0 0.0
    %503 = vmatprep.subr.mxu0 0.0
    %504 = vmatpush1.msra.mxu0 0.0
    %505 = vmatprep.subr.mxu0 0.0
    %506 = vmatpush1.msra.mxu0 0.0
    %507 = vmatprep.subr.mxu0 0.0
    %508 = vmatpush1.msra.mxu0 0.0
    %509 = vmatprep.subr.mxu0 0.0
    %510 = vmatpush1.msra.mxu0 0.0
    %511 = vmatprep.subr.mxu0 0.0
    %512 = vmatpush1.msra.mxu0 0.0
    %513 = vmatprep.subr.mxu0 0.0
    %514 = vmatpush1.msra.mxu0 0.0
    %515 = vmatprep.subr.mxu0 0.0
    %516 = vmatpush1.msra.mxu0 0.0
    %517 = vmatprep.subr.mxu0 0.0
    %518 = vmatpush1.msra.mxu0 0.0
    %519 = vmatprep.subr.mxu0 0.0
    %520 = vmatpush1.msra.mxu0 0.0
    %521 = vmatprep.subr.mxu0 0.0
    %522 = vmatpush1.msra.mxu0 0.0
    %523 = vmatprep.subr.mxu0 0.0
    %524 = vmatpush1.msra.mxu0 0.0
    %525 = vmatprep.subr.mxu0 0.0
    %526 = vmatpush1.msra.mxu0 0.0
    %527 = vmatprep.subr.mxu0 0.0
    %528 = vmatpush1.msra.mxu0 0.0
    %529 = vmatprep.subr.mxu0 0.0
    %530 = vmatpush1.msra.mxu0 0.0
    %531 = vmatprep.subr.mxu0 0.0
    %532 = vmatpush1.msra.mxu0 0.0
    %533 = vmatprep.subr.mxu0 0.0
    %534 = vmatpush1.msra.mxu0 0.0
    %535 = vmatprep.subr.mxu0 0.0
    %536 = vmatpush1.msra.mxu0 0.0
    %537 = vmatprep.mubr.f32.mxu0 0.0
    %538 = vmatmul.mubr.f32.gmra.mrb[0].mxu0 %v471
    %v539 = vpop.f32.mrb[0].mxu0
    %v540 = vadd.f32 %v96, %v539
    %v541 = vpop.f32.mrb[0].mxu0
    %v542 = vadd.f32 %v100, %v541
    %543 = vdwg.mxu0
    %544 = vmatprep.subr.mxu0 %v82
    %545 = vmatpush1.msra.mxu0 %v81
    %546 = vmatprep.subr.mxu0 %v86
    %547 = vmatpush1.msra.mxu0 %v85
    %548 = vmatprep.subr.mxu0 %v130
    %549 = vmatpush1.msra.mxu0 %v127
    %550 = vmatprep.subr.mxu0 0.0
    %551 = vmatpush1.msra.mxu0 0.0
    %552 = vmatprep.subr.mxu0 0.0
    %553 = vmatpush1.msra.mxu0 0.0
    %554 = vmatprep.subr.mxu0 0.0
    %555 = vmatpush1.msra.mxu0 0.0
    %556 = vmatprep.subr.mxu0 0.0
    %557 = vmatpush1.msra.mxu0 0.0
    %558 = vmatprep.subr.mxu0 0.0
    %559 = vmatpush1.msra.mxu0 0.0
    %560 = vmatprep.subr.mxu0 0.0
    %561 = vmatpush1.msra.mxu0 0.0
    %562 = vmatprep.subr.mxu0 0.0
    %563 = vmatpush1.msra.mxu0 0.0
    %564 = vmatprep.subr.mxu0 0.0
    %565 = vmatpush1.msra.mxu0 0.0
    %566 = vmatprep.subr.mxu0 0.0
    %567 = vmatpush1.msra.mxu0 0.0
    %568 = vmatprep.subr.mxu0 0.0
    %569 = vmatpush1.msra.mxu0 0.0
    %570 = vmatprep.subr.mxu0 0.0
    %571 = vmatpush1.msra.mxu0 0.0
    %572 = vmatprep.subr.mxu0 0.0
    %573 = vmatpush1.msra.mxu0 0.0
    %574 = vmatprep.subr.mxu0 0.0
    %575 = vmatpush1.msra.mxu0 0.0
    %576 = vmatprep.subr.mxu0 0.0
    %577 = vmatpush1.msra.mxu0 0.0
    %578 = vmatprep.subr.mxu0 0.0
    %579 = vmatpush1.msra.mxu0 0.0
    %580 = vmatprep.subr.mxu0 0.0
    %581 = vmatpush1.msra.mxu0 0.0
    %582 = vmatprep.subr.mxu0 0.0
    %583 = vmatpush1.msra.mxu0 0.0
    %584 = vmatprep.subr.mxu0 0.0
    %585 = vmatpush1.msra.mxu0 0.0
    %586 = vmatprep.subr.mxu0 0.0
    %587 = vmatpush1.msra.mxu0 0.0
    %588 = vmatprep.subr.mxu0 0.0
    %589 = vmatpush1.msra.mxu0 0.0
    %590 = vmatprep.subr.mxu0 0.0
    %591 = vmatpush1.msra.mxu0 0.0
    %592 = vmatprep.subr.mxu0 0.0
    %593 = vmatpush1.msra.mxu0 0.0
    %594 = vmatprep.subr.mxu0 0.0
    %595 = vmatpush1.msra.mxu0 0.0
    %596 = vmatprep.subr.mxu0 0.0
    %597 = vmatpush1.msra.mxu0 0.0
    %598 = vmatprep.subr.mxu0 0.0
    %599 = vmatpush1.msra.mxu0 0.0
    %600 = vmatprep.subr.mxu0 0.0
    %601 = vmatpush1.msra.mxu0 0.0
    %602 = vmatprep.subr.mxu0 0.0
    %603 = vmatpush1.msra.mxu0 0.0
    %604 = vmatprep.subr.mxu0 0.0
    %605 = vmatpush1.msra.mxu0 0.0
    %606 = vmatprep.subr.mxu0 0.0
    %607 = vmatpush1.msra.mxu0 0.0
    %608 = vmatprep.mubr.f32.mxu0 0.0
    %609 = vmatmul.mubr.f32.gmra.mrb[0].mxu0 %v471
    %v610 = vpop.f32.mrb[0].mxu0
    %v611 = vadd.f32 %v104, %v610
    %v612 = vpop.f32.mrb[0].mxu0
    %v613 = vadd.f32 %v108, %v612
    %614 = vdwg.mxu0
    %v619 = vcombine.low %v540, %v542
    %v620 = vcombine.low %v611, %v613
    %v622 = vunpack.c.l.s4 1983009808
    %v623 = vunpack.c.0.s8 %v622
    %v624 = vlaneseq
    %v625 = vshrl.u32 %v624, 7
    %v626 = vsub.s32 %v623, %v625
    %v627 = vrot.slane %v619, %v626
    %v629 = vunpack.c.l.s4 1983009808
    %v630 = vunpack.c.0.s8 %v629
    %v631 = vlaneseq
    %v632 = vshrl.u32 %v631, 7
    %v633 = vsub.s32 %v630, %v632
    %v634 = vrot.slane %v620, %v633
    %v635 = vcombine.low %v627, %v634
    %s637 = scalar_lea.vmem [#allocation2], 16
    %638 = vst [vmem:[%s637] sm:$0xff] %v635
    %s639 = scalar_lea.vmem [#allocation3], 8
    %v640 = vld [vmem:[%s639] sm:$0x3]
    %v642 = vsel %vm115, %v640, 0
    %644 = vmatprep.subr.mxu0 %v80
    %645 = vmatpush1.msra.mxu0 %v79
    %646 = vmatprep.subr.mxu0 %v84
    %647 = vmatpush1.msra.mxu0 %v83
    %648 = vmatprep.subr.mxu0 %v124
    %649 = vmatpush1.msra.mxu0 %v121
    %650 = vmatprep.subr.mxu0 0.0
    %651 = vmatpush1.msra.mxu0 0.0
    %652 = vmatprep.subr.mxu0 0.0
    %653 = vmatpush1.msra.mxu0 0.0
    %654 = vmatprep.subr.mxu0 0.0
    %655 = vmatpush1.msra.mxu0 0.0
    %656 = vmatprep.subr.mxu0 0.0
    %657 = vmatpush1.msra.mxu0 0.0
    %658 = vmatprep.subr.mxu0 0.0
    %659 = vmatpush1.msra.mxu0 0.0
    %660 = vmatprep.subr.mxu0 0.0
    %661 = vmatpush1.msra.mxu0 0.0
    %662 = vmatprep.subr.mxu0 0.0
    %663 = vmatpush1.msra.mxu0 0.0
    %664 = vmatprep.subr.mxu0 0.0
    %665 = vmatpush1.msra.mxu0 0.0
    %666 = vmatprep.subr.mxu0 0.0
    %667 = vmatpush1.msra.mxu0 0.0
    %668 = vmatprep.subr.mxu0 0.0
    %669 = vmatpush1.msra.mxu0 0.0
    %670 = vmatprep.subr.mxu0 0.0
    %671 = vmatpush1.msra.mxu0 0.0
    %672 = vmatprep.subr.mxu0 0.0
    %673 = vmatpush1.msra.mxu0 0.0
    %674 = vmatprep.subr.mxu0 0.0
    %675 = vmatpush1.msra.mxu0 0.0
    %676 = vmatprep.subr.mxu0 0.0
    %677 = vmatpush1.msra.mxu0 0.0
    %678 = vmatprep.subr.mxu0 0.0
    %679 = vmatpush1.msra.mxu0 0.0
    %680 = vmatprep.subr.mxu0 0.0
    %681 = vmatpush1.msra.mxu0 0.0
    %682 = vmatprep.subr.mxu0 0.0
    %683 = vmatpush1.msra.mxu0 0.0
    %684 = vmatprep.subr.mxu0 0.0
    %685 = vmatpush1.msra.mxu0 0.0
    %686 = vmatprep.subr.mxu0 0.0
    %687 = vmatpush1.msra.mxu0 0.0
    %688 = vmatprep.subr.mxu0 0.0
    %689 = vmatpush1.msra.mxu0 0.0
    %690 = vmatprep.subr.mxu0 0.0
    %691 = vmatpush1.msra.mxu0 0.0
    %692 = vmatprep.subr.mxu0 0.0
    %693 = vmatpush1.msra.mxu0 0.0
    %694 = vmatprep.subr.mxu0 0.0
    %695 = vmatpush1.msra.mxu0 0.0
    %696 = vmatprep.subr.mxu0 0.0
    %697 = vmatpush1.msra.mxu0 0.0
    %698 = vmatprep.subr.mxu0 0.0
    %699 = vmatpush1.msra.mxu0 0.0
    %700 = vmatprep.subr.mxu0 0.0
    %701 = vmatpush1.msra.mxu0 0.0
    %702 = vmatprep.subr.mxu0 0.0
    %703 = vmatpush1.msra.mxu0 0.0
    %704 = vmatprep.subr.mxu0 0.0
    %705 = vmatpush1.msra.mxu0 0.0
    %706 = vmatprep.subr.mxu0 0.0
    %707 = vmatpush1.msra.mxu0 0.0
    %708 = vmatprep.mubr.f32.mxu0 0.0
    %709 = vmatmul.mubr.f32.gmra.mrb[0].mxu0 %v642
    %v710 = vpop.f32.mrb[0].mxu0
    %v711 = vadd.f32 %v96, %v710
    %v712 = vpop.f32.mrb[0].mxu0
    %v713 = vadd.f32 %v100, %v712
    %714 = vdwg.mxu0
    %715 = vmatprep.subr.mxu0 %v82
    %716 = vmatpush1.msra.mxu0 %v81
    %717 = vmatprep.subr.mxu0 %v86
    %718 = vmatpush1.msra.mxu0 %v85
    %719 = vmatprep.subr.mxu0 %v130
    %720 = vmatpush1.msra.mxu0 %v127
    %721 = vmatprep.subr.mxu0 0.0
    %722 = vmatpush1.msra.mxu0 0.0
    %723 = vmatprep.subr.mxu0 0.0
    %724 = vmatpush1.msra.mxu0 0.0
    %725 = vmatprep.subr.mxu0 0.0
    %726 = vmatpush1.msra.mxu0 0.0
    %727 = vmatprep.subr.mxu0 0.0
    %728 = vmatpush1.msra.mxu0 0.0
    %729 = vmatprep.subr.mxu0 0.0
    %730 = vmatpush1.msra.mxu0 0.0
    %731 = vmatprep.subr.mxu0 0.0
    %732 = vmatpush1.msra.mxu0 0.0
    %733 = vmatprep.subr.mxu0 0.0
    %734 = vmatpush1.msra.mxu0 0.0
    %735 = vmatprep.subr.mxu0 0.0
    %736 = vmatpush1.msra.mxu0 0.0
    %737 = vmatprep.subr.mxu0 0.0
    %738 = vmatpush1.msra.mxu0 0.0
    %739 = vmatprep.subr.mxu0 0.0
    %740 = vmatpush1.msra.mxu0 0.0
    %741 = vmatprep.subr.mxu0 0.0
    %742 = vmatpush1.msra.mxu0 0.0
    %743 = vmatprep.subr.mxu0 0.0
    %744 = vmatpush1.msra.mxu0 0.0
    %745 = vmatprep.subr.mxu0 0.0
    %746 = vmatpush1.msra.mxu0 0.0
    %747 = vmatprep.subr.mxu0 0.0
    %748 = vmatpush1.msra.mxu0 0.0
    %749 = vmatprep.subr.mxu0 0.0
    %750 = vmatpush1.msra.mxu0 0.0
    %751 = vmatprep.subr.mxu0 0.0
    %752 = vmatpush1.msra.mxu0 0.0
    %753 = vmatprep.subr.mxu0 0.0
    %754 = vmatpush1.msra.mxu0 0.0
    %755 = vmatprep.subr.mxu0 0.0
    %756 = vmatpush1.msra.mxu0 0.0
    %757 = vmatprep.subr.mxu0 0.0
    %758 = vmatpush1.msra.mxu0 0.0
    %759 = vmatprep.subr.mxu0 0.0
    %760 = vmatpush1.msra.mxu0 0.0
    %761 = vmatprep.subr.mxu0 0.0
    %762 = vmatpush1.msra.mxu0 0.0
    %763 = vmatprep.subr.mxu0 0.0
    %764 = vmatpush1.msra.mxu0 0.0
    %765 = vmatprep.subr.mxu0 0.0
    %766 = vmatpush1.msra.mxu0 0.0
    %767 = vmatprep.subr.mxu0 0.0
    %768 = vmatpush1.msra.mxu0 0.0
    %769 = vmatprep.subr.mxu0 0.0
    %770 = vmatpush1.msra.mxu0 0.0
    %771 = vmatprep.subr.mxu0 0.0
    %772 = vmatpush1.msra.mxu0 0.0
    %773 = vmatprep.subr.mxu0 0.0
    %774 = vmatpush1.msra.mxu0 0.0
    %775 = vmatprep.subr.mxu0 0.0
    %776 = vmatpush1.msra.mxu0 0.0
    %777 = vmatprep.subr.mxu0 0.0
    %778 = vmatpush1.msra.mxu0 0.0
    %779 = vmatprep.mubr.f32.mxu0 0.0
    %780 = vmatmul.mubr.f32.gmra.mrb[0].mxu0 %v642
    %v781 = vpop.f32.mrb[0].mxu0
    %v782 = vadd.f32 %v104, %v781
    %v783 = vpop.f32.mrb[0].mxu0
    %v784 = vadd.f32 %v108, %v783
    %785 = vdwg.mxu0
    %v790 = vcombine.low %v711, %v713
    %v791 = vcombine.low %v782, %v784
    %v793 = vunpack.c.l.s4 1983009808
    %v794 = vunpack.c.0.s8 %v793
    %v795 = vlaneseq
    %v796 = vshrl.u32 %v795, 7
    %v797 = vsub.s32 %v794, %v796
    %v798 = vrot.slane %v790, %v797
    %v800 = vunpack.c.l.s4 1983009808
    %v801 = vunpack.c.0.s8 %v800
    %v802 = vlaneseq
    %v803 = vshrl.u32 %v802, 7
    %v804 = vsub.s32 %v801, %v803
    %v805 = vrot.slane %v791, %v804
    %v806 = vcombine.low %v798, %v805
    %s808 = scalar_lea.vmem [#allocation2], 24
    %809 = vst [vmem:[%s808] sm:$0xff] %v806
    %s810 = scalar_lea.vmem [#allocation3], 10
    %v811 = vld [vmem:[%s810] sm:$0x3]
    %v813 = vsel %vm115, %v811, 0
    %815 = vmatprep.subr.mxu0 %v80
    %816 = vmatpush1.msra.mxu0 %v79
    %817 = vmatprep.subr.mxu0 %v84
    %818 = vmatpush1.msra.mxu0 %v83
    %819 = vmatprep.subr.mxu0 %v124
    %820 = vmatpush1.msra.mxu0 %v121
    %821 = vmatprep.subr.mxu0 0.0
    %822 = vmatpush1.msra.mxu0 0.0
    %823 = vmatprep.subr.mxu0 0.0
    %824 = vmatpush1.msra.mxu0 0.0
    %825 = vmatprep.subr.mxu0 0.0
    %826 = vmatpush1.msra.mxu0 0.0
    %827 = vmatprep.subr.mxu0 0.0
    %828 = vmatpush1.msra.mxu0 0.0
    %829 = vmatprep.subr.mxu0 0.0
    %830 = vmatpush1.msra.mxu0 0.0
    %831 = vmatprep.subr.mxu0 0.0
    %832 = vmatpush1.msra.mxu0 0.0
    %833 = vmatprep.subr.mxu0 0.0
    %834 = vmatpush1.msra.mxu0 0.0
    %835 = vmatprep.subr.mxu0 0.0
    %836 = vmatpush1.msra.mxu0 0.0
    %837 = vmatprep.subr.mxu0 0.0
    %838 = vmatpush1.msra.mxu0 0.0
    %839 = vmatprep.subr.mxu0 0.0
    %840 = vmatpush1.msra.mxu0 0.0
    %841 = vmatprep.subr.mxu0 0.0
    %842 = vmatpush1.msra.mxu0 0.0
    %843 = vmatprep.subr.mxu0 0.0
    %844 = vmatpush1.msra.mxu0 0.0
    %845 = vmatprep.subr.mxu0 0.0
    %846 = vmatpush1.msra.mxu0 0.0
    %847 = vmatprep.subr.mxu0 0.0
    %848 = vmatpush1.msra.mxu0 0.0
    %849 = vmatprep.subr.mxu0 0.0
    %850 = vmatpush1.msra.mxu0 0.0
    %851 = vmatprep.subr.mxu0 0.0
    %852 = vmatpush1.msra.mxu0 0.0
    %853 = vmatprep.subr.mxu0 0.0
    %854 = vmatpush1.msra.mxu0 0.0
    %855 = vmatprep.subr.mxu0 0.0
    %856 = vmatpush1.msra.mxu0 0.0
    %857 = vmatprep.subr.mxu0 0.0
    %858 = vmatpush1.msra.mxu0 0.0
    %859 = vmatprep.subr.mxu0 0.0
    %860 = vmatpush1.msra.mxu0 0.0
    %861 = vmatprep.subr.mxu0 0.0
    %862 = vmatpush1.msra.mxu0 0.0
    %863 = vmatprep.subr.mxu0 0.0
    %864 = vmatpush1.msra.mxu0 0.0
    %865 = vmatprep.subr.mxu0 0.0
    %866 = vmatpush1.msra.mxu0 0.0
    %867 = vmatprep.subr.mxu0 0.0
    %868 = vmatpush1.msra.mxu0 0.0
    %869 = vmatprep.subr.mxu0 0.0
    %870 = vmatpush1.msra.mxu0 0.0
    %871 = vmatprep.subr.mxu0 0.0
    %872 = vmatpush1.msra.mxu0 0.0
    %873 = vmatprep.subr.mxu0 0.0
    %874 = vmatpush1.msra.mxu0 0.0
    %875 = vmatprep.subr.mxu0 0.0
    %876 = vmatpush1.msra.mxu0 0.0
    %877 = vmatprep.subr.mxu0 0.0
    %878 = vmatpush1.msra.mxu0 0.0
    %879 = vmatprep.mubr.f32.mxu0 0.0
    %880 = vmatmul.mubr.f32.gmra.mrb[0].mxu0 %v813
    %v881 = vpop.f32.mrb[0].mxu0
    %v882 = vadd.f32 %v96, %v881
    %v883 = vpop.f32.mrb[0].mxu0
    %v884 = vadd.f32 %v100, %v883
    %885 = vdwg.mxu0
    %886 = vmatprep.subr.mxu0 %v82
    %887 = vmatpush1.msra.mxu0 %v81
    %888 = vmatprep.subr.mxu0 %v86
    %889 = vmatpush1.msra.mxu0 %v85
    %890 = vmatprep.subr.mxu0 %v130
    %891 = vmatpush1.msra.mxu0 %v127
    %892 = vmatprep.subr.mxu0 0.0
    %893 = vmatpush1.msra.mxu0 0.0
    %894 = vmatprep.subr.mxu0 0.0
    %895 = vmatpush1.msra.mxu0 0.0
    %896 = vmatprep.subr.mxu0 0.0
    %897 = vmatpush1.msra.mxu0 0.0
    %898 = vmatprep.subr.mxu0 0.0
    %899 = vmatpush1.msra.mxu0 0.0
    %900 = vmatprep.subr.mxu0 0.0
    %901 = vmatpush1.msra.mxu0 0.0
    %902 = vmatprep.subr.mxu0 0.0
    %903 = vmatpush1.msra.mxu0 0.0
    %904 = vmatprep.subr.mxu0 0.0
    %905 = vmatpush1.msra.mxu0 0.0
    %906 = vmatprep.subr.mxu0 0.0
    %907 = vmatpush1.msra.mxu0 0.0
    %908 = vmatprep.subr.mxu0 0.0
    %909 = vmatpush1.msra.mxu0 0.0
    %910 = vmatprep.subr.mxu0 0.0
    %911 = vmatpush1.msra.mxu0 0.0
    %912 = vmatprep.subr.mxu0 0.0
    %913 = vmatpush1.msra.mxu0 0.0
    %914 = vmatprep.subr.mxu0 0.0
    %915 = vmatpush1.msra.mxu0 0.0
    %916 = vmatprep.subr.mxu0 0.0
    %917 = vmatpush1.msra.mxu0 0.0
    %918 = vmatprep.subr.mxu0 0.0
    %919 = vmatpush1.msra.mxu0 0.0
    %920 = vmatprep.subr.mxu0 0.0
    %921 = vmatpush1.msra.mxu0 0.0
    %922 = vmatprep.subr.mxu0 0.0
    %923 = vmatpush1.msra.mxu0 0.0
    %924 = vmatprep.subr.mxu0 0.0
    %925 = vmatpush1.msra.mxu0 0.0
    %926 = vmatprep.subr.mxu0 0.0
    %927 = vmatpush1.msra.mxu0 0.0
    %928 = vmatprep.subr.mxu0 0.0
    %929 = vmatpush1.msra.mxu0 0.0
    %930 = vmatprep.subr.mxu0 0.0
    %931 = vmatpush1.msra.mxu0 0.0
    %932 = vmatprep.subr.mxu0 0.0
    %933 = vmatpush1.msra.mxu0 0.0
    %934 = vmatprep.subr.mxu0 0.0
    %935 = vmatpush1.msra.mxu0 0.0
    %936 = vmatprep.subr.mxu0 0.0
    %937 = vmatpush1.msra.mxu0 0.0
    %938 = vmatprep.subr.mxu0 0.0
    %939 = vmatpush1.msra.mxu0 0.0
    %940 = vmatprep.subr.mxu0 0.0
    %941 = vmatpush1.msra.mxu0 0.0
    %942 = vmatprep.subr.mxu0 0.0
    %943 = vmatpush1.msra.mxu0 0.0
    %944 = vmatprep.subr.mxu0 0.0
    %945 = vmatpush1.msra.mxu0 0.0
    %946 = vmatprep.subr.mxu0 0.0
    %947 = vmatpush1.msra.mxu0 0.0
    %948 = vmatprep.subr.mxu0 0.0
    %949 = vmatpush1.msra.mxu0 0.0
    %950 = vmatprep.mubr.f32.mxu0 0.0
    %951 = vmatmul.mubr.f32.gmra.mrb[0].mxu0 %v813
    %v952 = vpop.f32.mrb[0].mxu0
    %v953 = vadd.f32 %v104, %v952
    %v954 = vpop.f32.mrb[0].mxu0
    %v955 = vadd.f32 %v108, %v954
    %956 = vdwg.mxu0
    %v961 = vcombine.low %v882, %v884
    %v962 = vcombine.low %v953, %v955
    %v964 = vunpack.c.l.s4 1983009808
    %v965 = vunpack.c.0.s8 %v964
    %v966 = vlaneseq
    %v967 = vshrl.u32 %v966, 7
    %v968 = vsub.s32 %v965, %v967
    %v969 = vrot.slane %v961, %v968
    %v971 = vunpack.c.l.s4 1983009808
    %v972 = vunpack.c.0.s8 %v971
    %v973 = vlaneseq
    %v974 = vshrl.u32 %v973, 7
    %v975 = vsub.s32 %v972, %v974
    %v976 = vrot.slane %v962, %v975
    %v977 = vcombine.low %v969, %v976
    %s979 = scalar_lea.vmem [#allocation2], 32
    %980 = vst [vmem:[%s979] sm:$0xff] %v977
    %s981 = scalar_lea.vmem [#allocation3], 12
    %v982 = vld [vmem:[%s981] sm:$0x3]
    %v984 = vsel %vm115, %v982, 0
    %986 = vmatprep.subr.mxu0 %v80
    %987 = vmatpush1.msra.mxu0 %v79
    %988 = vmatprep.subr.mxu0 %v84
    %989 = vmatpush1.msra.mxu0 %v83
    %990 = vmatprep.subr.mxu0 %v124
    %991 = vmatpush1.msra.mxu0 %v121
    %992 = vmatprep.subr.mxu0 0.0
    %993 = vmatpush1.msra.mxu0 0.0
    %994 = vmatprep.subr.mxu0 0.0
    %995 = vmatpush1.msra.mxu0 0.0
    %996 = vmatprep.subr.mxu0 0.0
    %997 = vmatpush1.msra.mxu0 0.0
    %998 = vmatprep.subr.mxu0 0.0
    %999 = vmatpush1.msra.mxu0 0.0
    %1000 = vmatprep.subr.mxu0 0.0
    %1001 = vmatpush1.msra.mxu0 0.0
    %1002 = vmatprep.subr.mxu0 0.0
    %1003 = vmatpush1.msra.mxu0 0.0
    %1004 = vmatprep.subr.mxu0 0.0
    %1005 = vmatpush1.msra.mxu0 0.0
    %1006 = vmatprep.subr.mxu0 0.0
    %1007 = vmatpush1.msra.mxu0 0.0
    %1008 = vmatprep.subr.mxu0 0.0
    %1009 = vmatpush1.msra.mxu0 0.0
    %1010 = vmatprep.subr.mxu0 0.0
    %1011 = vmatpush1.msra.mxu0 0.0
    %1012 = vmatprep.subr.mxu0 0.0
    %1013 = vmatpush1.msra.mxu0 0.0
    %1014 = vmatprep.subr.mxu0 0.0
    %1015 = vmatpush1.msra.mxu0 0.0
    %1016 = vmatprep.subr.mxu0 0.0
    %1017 = vmatpush1.msra.mxu0 0.0
    %1018 = vmatprep.subr.mxu0 0.0
    %1019 = vmatpush1.msra.mxu0 0.0
    %1020 = vmatprep.subr.mxu0 0.0
    %1021 = vmatpush1.msra.mxu0 0.0
    %1022 = vmatprep.subr.mxu0 0.0
    %1023 = vmatpush1.msra.mxu0 0.0
    %1024 = vmatprep.subr.mxu0 0.0
    %1025 = vmatpush1.msra.mxu0 0.0
    %1026 = vmatprep.subr.mxu0 0.0
    %1027 = vmatpush1.msra.mxu0 0.0
    %1028 = vmatprep.subr.mxu0 0.0
    %1029 = vmatpush1.msra.mxu0 0.0
    %1030 = vmatprep.subr.mxu0 0.0
    %1031 = vmatpush1.msra.mxu0 0.0
    %1032 = vmatprep.subr.mxu0 0.0
    %1033 = vmatpush1.msra.mxu0 0.0
    %1034 = vmatprep.subr.mxu0 0.0
    %1035 = vmatpush1.msra.mxu0 0.0
    %1036 = vmatprep.subr.mxu0 0.0
    %1037 = vmatpush1.msra.mxu0 0.0
    %1038 = vmatprep.subr.mxu0 0.0
    %1039 = vmatpush1.msra.mxu0 0.0
    %1040 = vmatprep.subr.mxu0 0.0
    %1041 = vmatpush1.msra.mxu0 0.0
    %1042 = vmatprep.subr.mxu0 0.0
    %1043 = vmatpush1.msra.mxu0 0.0
    %1044 = vmatprep.subr.mxu0 0.0
    %1045 = vmatpush1.msra.mxu0 0.0
    %1046 = vmatprep.subr.mxu0 0.0
    %1047 = vmatpush1.msra.mxu0 0.0
    %1048 = vmatprep.subr.mxu0 0.0
    %1049 = vmatpush1.msra.mxu0 0.0
    %1050 = vmatprep.mubr.f32.mxu0 0.0
    %1051 = vmatmul.mubr.f32.gmra.mrb[0].mxu0 %v984
    %v1052 = vpop.f32.mrb[0].mxu0
    %v1053 = vadd.f32 %v96, %v1052
    %v1054 = vpop.f32.mrb[0].mxu0
    %v1055 = vadd.f32 %v100, %v1054
    %1056 = vdwg.mxu0
    %1057 = vmatprep.subr.mxu0 %v82
    %1058 = vmatpush1.msra.mxu0 %v81
    %1059 = vmatprep.subr.mxu0 %v86
    %1060 = vmatpush1.msra.mxu0 %v85
    %1061 = vmatprep.subr.mxu0 %v130
    %1062 = vmatpush1.msra.mxu0 %v127
    %1063 = vmatprep.subr.mxu0 0.0
    %1064 = vmatpush1.msra.mxu0 0.0
    %1065 = vmatprep.subr.mxu0 0.0
    %1066 = vmatpush1.msra.mxu0 0.0
    %1067 = vmatprep.subr.mxu0 0.0
    %1068 = vmatpush1.msra.mxu0 0.0
    %1069 = vmatprep.subr.mxu0 0.0
    %1070 = vmatpush1.msra.mxu0 0.0
    %1071 = vmatprep.subr.mxu0 0.0
    %1072 = vmatpush1.msra.mxu0 0.0
    %1073 = vmatprep.subr.mxu0 0.0
    %1074 = vmatpush1.msra.mxu0 0.0
    %1075 = vmatprep.subr.mxu0 0.0
    %1076 = vmatpush1.msra.mxu0 0.0
    %1077 = vmatprep.subr.mxu0 0.0
    %1078 = vmatpush1.msra.mxu0 0.0
    %1079 = vmatprep.subr.mxu0 0.0
    %1080 = vmatpush1.msra.mxu0 0.0
    %1081 = vmatprep.subr.mxu0 0.0
    %1082 = vmatpush1.msra.mxu0 0.0
    %1083 = vmatprep.subr.mxu0 0.0
    %1084 = vmatpush1.msra.mxu0 0.0
    %1085 = vmatprep.subr.mxu0 0.0
    %1086 = vmatpush1.msra.mxu0 0.0
    %1087 = vmatprep.subr.mxu0 0.0
    %1088 = vmatpush1.msra.mxu0 0.0
    %1089 = vmatprep.subr.mxu0 0.0
    %1090 = vmatpush1.msra.mxu0 0.0
    %1091 = vmatprep.subr.mxu0 0.0
    %1092 = vmatpush1.msra.mxu0 0.0
    %1093 = vmatprep.subr.mxu0 0.0
    %1094 = vmatpush1.msra.mxu0 0.0
    %1095 = vmatprep.subr.mxu0 0.0
    %1096 = vmatpush1.msra.mxu0 0.0
    %1097 = vmatprep.subr.mxu0 0.0
    %1098 = vmatpush1.msra.mxu0 0.0
    %1099 = vmatprep.subr.mxu0 0.0
    %1100 = vmatpush1.msra.mxu0 0.0
    %1101 = vmatprep.subr.mxu0 0.0
    %1102 = vmatpush1.msra.mxu0 0.0
    %1103 = vmatprep.subr.mxu0 0.0
    %1104 = vmatpush1.msra.mxu0 0.0
    %1105 = vmatprep.subr.mxu0 0.0
    %1106 = vmatpush1.msra.mxu0 0.0
    %1107 = vmatprep.subr.mxu0 0.0
    %1108 = vmatpush1.msra.mxu0 0.0
    %1109 = vmatprep.subr.mxu0 0.0
    %1110 = vmatpush1.msra.mxu0 0.0
    %1111 = vmatprep.subr.mxu0 0.0
    %1112 = vmatpush1.msra.mxu0 0.0
    %1113 = vmatprep.subr.mxu0 0.0
    %1114 = vmatpush1.msra.mxu0 0.0
    %1115 = vmatprep.subr.mxu0 0.0
    %1116 = vmatpush1.msra.mxu0 0.0
    %1117 = vmatprep.subr.mxu0 0.0
    %1118 = vmatpush1.msra.mxu0 0.0
    %1119 = vmatprep.subr.mxu0 0.0
    %1120 = vmatpush1.msra.mxu0 0.0
    %1121 = vmatprep.mubr.f32.mxu0 0.0
    %1122 = vmatmul.mubr.f32.gmra.mrb[0].mxu0 %v984
    %v1123 = vpop.f32.mrb[0].mxu0
    %v1124 = vadd.f32 %v104, %v1123
    %v1125 = vpop.f32.mrb[0].mxu0
    %v1126 = vadd.f32 %v108, %v1125
    %1127 = vdwg.mxu0
    %v1132 = vcombine.low %v1053, %v1055
    %v1133 = vcombine.low %v1124, %v1126
    %v1135 = vunpack.c.l.s4 1983009808
    %v1136 = vunpack.c.0.s8 %v1135
    %v1137 = vlaneseq
    %v1138 = vshrl.u32 %v1137, 7
    %v1139 = vsub.s32 %v1136, %v1138
    %v1140 = vrot.slane %v1132, %v1139
    %v1142 = vunpack.c.l.s4 1983009808
    %v1143 = vunpack.c.0.s8 %v1142
    %v1144 = vlaneseq
    %v1145 = vshrl.u32 %v1144, 7
    %v1146 = vsub.s32 %v1143, %v1145
    %v1147 = vrot.slane %v1133, %v1146
    %v1148 = vcombine.low %v1140, %v1147
    %s1150 = scalar_lea.vmem [#allocation2], 40
    %1151 = vst [vmem:[%s1150] sm:$0xff] %v1148
    %s1152 = scalar_lea.vmem [#allocation3], 14
    %v1153 = vld [vmem:[%s1152] sm:$0x3]
    %v1155 = vsel %vm115, %v1153, 0
    %1157 = vmatprep.subr.mxu0 %v80
    %1158 = vmatpush1.msra.mxu0 %v79
    %1159 = vmatprep.subr.mxu0 %v84
    %1160 = vmatpush1.msra.mxu0 %v83
    %1161 = vmatprep.subr.mxu0 %v124
    %1162 = vmatpush1.msra.mxu0 %v121
    %1163 = vmatprep.subr.mxu0 0.0
    %1164 = vmatpush1.msra.mxu0 0.0
    %1165 = vmatprep.subr.mxu0 0.0
    %1166 = vmatpush1.msra.mxu0 0.0
    %1167 = vmatprep.subr.mxu0 0.0
    %1168 = vmatpush1.msra.mxu0 0.0
    %1169 = vmatprep.subr.mxu0 0.0
    %1170 = vmatpush1.msra.mxu0 0.0
    %1171 = vmatprep.subr.mxu0 0.0
    %1172 = vmatpush1.msra.mxu0 0.0
    %1173 = vmatprep.subr.mxu0 0.0
    %1174 = vmatpush1.msra.mxu0 0.0
    %1175 = vmatprep.subr.mxu0 0.0
    %1176 = vmatpush1.msra.mxu0 0.0
    %1177 = vmatprep.subr.mxu0 0.0
    %1178 = vmatpush1.msra.mxu0 0.0
    %1179 = vmatprep.subr.mxu0 0.0
    %1180 = vmatpush1.msra.mxu0 0.0
    %1181 = vmatprep.subr.mxu0 0.0
    %1182 = vmatpush1.msra.mxu0 0.0
    %1183 = vmatprep.subr.mxu0 0.0
    %1184 = vmatpush1.msra.mxu0 0.0
    %1185 = vmatprep.subr.mxu0 0.0
    %1186 = vmatpush1.msra.mxu0 0.0
    %1187 = vmatprep.subr.mxu0 0.0
    %1188 = vmatpush1.msra.mxu0 0.0
    %1189 = vmatprep.subr.mxu0 0.0
    %1190 = vmatpush1.msra.mxu0 0.0
    %1191 = vmatprep.subr.mxu0 0.0
    %1192 = vmatpush1.msra.mxu0 0.0
    %1193 = vmatprep.subr.mxu0 0.0
    %1194 = vmatpush1.msra.mxu0 0.0
    %1195 = vmatprep.subr.mxu0 0.0
    %1196 = vmatpush1.msra.mxu0 0.0
    %1197 = vmatprep.subr.mxu0 0.0
    %1198 = vmatpush1.msra.mxu0 0.0
    %1199 = vmatprep.subr.mxu0 0.0
    %1200 = vmatpush1.msra.mxu0 0.0
    %1201 = vmatprep.subr.mxu0 0.0
    %1202 = vmatpush1.msra.mxu0 0.0
    %1203 = vmatprep.subr.mxu0 0.0
    %1204 = vmatpush1.msra.mxu0 0.0
    %1205 = vmatprep.subr.mxu0 0.0
    %1206 = vmatpush1.msra.mxu0 0.0
    %1207 = vmatprep.subr.mxu0 0.0
    %1208 = vmatpush1.msra.mxu0 0.0
    %1209 = vmatprep.subr.mxu0 0.0
    %1210 = vmatpush1.msra.mxu0 0.0
    %1211 = vmatprep.subr.mxu0 0.0
    %1212 = vmatpush1.msra.mxu0 0.0
    %1213 = vmatprep.subr.mxu0 0.0
    %1214 = vmatpush1.msra.mxu0 0.0
    %1215 = vmatprep.subr.mxu0 0.0
    %1216 = vmatpush1.msra.mxu0 0.0
    %1217 = vmatprep.subr.mxu0 0.0
    %1218 = vmatpush1.msra.mxu0 0.0
    %1219 = vmatprep.subr.mxu0 0.0
    %1220 = vmatpush1.msra.mxu0 0.0
    %1221 = vmatprep.mubr.f32.mxu0 0.0
    %1222 = vmatmul.mubr.f32.gmra.mrb[0].mxu0 %v1155
    %v1223 = vpop.f32.mrb[0].mxu0
    %v1224 = vadd.f32 %v96, %v1223
    %v1225 = vpop.f32.mrb[0].mxu0
    %v1226 = vadd.f32 %v100, %v1225
    %1227 = vdwg.mxu0
    %1228 = vmatprep.subr.mxu0 %v82
    %1229 = vmatpush1.msra.mxu0 %v81
    %1230 = vmatprep.subr.mxu0 %v86
    %1231 = vmatpush1.msra.mxu0 %v85
    %1232 = vmatprep.subr.mxu0 %v130
    %1233 = vmatpush1.msra.mxu0 %v127
    %1234 = vmatprep.subr.mxu0 0.0
    %1235 = vmatpush1.msra.mxu0 0.0
    %1236 = vmatprep.subr.mxu0 0.0
    %1237 = vmatpush1.msra.mxu0 0.0
    %1238 = vmatprep.subr.mxu0 0.0
    %1239 = vmatpush1.msra.mxu0 0.0
    %1240 = vmatprep.subr.mxu0 0.0
    %1241 = vmatpush1.msra.mxu0 0.0
    %1242 = vmatprep.subr.mxu0 0.0
    %1243 = vmatpush1.msra.mxu0 0.0
    %1244 = vmatprep.subr.mxu0 0.0
    %1245 = vmatpush1.msra.mxu0 0.0
    %1246 = vmatprep.subr.mxu0 0.0
    %1247 = vmatpush1.msra.mxu0 0.0
    %1248 = vmatprep.subr.mxu0 0.0
    %1249 = vmatpush1.msra.mxu0 0.0
    %1250 = vmatprep.subr.mxu0 0.0
    %1251 = vmatpush1.msra.mxu0 0.0
    %1252 = vmatprep.subr.mxu0 0.0
    %1253 = vmatpush1.msra.mxu0 0.0
    %1254 = vmatprep.subr.mxu0 0.0
    %1255 = vmatpush1.msra.mxu0 0.0
    %1256 = vmatprep.subr.mxu0 0.0
    %1257 = vmatpush1.msra.mxu0 0.0
    %1258 = vmatprep.subr.mxu0 0.0
    %1259 = vmatpush1.msra.mxu0 0.0
    %1260 = vmatprep.subr.mxu0 0.0
    %1261 = vmatpush1.msra.mxu0 0.0
    %1262 = vmatprep.subr.mxu0 0.0
    %1263 = vmatpush1.msra.mxu0 0.0
    %1264 = vmatprep.subr.mxu0 0.0
    %1265 = vmatpush1.msra.mxu0 0.0
    %1266 = vmatprep.subr.mxu0 0.0
    %1267 = vmatpush1.msra.mxu0 0.0
    %1268 = vmatprep.subr.mxu0 0.0
    %1269 = vmatpush1.msra.mxu0 0.0
    %1270 = vmatprep.subr.mxu0 0.0
    %1271 = vmatpush1.msra.mxu0 0.0
    %1272 = vmatprep.subr.mxu0 0.0
    %1273 = vmatpush1.msra.mxu0 0.0
    %1274 = vmatprep.subr.mxu0 0.0
    %1275 = vmatpush1.msra.mxu0 0.0
    %1276 = vmatprep.subr.mxu0 0.0
    %1277 = vmatpush1.msra.mxu0 0.0
    %1278 = vmatprep.subr.mxu0 0.0
    %1279 = vmatpush1.msra.mxu0 0.0
    %1280 = vmatprep.subr.mxu0 0.0
    %1281 = vmatpush1.msra.mxu0 0.0
    %1282 = vmatprep.subr.mxu0 0.0
    %1283 = vmatpush1.msra.mxu0 0.0
    %1284 = vmatprep.subr.mxu0 0.0
    %1285 = vmatpush1.msra.mxu0 0.0
    %1286 = vmatprep.subr.mxu0 0.0
    %1287 = vmatpush1.msra.mxu0 0.0
    %1288 = vmatprep.subr.mxu0 0.0
    %1289 = vmatpush1.msra.mxu0 0.0
    %1290 = vmatprep.subr.mxu0 0.0
    %1291 = vmatpush1.msra.mxu0 0.0
    %1292 = vmatprep.mubr.f32.mxu0 0.0
    %1293 = vmatmul.mubr.f32.gmra.mrb[0].mxu0 %v1155
    %v1294 = vpop.f32.mrb[0].mxu0
    %v1295 = vadd.f32 %v104, %v1294
    %v1296 = vpop.f32.mrb[0].mxu0
    %v1297 = vadd.f32 %v108, %v1296
    %1298 = vdwg.mxu0
    %v1303 = vcombine.low %v1224, %v1226
    %v1304 = vcombine.low %v1295, %v1297
    %v1306 = vunpack.c.l.s4 1983009808
    %v1307 = vunpack.c.0.s8 %v1306
    %v1308 = vlaneseq
    %v1309 = vshrl.u32 %v1308, 7
    %v1310 = vsub.s32 %v1307, %v1309
    %v1311 = vrot.slane %v1303, %v1310
    %v1313 = vunpack.c.l.s4 1983009808
    %v1314 = vunpack.c.0.s8 %v1313
    %v1315 = vlaneseq
    %v1316 = vshrl.u32 %v1315, 7
    %v1317 = vsub.s32 %v1314, %v1316
    %v1318 = vrot.slane %v1304, %v1317
    %v1319 = vcombine.low %v1311, %v1318
    %s1321 = scalar_lea.vmem [#allocation2], 48
    %1322 = vst [vmem:[%s1321] sm:$0xff] %v1319
    %v1323 = vcombine.low %v96, %v100
    %v1324 = vcombine.low %v104, %v108
    %v1326 = vunpack.c.l.s4 1983009808
    %v1327 = vunpack.c.0.s8 %v1326
    %v1328 = vlaneseq
    %v1329 = vshrl.u32 %v1328, 7
    %v1330 = vsub.s32 %v1327, %v1329
    %v1331 = vrot.slane %v1323, %v1330
    %v1333 = vunpack.c.l.s4 1983009808
    %v1334 = vunpack.c.0.s8 %v1333
    %v1335 = vlaneseq
    %v1336 = vshrl.u32 %v1335, 7
    %v1337 = vsub.s32 %v1334, %v1336
    %v1338 = vrot.slane %v1324, %v1337
    %v1339 = vcombine.low %v1331, %v1338
    %s1341 = scalar_lea.vmem [#allocation2], 56
    %1342 = vst [vmem:[%s1341] sm:$0xff] %v1339
    %v1343 = vld [vmem:[#allocation3] sm:$0x3]
    %v1345 = vsel %vm115, %v1343, 0
    %1347 = vmatprep.subr.mxu0 %v80
    %1348 = vmatpush1.msra.mxu0 %v79
    %1349 = vmatprep.subr.mxu0 %v84
    %1350 = vmatpush1.msra.mxu0 %v83
    %1351 = vmatprep.subr.mxu0 %v124
    %1352 = vmatpush1.msra.mxu0 %v121
    %1353 = vmatprep.subr.mxu0 0.0
    %1354 = vmatpush1.msra.mxu0 0.0
    %1355 = vmatprep.subr.mxu0 0.0
    %1356 = vmatpush1.msra.mxu0 0.0
    %1357 = vmatprep.subr.mxu0 0.0
    %1358 = vmatpush1.msra.mxu0 0.0
    %1359 = vmatprep.subr.mxu0 0.0
    %1360 = vmatpush1.msra.mxu0 0.0
    %1361 = vmatprep.subr.mxu0 0.0
    %1362 = vmatpush1.msra.mxu0 0.0
    %1363 = vmatprep.subr.mxu0 0.0
    %1364 = vmatpush1.msra.mxu0 0.0
    %1365 = vmatprep.subr.mxu0 0.0
    %1366 = vmatpush1.msra.mxu0 0.0
    %1367 = vmatprep.subr.mxu0 0.0
    %1368 = vmatpush1.msra.mxu0 0.0
    %1369 = vmatprep.subr.mxu0 0.0
    %1370 = vmatpush1.msra.mxu0 0.0
    %1371 = vmatprep.subr.mxu0 0.0
    %1372 = vmatpush1.msra.mxu0 0.0
    %1373 = vmatprep.subr.mxu0 0.0
    %1374 = vmatpush1.msra.mxu0 0.0
    %1375 = vmatprep.subr.mxu0 0.0
    %1376 = vmatpush1.msra.mxu0 0.0
    %1377 = vmatprep.subr.mxu0 0.0
    %1378 = vmatpush1.msra.mxu0 0.0
    %1379 = vmatprep.subr.mxu0 0.0
    %1380 = vmatpush1.msra.mxu0 0.0
    %1381 = vmatprep.subr.mxu0 0.0
    %1382 = vmatpush1.msra.mxu0 0.0
    %1383 = vmatprep.subr.mxu0 0.0
    %1384 = vmatpush1.msra.mxu0 0.0
    %1385 = vmatprep.subr.mxu0 0.0
    %1386 = vmatpush1.msra.mxu0 0.0
    %1387 = vmatprep.subr.mxu0 0.0
    %1388 = vmatpush1.msra.mxu0 0.0
    %1389 = vmatprep.subr.mxu0 0.0
    %1390 = vmatpush1.msra.mxu0 0.0
    %1391 = vmatprep.subr.mxu0 0.0
    %1392 = vmatpush1.msra.mxu0 0.0
    %1393 = vmatprep.subr.mxu0 0.0
    %1394 = vmatpush1.msra.mxu0 0.0
    %1395 = vmatprep.subr.mxu0 0.0
    %1396 = vmatpush1.msra.mxu0 0.0
    %1397 = vmatprep.subr.mxu0 0.0
    %1398 = vmatpush1.msra.mxu0 0.0
    %1399 = vmatprep.subr.mxu0 0.0
    %1400 = vmatpush1.msra.mxu0 0.0
    %1401 = vmatprep.subr.mxu0 0.0
    %1402 = vmatpush1.msra.mxu0 0.0
    %1403 = vmatprep.subr.mxu0 0.0
    %1404 = vmatpush1.msra.mxu0 0.0
    %1405 = vmatprep.subr.mxu0 0.0
    %1406 = vmatpush1.msra.mxu0 0.0
    %1407 = vmatprep.subr.mxu0 0.0
    %1408 = vmatpush1.msra.mxu0 0.0
    %1409 = vmatprep.subr.mxu0 0.0
    %1410 = vmatpush1.msra.mxu0 0.0
    %1411 = vmatprep.mubr.f32.mxu0 0.0
    %1412 = vmatmul.mubr.f32.gmra.mrb[0].mxu0 %v1345
    %v1413 = vpop.f32.mrb[0].mxu0
    %v1414 = vadd.f32 %v96, %v1413
    %v1415 = vpop.f32.mrb[0].mxu0
    %1416 = vdwg.mxu0
    %1417 = vmatprep.subr.mxu0 %v82
    %1418 = vmatpush1.msra.mxu0 %v81
    %1419 = vmatprep.subr.mxu0 %v86
    %1420 = vmatpush1.msra.mxu0 %v85
    %1421 = vmatprep.subr.mxu0 %v130
    %1422 = vmatpush1.msra.mxu0 %v127
    %1423 = vmatprep.subr.mxu0 0.0
    %1424 = vmatpush1.msra.mxu0 0.0
    %1425 = vmatprep.subr.mxu0 0.0
    %1426 = vmatpush1.msra.mxu0 0.0
    %1427 = vmatprep.subr.mxu0 0.0
    %1428 = vmatpush1.msra.mxu0 0.0
    %1429 = vmatprep.subr.mxu0 0.0
    %1430 = vmatpush1.msra.mxu0 0.0
    %1431 = vmatprep.subr.mxu0 0.0
    %1432 = vmatpush1.msra.mxu0 0.0
    %1433 = vmatprep.subr.mxu0 0.0
    %1434 = vmatpush1.msra.mxu0 0.0
    %1435 = vmatprep.subr.mxu0 0.0
    %1436 = vmatpush1.msra.mxu0 0.0
    %1437 = vmatprep.subr.mxu0 0.0
    %1438 = vmatpush1.msra.mxu0 0.0
    %1439 = vmatprep.subr.mxu0 0.0
    %1440 = vmatpush1.msra.mxu0 0.0
    %1441 = vmatprep.subr.mxu0 0.0
    %1442 = vmatpush1.msra.mxu0 0.0
    %1443 = vmatprep.subr.mxu0 0.0
    %1444 = vmatpush1.msra.mxu0 0.0
    %1445 = vmatprep.subr.mxu0 0.0
    %1446 = vmatpush1.msra.mxu0 0.0
    %1447 = vmatprep.subr.mxu0 0.0
    %1448 = vmatpush1.msra.mxu0 0.0
    %1449 = vmatprep.subr.mxu0 0.0
    %1450 = vmatpush1.msra.mxu0 0.0
    %1451 = vmatprep.subr.mxu0 0.0
    %1452 = vmatpush1.msra.mxu0 0.0
    %1453 = vmatprep.subr.mxu0 0.0
    %1454 = vmatpush1.msra.mxu0 0.0
    %1455 = vmatprep.subr.mxu0 0.0
    %1456 = vmatpush1.msra.mxu0 0.0
    %1457 = vmatprep.subr.mxu0 0.0
    %1458 = vmatpush1.msra.mxu0 0.0
    %1459 = vmatprep.subr.mxu0 0.0
    %1460 = vmatpush1.msra.mxu0 0.0
    %1461 = vmatprep.subr.mxu0 0.0
    %1462 = vmatpush1.msra.mxu0 0.0
    %1463 = vmatprep.subr.mxu0 0.0
    %1464 = vmatpush1.msra.mxu0 0.0
    %1465 = vmatprep.subr.mxu0 0.0
    %1466 = vmatpush1.msra.mxu0 0.0
    %1467 = vmatprep.subr.mxu0 0.0
    %1468 = vmatpush1.msra.mxu0 0.0
    %1469 = vmatprep.subr.mxu0 0.0
    %1470 = vmatpush1.msra.mxu0 0.0
    %1471 = vmatprep.subr.mxu0 0.0
    %1472 = vmatpush1.msra.mxu0 0.0
    %1473 = vmatprep.subr.mxu0 0.0
    %1474 = vmatpush1.msra.mxu0 0.0
    %1475 = vmatprep.subr.mxu0 0.0
    %1476 = vmatpush1.msra.mxu0 0.0
    %1477 = vmatprep.subr.mxu0 0.0
    %1478 = vmatpush1.msra.mxu0 0.0
    %1479 = vmatprep.subr.mxu0 0.0
    %1480 = vmatpush1.msra.mxu0 0.0
    %1481 = vmatprep.mubr.f32.mxu0 0.0
    %1482 = vmatmul.mubr.f32.gmra.mrb[0].mxu0 %v1345
    %v1483 = vpop.f32.mrb[0].mxu0
    %v1484 = vadd.f32 %v104, %v1483
    %v1485 = vpop.f32.mrb[0].mxu0
    %v1486 = vadd.f32 %v108, %v1485
    %1487 = vdwg.mxu0
    %v1488 = vxor.u32 %v1414, 2147483648
    %v1489 = vxor.u32 %v1484, 2147483648
    %v1490 = vmul.f32 %v1488, 1.442695
    %v1491 = vpow.pop %v1490
    %v1492 = vmul.f32 %v1489, 1.442695
    %v1493 = vpow.pop %v1492
    %v1494 = vadd.f32 %v1491, 1.0
    %v1495 = vadd.f32 %v1493, 1.0
    %v1496 = vrcp.pop %v1494
    %v1497 = vmul.f32 1.0, %v1496
    %v1498 = vrcp.pop %v1495
    %v1499 = vmul.f32 1.0, %v1498
    %v1500 = vtanh.pop %v1486
    %v1501 = vmul.f32 %v1497, %v1500
    %v1502 = vtanh.pop %v1501
    %v1503 = vmul.f32 %v1499, %v1502
    %v1504 = vlaneseq
    %v1505 = vand.u32 %v1504, 127
    %vm1506 = vcmp.ge.s32.totalorder %v1505, 64
    %v1507 = vsel %vm1506, 1, 0
    %v1508 = vcvt.s32.f32 %v1507
    %v1509 = vmul.f32 %v1503, %v1508
    %v1510 = vmul.f32 %v1501, %v1508
    %v1511 = vld [vmem:[#allocation6] sm:$0xff]
    %v1512 = vld [vmem:[#allocation6 + $0x8] sm:$0xff]
    %v1513 = vld [vmem:[#allocation6 + $0x10] sm:$0xff]
    %v1514 = vld [vmem:[#allocation6 + $0x18] sm:$0xff]
    %v1515 = vld [vmem:[#allocation6 + $0x20] sm:$0xff]
    %v1516 = vld [vmem:[#allocation6 + $0x28] sm:$0xff]
    %v1517 = vld [vmem:[#allocation6 + $0x30] sm:$0xff]
    %v1518 = vld [vmem:[#allocation6 + $0x38] sm:$0xff]
    %v1519 = vld [vmem:[#allocation6 + $0x40] sm:$0xff]
    %v1520 = vld [vmem:[#allocation6 + $0x48] sm:$0xff]
    %v1521 = vld [vmem:[#allocation6 + $0x50] sm:$0xff]
    %v1522 = vld [vmem:[#allocation6 + $0x58] sm:$0xff]
    %v1523 = vld [vmem:[#allocation6 + $0x60] sm:$0xff]
    %v1524 = vld [vmem:[#allocation6 + $0x68] sm:$0xff]
    %v1525 = vld [vmem:[#allocation6 + $0x70] sm:$0xff]
    %v1526 = vld [vmem:[#allocation6 + $0x78] sm:$0xff]
    %v1527 = vld [vmem:[#allocation6 + $0x80] sm:$0xff]
    %v1528 = vld [vmem:[#allocation6 + $0x88] sm:$0xff]
    %v1529 = vld [vmem:[#allocation6 + $0x90] sm:$0xff]
    %v1530 = vld [vmem:[#allocation6 + $0x98] sm:$0xff]
    %v1531 = vld [vmem:[#allocation6 + $0xa0] sm:$0xff]
    %v1532 = vld [vmem:[#allocation6 + $0xa8] sm:$0xff]
    %v1533 = vld [vmem:[#allocation6 + $0xb0] sm:$0xff]
    %v1534 = vld [vmem:[#allocation6 + $0xb8] sm:$0xff]
    %v1535 = vld [vmem:[#allocation6 + $0xc0] sm:$0xff]
    %v1536 = vld [vmem:[#allocation6 + $0xc8] sm:$0xff]
    %v1537 = vld [vmem:[#allocation6 + $0xd0] sm:$0xff]
    %v1538 = vld [vmem:[#allocation6 + $0xd8] sm:$0xff]
    %v1539 = vld [vmem:[#allocation6 + $0xe0] sm:$0xff]
    %v1540 = vld [vmem:[#allocation6 + $0xe8] sm:$0xff]
    %v1541 = vld [vmem:[#allocation6 + $0xf0] sm:$0xff]
    %v1542 = vld [vmem:[#allocation6 + $0xf8] sm:$0xff]
    %v1543 = vld [vmem:[#allocation6 + $0x100] sm:$0xff]
    %v1544 = vld [vmem:[#allocation6 + $0x108] sm:$0xff]
    %v1545 = vld [vmem:[#allocation6 + $0x110] sm:$0xff]
    %v1546 = vld [vmem:[#allocation6 + $0x118] sm:$0xff]
    %v1547 = vld [vmem:[#allocation6 + $0x120] sm:$0xff]
    %v1548 = vld [vmem:[#allocation6 + $0x128] sm:$0xff]
    %v1549 = vld [vmem:[#allocation6 + $0x130] sm:$0xff]
    %v1550 = vld [vmem:[#allocation6 + $0x138] sm:$0xff]
    %v1551 = vld [vmem:[#allocation6 + $0x140] sm:$0xff]
    %v1552 = vld [vmem:[#allocation6 + $0x148] sm:$0xff]
    %v1553 = vld [vmem:[#allocation6 + $0x150] sm:$0xff]
    %v1554 = vld [vmem:[#allocation6 + $0x158] sm:$0xff]
    %v1555 = vld [vmem:[#allocation6 + $0x160] sm:$0xff]
    %v1556 = vld [vmem:[#allocation6 + $0x168] sm:$0xff]
    %v1557 = vld [vmem:[#allocation6 + $0x170] sm:$0xff]
    %v1558 = vld [vmem:[#allocation6 + $0x178] sm:$0xff]
    %v1559 = vld [vmem:[#allocation6 + $0x180] sm:$0xff]
    %v1560 = vld [vmem:[#allocation6 + $0x188] sm:$0xff]
    %v1561 = vld [vmem:[#allocation6 + $0x190] sm:$0xff]
    %v1562 = vld [vmem:[#allocation6 + $0x198] sm:$0xff]
    %v1563 = vld [vmem:[#allocation6 + $0x1a0] sm:$0xff]
    %v1564 = vld [vmem:[#allocation6 + $0x1a8] sm:$0xff]
    %v1565 = vld [vmem:[#allocation6 + $0x1b0] sm:$0xff]
    %v1566 = vld [vmem:[#allocation6 + $0x1b8] sm:$0xff]
    %v1567 = vld [vmem:[#allocation6 + $0x1c0] sm:$0xff]
    %v1568 = vld [vmem:[#allocation6 + $0x1c8] sm:$0xff]
    %v1569 = vld [vmem:[#allocation6 + $0x1d0] sm:$0xff]
    %v1570 = vld [vmem:[#allocation6 + $0x1d8] sm:$0xff]
    %v1571 = vld [vmem:[#allocation6 + $0x1e0] sm:$0xff]
    %v1572 = vld [vmem:[#allocation6 + $0x1e8] sm:$0xff]
    %v1573 = vld [vmem:[#allocation6 + $0x1f0] sm:$0xff]
    %v1574 = vld [vmem:[#allocation6 + $0x1f8] sm:$0xff]
    %v1575 = vld [vmem:[#allocation2] sm:$0xff]
    %v1577 = vcombine.high %v1575, %v1575
    %v1579 = vunpack.c.l.s4 1983009808
    %v1580 = vunpack.c.0.s8 %v1579
    %v1581 = vlaneseq
    %v1582 = vshrl.u32 %v1581, 7
    %v1583 = vsub.s32 %v1580, %v1582
    %v1584 = vrot.slane %v1575, %v1583
    %v1586 = vunpack.c.l.s4 1983009808
    %v1587 = vunpack.c.0.s8 %v1586
    %v1588 = vlaneseq
    %v1589 = vshrl.u32 %v1588, 7
    %v1590 = vsub.s32 %v1587, %v1589
    %v1591 = vrot.slane %v1577, %v1590
    %v1592 = vcombine.high %v1584, %v1584
    %v1593 = vcombine.high %v1591, %v1591
    %1598 = vmatprep.subr.mxu0 %v1512
    %1599 = vmatpush1.msra.mxu0 %v1511
    %1600 = vmatprep.subr.mxu0 %v1516
    %1601 = vmatpush1.msra.mxu0 %v1515
    %1602 = vmatprep.subr.mxu0 %v1520
    %1603 = vmatpush1.msra.mxu0 %v1519
    %1604 = vmatprep.subr.mxu0 %v1524
    %1605 = vmatpush1.msra.mxu0 %v1523
    %1606 = vmatprep.subr.mxu0 %v1528
    %1607 = vmatpush1.msra.mxu0 %v1527
    %1608 = vmatprep.subr.mxu0 %v1532
    %1609 = vmatpush1.msra.mxu0 %v1531
    %1610 = vmatprep.subr.mxu0 %v1536
    %1611 = vmatpush1.msra.mxu0 %v1535
    %1612 = vmatprep.subr.mxu0 %v1540
    %1613 = vmatpush1.msra.mxu0 %v1539
    %1614 = vmatprep.subr.mxu0 %v1544
    %1615 = vmatpush1.msra.mxu0 %v1543
    %1616 = vmatprep.subr.mxu0 %v1548
    %1617 = vmatpush1.msra.mxu0 %v1547
    %1618 = vmatprep.subr.mxu0 %v1552
    %1619 = vmatpush1.msra.mxu0 %v1551
    %1620 = vmatprep.subr.mxu0 %v1556
    %1621 = vmatpush1.msra.mxu0 %v1555
    %1622 = vmatprep.subr.mxu0 %v1560
    %1623 = vmatpush1.msra.mxu0 %v1559
    %1624 = vmatprep.subr.mxu0 %v1564
    %1625 = vmatpush1.msra.mxu0 %v1563
    %1626 = vmatprep.subr.mxu0 %v1568
    %1627 = vmatpush1.msra.mxu0 %v1567
    %1628 = vmatprep.subr.mxu0 %v1572
    %1629 = vmatpush1.msra.mxu0 %v1571
    %1630 = vmatprep.subr.mxu0 0.0
    %1631 = vmatpush1.msra.mxu0 0.0
    %1632 = vmatprep.subr.mxu0 0.0
    %1633 = vmatpush1.msra.mxu0 0.0
    %1634 = vmatprep.subr.mxu0 0.0
    %1635 = vmatpush1.msra.mxu0 0.0
    %1636 = vmatprep.subr.mxu0 0.0
    %1637 = vmatpush1.msra.mxu0 0.0
    %1638 = vmatprep.subr.mxu0 0.0
    %1639 = vmatpush1.msra.mxu0 0.0
    %1640 = vmatprep.subr.mxu0 0.0
    %1641 = vmatpush1.msra.mxu0 0.0
    %1642 = vmatprep.subr.mxu0 0.0
    %1643 = vmatpush1.msra.mxu0 0.0
    %1644 = vmatprep.subr.mxu0 0.0
    %1645 = vmatpush1.msra.mxu0 0.0
    %1646 = vmatprep.subr.mxu0 0.0
    %1647 = vmatpush1.msra.mxu0 0.0
    %1648 = vmatprep.subr.mxu0 0.0
    %1649 = vmatpush1.msra.mxu0 0.0
    %1650 = vmatprep.subr.mxu0 0.0
    %1651 = vmatpush1.msra.mxu0 0.0
    %1652 = vmatprep.subr.mxu0 0.0
    %1653 = vmatpush1.msra.mxu0 0.0
    %1654 = vmatprep.subr.mxu0 0.0
    %1655 = vmatpush1.msra.mxu0 0.0
    %1656 = vmatprep.subr.mxu0 0.0
    %1657 = vmatpush1.msra.mxu0 0.0
    %1658 = vmatprep.subr.mxu0 0.0
    %1659 = vmatpush1.msra.mxu0 0.0
    %1660 = vmatprep.subr.mxu0 0.0
    %1661 = vmatpush1.msra.mxu0 0.0
    %1662 = vmatprep.mubr.f32.mxu0 0.0
    %1663 = vmatmul.mubr.f32.gmra.mrb[0].mxu0 %v1509
    %v1664 = vpop.f32.mrb[0].mxu0
    %v1665 = vadd.f32 %v1584, %v1664
    %v1666 = vpop.f32.mrb[0].mxu0
    %v1667 = vadd.f32 %v1592, %v1666
    %1668 = vdwg.mxu0
    %1669 = vmatprep.subr.mxu0 %v1514
    %1670 = vmatpush1.msra.mxu0 %v1513
    %1671 = vmatprep.subr.mxu0 %v1518
    %1672 = vmatpush1.msra.mxu0 %v1517
    %1673 = vmatprep.subr.mxu0 %v1522
    %1674 = vmatpush1.msra.mxu0 %v1521
    %1675 = vmatprep.subr.mxu0 %v1526
    %1676 = vmatpush1.msra.mxu0 %v1525
    %1677 = vmatprep.subr.mxu0 %v1530
    %1678 = vmatpush1.msra.mxu0 %v1529
    %1679 = vmatprep.subr.mxu0 %v1534
    %1680 = vmatpush1.msra.mxu0 %v1533
    %1681 = vmatprep.subr.mxu0 %v1538
    %1682 = vmatpush1.msra.mxu0 %v1537
    %1683 = vmatprep.subr.mxu0 %v1542
    %1684 = vmatpush1.msra.mxu0 %v1541
    %1685 = vmatprep.subr.mxu0 %v1546
    %1686 = vmatpush1.msra.mxu0 %v1545
    %1687 = vmatprep.subr.mxu0 %v1550
    %1688 = vmatpush1.msra.mxu0 %v1549
    %1689 = vmatprep.subr.mxu0 %v1554
    %1690 = vmatpush1.msra.mxu0 %v1553
    %1691 = vmatprep.subr.mxu0 %v1558
    %1692 = vmatpush1.msra.mxu0 %v1557
    %1693 = vmatprep.subr.mxu0 %v1562
    %1694 = vmatpush1.msra.mxu0 %v1561
    %1695 = vmatprep.subr.mxu0 %v1566
    %1696 = vmatpush1.msra.mxu0 %v1565
    %1697 = vmatprep.subr.mxu0 %v1570
    %1698 = vmatpush1.msra.mxu0 %v1569
    %1699 = vmatprep.subr.mxu0 %v1574
    %1700 = vmatpush1.msra.mxu0 %v1573
    %1701 = vmatprep.subr.mxu0 0.0
    %1702 = vmatpush1.msra.mxu0 0.0
    %1703 = vmatprep.subr.mxu0 0.0
    %1704 = vmatpush1.msra.mxu0 0.0
    %1705 = vmatprep.subr.mxu0 0.0
    %1706 = vmatpush1.msra.mxu0 0.0
    %1707 = vmatprep.subr.mxu0 0.0
    %1708 = vmatpush1.msra.mxu0 0.0
    %1709 = vmatprep.subr.mxu0 0.0
    %1710 = vmatpush1.msra.mxu0 0.0
    %1711 = vmatprep.subr.mxu0 0.0
    %1712 = vmatpush1.msra.mxu0 0.0
    %1713 = vmatprep.subr.mxu0 0.0
    %1714 = vmatpush1.msra.mxu0 0.0
    %1715 = vmatprep.subr.mxu0 0.0
    %1716 = vmatpush1.msra.mxu0 0.0
    %1717 = vmatprep.subr.mxu0 0.0
    %1718 = vmatpush1.msra.mxu0 0.0
    %1719 = vmatprep.subr.mxu0 0.0
    %1720 = vmatpush1.msra.mxu0 0.0
    %1721 = vmatprep.subr.mxu0 0.0
    %1722 = vmatpush1.msra.mxu0 0.0
    %1723 = vmatprep.subr.mxu0 0.0
    %1724 = vmatpush1.msra.mxu0 0.0
    %1725 = vmatprep.subr.mxu0 0.0
    %1726 = vmatpush1.msra.mxu0 0.0
    %1727 = vmatprep.subr.mxu0 0.0
    %1728 = vmatpush1.msra.mxu0 0.0
    %1729 = vmatprep.subr.mxu0 0.0
    %1730 = vmatpush1.msra.mxu0 0.0
    %1731 = vmatprep.subr.mxu0 0.0
    %1732 = vmatpush1.msra.mxu0 0.0
    %1733 = vmatprep.mubr.f32.mxu0 0.0
    %1734 = vmatmul.mubr.f32.gmra.mrb[0].mxu0 %v1509
    %v1735 = vpop.f32.mrb[0].mxu0
    %v1736 = vadd.f32 %v1591, %v1735
    %v1737 = vpop.f32.mrb[0].mxu0
    %v1738 = vadd.f32 %v1593, %v1737
    %1739 = vdwg.mxu0
    %v1740 = vxor.u32 %v1665, 2147483648
    %v1741 = vxor.u32 %v1667, 2147483648
    %v1742 = vxor.u32 %v1736, 2147483648
    %v1743 = vmul.f32 %v1740, 1.442695
    %v1744 = vpow.pop %v1743
    %v1745 = vmul.f32 %v1741, 1.442695
    %v1746 = vpow.pop %v1745
    %v1747 = vmul.f32 %v1742, 1.442695
    %v1748 = vpow.pop %v1747
    %v1749 = vadd.f32 %v1744, 1.0
    %v1750 = vadd.f32 %v1746, 1.0
    %v1751 = vadd.f32 %v1748, 1.0
    %v1752 = vrcp.pop %v1749
    %v1753 = vmul.f32 1.0, %v1752
    %v1754 = vrcp.pop %v1750
    %v1755 = vmul.f32 1.0, %v1754
    %v1756 = vrcp.pop %v1751
    %v1757 = vmul.f32 1.0, %v1756
    %v1758 = vtanh.pop %v1738
    %v1759 = vmul.f32 %v1755, %v1510
    %v1760 = vmul.f32 %v1753, %v1758
    %v1761 = vadd.f32 %v1759, %v1760
    %v1762 = vtanh.pop %v1761
    %v1763 = vmul.f32 %v1757, %v1762
    %v1764 = vld [vmem:[%s466] sm:$0xff]
    %v1766 = vcombine.high %v1764, %v1764
    %v1768 = vunpack.c.l.s4 1983009808
    %v1769 = vunpack.c.0.s8 %v1768
    %v1770 = vlaneseq
    %v1771 = vshrl.u32 %v1770, 7
    %v1772 = vsub.s32 %v1769, %v1771
    %v1773 = vrot.slane %v1764, %v1772
    %v1775 = vunpack.c.l.s4 1983009808
    %v1776 = vunpack.c.0.s8 %v1775
    %v1777 = vlaneseq
    %v1778 = vshrl.u32 %v1777, 7
    %v1779 = vsub.s32 %v1776, %v1778
    %v1780 = vrot.slane %v1766, %v1779
    %v1781 = vcombine.high %v1773, %v1773
    %v1782 = vcombine.high %v1780, %v1780
    %1787 = vmatprep.subr.mxu0 %v1512
    %1788 = vmatpush1.msra.mxu0 %v1511
    %1789 = vmatprep.subr.mxu0 %v1516
    %1790 = vmatpush1.msra.mxu0 %v1515
    %1791 = vmatprep.subr.mxu0 %v1520
    %1792 = vmatpush1.msra.mxu0 %v1519
    %1793 = vmatprep.subr.mxu0 %v1524
    %1794 = vmatpush1.msra.mxu0 %v1523
    %1795 = vmatprep.subr.mxu0 %v1528
    %1796 = vmatpush1.msra.mxu0 %v1527
    %1797 = vmatprep.subr.mxu0 %v1532
    %1798 = vmatpush1.msra.mxu0 %v1531
    %1799 = vmatprep.subr.mxu0 %v1536
    %1800 = vmatpush1.msra.mxu0 %v1535
    %1801 = vmatprep.subr.mxu0 %v1540
    %1802 = vmatpush1.msra.mxu0 %v1539
    %1803 = vmatprep.subr.mxu0 %v1544
    %1804 = vmatpush1.msra.mxu0 %v1543
    %1805 = vmatprep.subr.mxu0 %v1548
    %1806 = vmatpush1.msra.mxu0 %v1547
    %1807 = vmatprep.subr.mxu0 %v1552
    %1808 = vmatpush1.msra.mxu0 %v1551
    %1809 = vmatprep.subr.mxu0 %v1556
    %1810 = vmatpush1.msra.mxu0 %v1555
    %1811 = vmatprep.subr.mxu0 %v1560
    %1812 = vmatpush1.msra.mxu0 %v1559
    %1813 = vmatprep.subr.mxu0 %v1564
    %1814 = vmatpush1.msra.mxu0 %v1563
    %1815 = vmatprep.subr.mxu0 %v1568
    %1816 = vmatpush1.msra.mxu0 %v1567
    %1817 = vmatprep.subr.mxu0 %v1572
    %1818 = vmatpush1.msra.mxu0 %v1571
    %1819 = vmatprep.subr.mxu0 0.0
    %1820 = vmatpush1.msra.mxu0 0.0
    %1821 = vmatprep.subr.mxu0 0.0
    %1822 = vmatpush1.msra.mxu0 0.0
    %1823 = vmatprep.subr.mxu0 0.0
    %1824 = vmatpush1.msra.mxu0 0.0
    %1825 = vmatprep.subr.mxu0 0.0
    %1826 = vmatpush1.msra.mxu0 0.0
    %1827 = vmatprep.subr.mxu0 0.0
    %1828 = vmatpush1.msra.mxu0 0.0
    %1829 = vmatprep.subr.mxu0 0.0
    %1830 = vmatpush1.msra.mxu0 0.0
    %1831 = vmatprep.subr.mxu0 0.0
    %1832 = vmatpush1.msra.mxu0 0.0
    %1833 = vmatprep.subr.mxu0 0.0
    %1834 = vmatpush1.msra.mxu0 0.0
    %1835 = vmatprep.subr.mxu0 0.0
    %1836 = vmatpush1.msra.mxu0 0.0
    %1837 = vmatprep.subr.mxu0 0.0
    %1838 = vmatpush1.msra.mxu0 0.0
    %1839 = vmatprep.subr.mxu0 0.0
    %1840 = vmatpush1.msra.mxu0 0.0
    %1841 = vmatprep.subr.mxu0 0.0
    %1842 = vmatpush1.msra.mxu0 0.0
    %1843 = vmatprep.subr.mxu0 0.0
    %1844 = vmatpush1.msra.mxu0 0.0
    %1845 = vmatprep.subr.mxu0 0.0
    %1846 = vmatpush1.msra.mxu0 0.0
    %1847 = vmatprep.subr.mxu0 0.0
    %1848 = vmatpush1.msra.mxu0 0.0
    %1849 = vmatprep.subr.mxu0 0.0
    %1850 = vmatpush1.msra.mxu0 0.0
    %1851 = vmatprep.mubr.f32.mxu0 0.0
    %1852 = vmatmul.mubr.f32.gmra.mrb[0].mxu0 %v1763
    %v1853 = vpop.f32.mrb[0].mxu0
    %v1854 = vadd.f32 %v1773, %v1853
    %v1855 = vpop.f32.mrb[0].mxu0
    %v1856 = vadd.f32 %v1781, %v1855
    %1857 = vdwg.mxu0
    %1858 = vmatprep.subr.mxu0 %v1514
    %1859 = vmatpush1.msra.mxu0 %v1513
    %1860 = vmatprep.subr.mxu0 %v1518
    %1861 = vmatpush1.msra.mxu0 %v1517
    %1862 = vmatprep.subr.mxu0 %v1522
    %1863 = vmatpush1.msra.mxu0 %v1521
    %1864 = vmatprep.subr.mxu0 %v1526
    %1865 = vmatpush1.msra.mxu0 %v1525
    %1866 = vmatprep.subr.mxu0 %v1530
    %1867 = vmatpush1.msra.mxu0 %v1529
    %1868 = vmatprep.subr.mxu0 %v1534
    %1869 = vmatpush1.msra.mxu0 %v1533
    %1870 = vmatprep.subr.mxu0 %v1538
    %1871 = vmatpush1.msra.mxu0 %v1537
    %1872 = vmatprep.subr.mxu0 %v1542
    %1873 = vmatpush1.msra.mxu0 %v1541
    %1874 = vmatprep.subr.mxu0 %v1546
    %1875 = vmatpush1.msra.mxu0 %v1545
    %1876 = vmatprep.subr.mxu0 %v1550
    %1877 = vmatpush1.msra.mxu0 %v1549
    %1878 = vmatprep.subr.mxu0 %v1554
    %1879 = vmatpush1.msra.mxu0 %v1553
    %1880 = vmatprep.subr.mxu0 %v1558
    %1881 = vmatpush1.msra.mxu0 %v1557
    %1882 = vmatprep.subr.mxu0 %v1562
    %1883 = vmatpush1.msra.mxu0 %v1561
    %1884 = vmatprep.subr.mxu0 %v1566
    %1885 = vmatpush1.msra.mxu0 %v1565
    %1886 = vmatprep.subr.mxu0 %v1570
    %1887 = vmatpush1.msra.mxu0 %v1569
    %1888 = vmatprep.subr.mxu0 %v1574
    %1889 = vmatpush1.msra.mxu0 %v1573
    %1890 = vmatprep.subr.mxu0 0.0
    %1891 = vmatpush1.msra.mxu0 0.0
    %1892 = vmatprep.subr.mxu0 0.0
    %1893 = vmatpush1.msra.mxu0 0.0
    %1894 = vmatprep.subr.mxu0 0.0
    %1895 = vmatpush1.msra.mxu0 0.0
    %1896 = vmatprep.subr.mxu0 0.0
    %1897 = vmatpush1.msra.mxu0 0.0
    %1898 = vmatprep.subr.mxu0 0.0
    %1899 = vmatpush1.msra.mxu0 0.0
    %1900 = vmatprep.subr.mxu0 0.0
    %1901 = vmatpush1.msra.mxu0 0.0
    %1902 = vmatprep.subr.mxu0 0.0
    %1903 = vmatpush1.msra.mxu0 0.0
    %1904 = vmatprep.subr.mxu0 0.0
    %1905 = vmatpush1.msra.mxu0 0.0
    %1906 = vmatprep.subr.mxu0 0.0
    %1907 = vmatpush1.msra.mxu0 0.0
    %1908 = vmatprep.subr.mxu0 0.0
    %1909 = vmatpush1.msra.mxu0 0.0
    %1910 = vmatprep.subr.mxu0 0.0
    %1911 = vmatpush1.msra.mxu0 0.0
    %1912 = vmatprep.subr.mxu0 0.0
    %1913 = vmatpush1.msra.mxu0 0.0
    %1914 = vmatprep.subr.mxu0 0.0
    %1915 = vmatpush1.msra.mxu0 0.0
    %1916 = vmatprep.subr.mxu0 0.0
    %1917 = vmatpush1.msra.mxu0 0.0
    %1918 = vmatprep.subr.mxu0 0.0
    %1919 = vmatpush1.msra.mxu0 0.0
    %1920 = vmatprep.subr.mxu0 0.0
    %1921 = vmatpush1.msra.mxu0 0.0
    %1922 = vmatprep.mubr.f32.mxu0 0.0
    %1923 = vmatmul.mubr.f32.gmra.mrb[0].mxu0 %v1763
    %v1924 = vpop.f32.mrb[0].mxu0
    %v1925 = vadd.f32 %v1780, %v1924
    %v1926 = vpop.f32.mrb[0].mxu0
    %v1927 = vadd.f32 %v1782, %v1926
    %1928 = vdwg.mxu0
    %v1929 = vxor.u32 %v1854, 2147483648
    %v1930 = vxor.u32 %v1856, 2147483648
    %v1931 = vxor.u32 %v1925, 2147483648
    %v1932 = vmul.f32 %v1929, 1.442695
    %v1933 = vpow.pop %v1932
    %v1934 = vmul.f32 %v1930, 1.442695
    %v1935 = vpow.pop %v1934
    %v1936 = vmul.f32 %v1931, 1.442695
    %v1937 = vpow.pop %v1936
    %v1938 = vadd.f32 %v1933, 1.0
    %v1939 = vadd.f32 %v1935, 1.0
    %v1940 = vadd.f32 %v1937, 1.0
    %v1941 = vrcp.pop %v1938
    %v1942 = vmul.f32 1.0, %v1941
    %v1943 = vrcp.pop %v1939
    %v1944 = vmul.f32 1.0, %v1943
    %v1945 = vrcp.pop %v1940
    %v1946 = vmul.f32 1.0, %v1945
    %v1947 = vtanh.pop %v1927
    %v1948 = vmul.f32 %v1944, %v1761
    %v1949 = vmul.f32 %v1942, %v1947
    %v1950 = vadd.f32 %v1948, %v1949
    %v1951 = vtanh.pop %v1950
    %v1952 = vmul.f32 %v1946, %v1951
    %v1953 = vld [vmem:[%s637] sm:$0xff]
    %v1955 = vcombine.high %v1953, %v1953
    %v1957 = vunpack.c.l.s4 1983009808
    %v1958 = vunpack.c.0.s8 %v1957
    %v1959 = vlaneseq
    %v1960 = vshrl.u32 %v1959, 7
    %v1961 = vsub.s32 %v1958, %v1960
    %v1962 = vrot.slane %v1953, %v1961
    %v1964 = vunpack.c.l.s4 1983009808
    %v1965 = vunpack.c.0.s8 %v1964
    %v1966 = vlaneseq
    %v1967 = vshrl.u32 %v1966, 7
    %v1968 = vsub.s32 %v1965, %v1967
    %v1969 = vrot.slane %v1955, %v1968
    %v1970 = vcombine.high %v1962, %v1962
    %v1971 = vcombine.high %v1969, %v1969
    %1976 = vmatprep.subr.mxu0 %v1512
    %1977 = vmatpush1.msra.mxu0 %v1511
    %1978 = vmatprep.subr.mxu0 %v1516
    %1979 = vmatpush1.msra.mxu0 %v1515
    %1980 = vmatprep.subr.mxu0 %v1520
    %1981 = vmatpush1.msra.mxu0 %v1519
    %1982 = vmatprep.subr.mxu0 %v1524
    %1983 = vmatpush1.msra.mxu0 %v1523
    %1984 = vmatprep.subr.mxu0 %v1528
    %1985 = vmatpush1.msra.mxu0 %v1527
    %1986 = vmatprep.subr.mxu0 %v1532
    %1987 = vmatpush1.msra.mxu0 %v1531
    %1988 = vmatprep.subr.mxu0 %v1536
    %1989 = vmatpush1.msra.mxu0 %v1535
    %1990 = vmatprep.subr.mxu0 %v1540
    %1991 = vmatpush1.msra.mxu0 %v1539
    %1992 = vmatprep.subr.mxu0 %v1544
    %1993 = vmatpush1.msra.mxu0 %v1543
    %1994 = vmatprep.subr.mxu0 %v1548
    %1995 = vmatpush1.msra.mxu0 %v1547
    %1996 = vmatprep.subr.mxu0 %v1552
    %1997 = vmatpush1.msra.mxu0 %v1551
    %1998 = vmatprep.subr.mxu0 %v1556
    %1999 = vmatpush1.msra.mxu0 %v1555
    %2000 = vmatprep.subr.mxu0 %v1560
    %2001 = vmatpush1.msra.mxu0 %v1559
    %2002 = vmatprep.subr.mxu0 %v1564
    %2003 = vmatpush1.msra.mxu0 %v1563
    %2004 = vmatprep.subr.mxu0 %v1568
    %2005 = vmatpush1.msra.mxu0 %v1567
    %2006 = vmatprep.subr.mxu0 %v1572
    %2007 = vmatpush1.msra.mxu0 %v1571
    %2008 = vmatprep.subr.mxu0 0.0
    %2009 = vmatpush1.msra.mxu0 0.0
    %2010 = vmatprep.subr.mxu0 0.0
    %2011 = vmatpush1.msra.mxu0 0.0
    %2012 = vmatprep.subr.mxu0 0.0
    %2013 = vmatpush1.msra.mxu0 0.0
    %2014 = vmatprep.subr.mxu0 0.0
    %2015 = vmatpush1.msra.mxu0 0.0
    %2016 = vmatprep.subr.mxu0 0.0
    %2017 = vmatpush1.msra.mxu0 0.0
    %2018 = vmatprep.subr.mxu0 0.0
    %2019 = vmatpush1.msra.mxu0 0.0
    %2020 = vmatprep.subr.mxu0 0.0
    %2021 = vmatpush1.msra.mxu0 0.0
    %2022 = vmatprep.subr.mxu0 0.0
    %2023 = vmatpush1.msra.mxu0 0.0
    %2024 = vmatprep.subr.mxu0 0.0
    %2025 = vmatpush1.msra.mxu0 0.0
    %2026 = vmatprep.subr.mxu0 0.0
    %2027 = vmatpush1.msra.mxu0 0.0
    %2028 = vmatprep.subr.mxu0 0.0
    %2029 = vmatpush1.msra.mxu0 0.0
    %2030 = vmatprep.subr.mxu0 0.0
    %2031 = vmatpush1.msra.mxu0 0.0
    %2032 = vmatprep.subr.mxu0 0.0
    %2033 = vmatpush1.msra.mxu0 0.0
    %2034 = vmatprep.subr.mxu0 0.0
    %2035 = vmatpush1.msra.mxu0 0.0
    %2036 = vmatprep.subr.mxu0 0.0
    %2037 = vmatpush1.msra.mxu0 0.0
    %2038 = vmatprep.subr.mxu0 0.0
    %2039 = vmatpush1.msra.mxu0 0.0
    %2040 = vmatprep.mubr.f32.mxu0 0.0
    %2041 = vmatmul.mubr.f32.gmra.mrb[0].mxu0 %v1952
    %v2042 = vpop.f32.mrb[0].mxu0
    %v2043 = vadd.f32 %v1962, %v2042
    %v2044 = vpop.f32.mrb[0].mxu0
    %v2045 = vadd.f32 %v1970, %v2044
    %2046 = vdwg.mxu0
    %2047 = vmatprep.subr.mxu0 %v1514
    %2048 = vmatpush1.msra.mxu0 %v1513
    %2049 = vmatprep.subr.mxu0 %v1518
    %2050 = vmatpush1.msra.mxu0 %v1517
    %2051 = vmatprep.subr.mxu0 %v1522
    %2052 = vmatpush1.msra.mxu0 %v1521
    %2053 = vmatprep.subr.mxu0 %v1526
    %2054 = vmatpush1.msra.mxu0 %v1525
    %2055 = vmatprep.subr.mxu0 %v1530
    %2056 = vmatpush1.msra.mxu0 %v1529
    %2057 = vmatprep.subr.mxu0 %v1534
    %2058 = vmatpush1.msra.mxu0 %v1533
    %2059 = vmatprep.subr.mxu0 %v1538
    %2060 = vmatpush1.msra.mxu0 %v1537
    %2061 = vmatprep.subr.mxu0 %v1542
    %2062 = vmatpush1.msra.mxu0 %v1541
    %2063 = vmatprep.subr.mxu0 %v1546
    %2064 = vmatpush1.msra.mxu0 %v1545
    %2065 = vmatprep.subr.mxu0 %v1550
    %2066 = vmatpush1.msra.mxu0 %v1549
    %2067 = vmatprep.subr.mxu0 %v1554
    %2068 = vmatpush1.msra.mxu0 %v1553
    %2069 = vmatprep.subr.mxu0 %v1558
    %2070 = vmatpush1.msra.mxu0 %v1557
    %2071 = vmatprep.subr.mxu0 %v1562
    %2072 = vmatpush1.msra.mxu0 %v1561
    %2073 = vmatprep.subr.mxu0 %v1566
    %2074 = vmatpush1.msra.mxu0 %v1565
    %2075 = vmatprep.subr.mxu0 %v1570
    %2076 = vmatpush1.msra.mxu0 %v1569
    %2077 = vmatprep.subr.mxu0 %v1574
    %2078 = vmatpush1.msra.mxu0 %v1573
    %2079 = vmatprep.subr.mxu0 0.0
    %2080 = vmatpush1.msra.mxu0 0.0
    %2081 = vmatprep.subr.mxu0 0.0
    %2082 = vmatpush1.msra.mxu0 0.0
    %2083 = vmatprep.subr.mxu0 0.0
    %2084 = vmatpush1.msra.mxu0 0.0
    %2085 = vmatprep.subr.mxu0 0.0
    %2086 = vmatpush1.msra.mxu0 0.0
    %2087 = vmatprep.subr.mxu0 0.0
    %2088 = vmatpush1.msra.mxu0 0.0
    %2089 = vmatprep.subr.mxu0 0.0
    %2090 = vmatpush1.msra.mxu0 0.0
    %2091 = vmatprep.subr.mxu0 0.0
    %2092 = vmatpush1.msra.mxu0 0.0
    %2093 = vmatprep.subr.mxu0 0.0
    %2094 = vmatpush1.msra.mxu0 0.0
    %2095 = vmatprep.subr.mxu0 0.0
    %2096 = vmatpush1.msra.mxu0 0.0
    %2097 = vmatprep.subr.mxu0 0.0
    %2098 = vmatpush1.msra.mxu0 0.0
    %2099 = vmatprep.subr.mxu0 0.0
    %2100 = vmatpush1.msra.mxu0 0.0
    %2101 = vmatprep.subr.mxu0 0.0
    %2102 = vmatpush1.msra.mxu0 0.0
    %2103 = vmatprep.subr.mxu0 0.0
    %2104 = vmatpush1.msra.mxu0 0.0
    %2105 = vmatprep.subr.mxu0 0.0
    %2106 = vmatpush1.msra.mxu0 0.0
    %2107 = vmatprep.subr.mxu0 0.0
    %2108 = vmatpush1.msra.mxu0 0.0
    %2109 = vmatprep.subr.mxu0 0.0
    %2110 = vmatpush1.msra.mxu0 0.0
    %2111 = vmatprep.mubr.f32.mxu0 0.0
    %2112 = vmatmul.mubr.f32.gmra.mrb[0].mxu0 %v1952
    %v2113 = vpop.f32.mrb[0].mxu0
    %v2114 = vadd.f32 %v1969, %v2113
    %v2115 = vpop.f32.mrb[0].mxu0
    %v2116 = vadd.f32 %v1971, %v2115
    %2117 = vdwg.mxu0
    %v2118 = vxor.u32 %v2043, 2147483648
    %v2119 = vxor.u32 %v2045, 2147483648
    %v2120 = vxor.u32 %v2114, 2147483648
    %v2121 = vmul.f32 %v2118, 1.442695
    %v2122 = vpow.pop %v2121
    %v2123 = vmul.f32 %v2119, 1.442695
    %v2124 = vpow.pop %v2123
    %v2125 = vmul.f32 %v2120, 1.442695
    %v2126 = vpow.pop %v2125
    %v2127 = vadd.f32 %v2122, 1.0
    %v2128 = vadd.f32 %v2124, 1.0
    %v2129 = vadd.f32 %v2126, 1.0
    %v2130 = vrcp.pop %v2127
    %v2131 = vmul.f32 1.0, %v2130
    %v2132 = vrcp.pop %v2128
    %v2133 = vmul.f32 1.0, %v2132
    %v2134 = vrcp.pop %v2129
    %v2135 = vmul.f32 1.0, %v2134
    %v2136 = vtanh.pop %v2116
    %v2137 = vmul.f32 %v2133, %v1950
    %v2138 = vmul.f32 %v2131, %v2136
    %v2139 = vadd.f32 %v2137, %v2138
    %v2140 = vtanh.pop %v2139
    %v2141 = vmul.f32 %v2135, %v2140
    %v2142 = vld [vmem:[%s808] sm:$0xff]
    %v2144 = vcombine.high %v2142, %v2142
    %v2146 = vunpack.c.l.s4 1983009808
    %v2147 = vunpack.c.0.s8 %v2146
    %v2148 = vlaneseq
    %v2149 = vshrl.u32 %v2148, 7
    %v2150 = vsub.s32 %v2147, %v2149
    %v2151 = vrot.slane %v2142, %v2150
    %v2153 = vunpack.c.l.s4 1983009808
    %v2154 = vunpack.c.0.s8 %v2153
    %v2155 = vlaneseq
    %v2156 = vshrl.u32 %v2155, 7
    %v2157 = vsub.s32 %v2154, %v2156
    %v2158 = vrot.slane %v2144, %v2157
    %v2159 = vcombine.high %v2151, %v2151
    %v2160 = vcombine.high %v2158, %v2158
    %2165 = vmatprep.subr.mxu0 %v1512
    %2166 = vmatpush1.msra.mxu0 %v1511
    %2167 = vmatprep.subr.mxu0 %v1516
    %2168 = vmatpush1.msra.mxu0 %v1515
    %2169 = vmatprep.subr.mxu0 %v1520
    %2170 = vmatpush1.msra.mxu0 %v1519
    %2171 = vmatprep.subr.mxu0 %v1524
    %2172 = vmatpush1.msra.mxu0 %v1523
    %2173 = vmatprep.subr.mxu0 %v1528
    %2174 = vmatpush1.msra.mxu0 %v1527
    %2175 = vmatprep.subr.mxu0 %v1532
    %2176 = vmatpush1.msra.mxu0 %v1531
    %2177 = vmatprep.subr.mxu0 %v1536
    %2178 = vmatpush1.msra.mxu0 %v1535
    %2179 = vmatprep.subr.mxu0 %v1540
    %2180 = vmatpush1.msra.mxu0 %v1539
    %2181 = vmatprep.subr.mxu0 %v1544
    %2182 = vmatpush1.msra.mxu0 %v1543
    %2183 = vmatprep.subr.mxu0 %v1548
    %2184 = vmatpush1.msra.mxu0 %v1547
    %2185 = vmatprep.subr.mxu0 %v1552
    %2186 = vmatpush1.msra.mxu0 %v1551
    %2187 = vmatprep.subr.mxu0 %v1556
    %2188 = vmatpush1.msra.mxu0 %v1555
    %2189 = vmatprep.subr.mxu0 %v1560
    %2190 = vmatpush1.msra.mxu0 %v1559
    %2191 = vmatprep.subr.mxu0 %v1564
    %2192 = vmatpush1.msra.mxu0 %v1563
    %2193 = vmatprep.subr.mxu0 %v1568
    %2194 = vmatpush1.msra.mxu0 %v1567
    %2195 = vmatprep.subr.mxu0 %v1572
    %2196 = vmatpush1.msra.mxu0 %v1571
    %2197 = vmatprep.subr.mxu0 0.0
    %2198 = vmatpush1.msra.mxu0 0.0
    %2199 = vmatprep.subr.mxu0 0.0
    %2200 = vmatpush1.msra.mxu0 0.0
    %2201 = vmatprep.subr.mxu0 0.0
    %2202 = vmatpush1.msra.mxu0 0.0
    %2203 = vmatprep.subr.mxu0 0.0
    %2204 = vmatpush1.msra.mxu0 0.0
    %2205 = vmatprep.subr.mxu0 0.0
    %2206 = vmatpush1.msra.mxu0 0.0
    %2207 = vmatprep.subr.mxu0 0.0
    %2208 = vmatpush1.msra.mxu0 0.0
    %2209 = vmatprep.subr.mxu0 0.0
    %2210 = vmatpush1.msra.mxu0 0.0
    %2211 = vmatprep.subr.mxu0 0.0
    %2212 = vmatpush1.msra.mxu0 0.0
    %2213 = vmatprep.subr.mxu0 0.0
    %2214 = vmatpush1.msra.mxu0 0.0
    %2215 = vmatprep.subr.mxu0 0.0
    %2216 = vmatpush1.msra.mxu0 0.0
    %2217 = vmatprep.subr.mxu0 0.0
    %2218 = vmatpush1.msra.mxu0 0.0
    %2219 = vmatprep.subr.mxu0 0.0
    %2220 = vmatpush1.msra.mxu0 0.0
    %2221 = vmatprep.subr.mxu0 0.0
    %2222 = vmatpush1.msra.mxu0 0.0
    %2223 = vmatprep.subr.mxu0 0.0
    %2224 = vmatpush1.msra.mxu0 0.0
    %2225 = vmatprep.subr.mxu0 0.0
    %2226 = vmatpush1.msra.mxu0 0.0
    %2227 = vmatprep.subr.mxu0 0.0
    %2228 = vmatpush1.msra.mxu0 0.0
    %2229 = vmatprep.mubr.f32.mxu0 0.0
    %2230 = vmatmul.mubr.f32.gmra.mrb[0].mxu0 %v2141
    %v2231 = vpop.f32.mrb[0].mxu0
    %v2232 = vadd.f32 %v2151, %v2231
    %v2233 = vpop.f32.mrb[0].mxu0
    %v2234 = vadd.f32 %v2159, %v2233
    %2235 = vdwg.mxu0
    %2236 = vmatprep.subr.mxu0 %v1514
    %2237 = vmatpush1.msra.mxu0 %v1513
    %2238 = vmatprep.subr.mxu0 %v1518
    %2239 = vmatpush1.msra.mxu0 %v1517
    %2240 = vmatprep.subr.mxu0 %v1522
    %2241 = vmatpush1.msra.mxu0 %v1521
    %2242 = vmatprep.subr.mxu0 %v1526
    %2243 = vmatpush1.msra.mxu0 %v1525
    %2244 = vmatprep.subr.mxu0 %v1530
    %2245 = vmatpush1.msra.mxu0 %v1529
    %2246 = vmatprep.subr.mxu0 %v1534
    %2247 = vmatpush1.msra.mxu0 %v1533
    %2248 = vmatprep.subr.mxu0 %v1538
    %2249 = vmatpush1.msra.mxu0 %v1537
    %2250 = vmatprep.subr.mxu0 %v1542
    %2251 = vmatpush1.msra.mxu0 %v1541
    %2252 = vmatprep.subr.mxu0 %v1546
    %2253 = vmatpush1.msra.mxu0 %v1545
    %2254 = vmatprep.subr.mxu0 %v1550
    %2255 = vmatpush1.msra.mxu0 %v1549
    %2256 = vmatprep.subr.mxu0 %v1554
    %2257 = vmatpush1.msra.mxu0 %v1553
    %2258 = vmatprep.subr.mxu0 %v1558
    %2259 = vmatpush1.msra.mxu0 %v1557
    %2260 = vmatprep.subr.mxu0 %v1562
    %2261 = vmatpush1.msra.mxu0 %v1561
    %2262 = vmatprep.subr.mxu0 %v1566
    %2263 = vmatpush1.msra.mxu0 %v1565
    %2264 = vmatprep.subr.mxu0 %v1570
    %2265 = vmatpush1.msra.mxu0 %v1569
    %2266 = vmatprep.subr.mxu0 %v1574
    %2267 = vmatpush1.msra.mxu0 %v1573
    %2268 = vmatprep.subr.mxu0 0.0
    %2269 = vmatpush1.msra.mxu0 0.0
    %2270 = vmatprep.subr.mxu0 0.0
    %2271 = vmatpush1.msra.mxu0 0.0
    %2272 = vmatprep.subr.mxu0 0.0
    %2273 = vmatpush1.msra.mxu0 0.0
    %2274 = vmatprep.subr.mxu0 0.0
    %2275 = vmatpush1.msra.mxu0 0.0
    %2276 = vmatprep.subr.mxu0 0.0
    %2277 = vmatpush1.msra.mxu0 0.0
    %2278 = vmatprep.subr.mxu0 0.0
    %2279 = vmatpush1.msra.mxu0 0.0
    %2280 = vmatprep.subr.mxu0 0.0
    %2281 = vmatpush1.msra.mxu0 0.0
    %2282 = vmatprep.subr.mxu0 0.0
    %2283 = vmatpush1.msra.mxu0 0.0
    %2284 = vmatprep.subr.mxu0 0.0
    %2285 = vmatpush1.msra.mxu0 0.0
    %2286 = vmatprep.subr.mxu0 0.0
    %2287 = vmatpush1.msra.mxu0 0.0
    %2288 = vmatprep.subr.mxu0 0.0
    %2289 = vmatpush1.msra.mxu0 0.0
    %2290 = vmatprep.subr.mxu0 0.0
    %2291 = vmatpush1.msra.mxu0 0.0
    %2292 = vmatprep.subr.mxu0 0.0
    %2293 = vmatpush1.msra.mxu0 0.0
    %2294 = vmatprep.subr.mxu0 0.0
    %2295 = vmatpush1.msra.mxu0 0.0
    %2296 = vmatprep.subr.mxu0 0.0
    %2297 = vmatpush1.msra.mxu0 0.0
    %2298 = vmatprep.subr.mxu0 0.0
    %2299 = vmatpush1.msra.mxu0 0.0
    %2300 = vmatprep.mubr.f32.mxu0 0.0
    %2301 = vmatmul.mubr.f32.gmra.mrb[0].mxu0 %v2141
    %v2302 = vpop.f32.mrb[0].mxu0
    %v2303 = vadd.f32 %v2158, %v2302
    %v2304 = vpop.f32.mrb[0].mxu0
    %v2305 = vadd.f32 %v2160, %v2304
    %2306 = vdwg.mxu0
    %v2307 = vxor.u32 %v2232, 2147483648
    %v2308 = vxor.u32 %v2234, 2147483648
    %v2309 = vxor.u32 %v2303, 2147483648
    %v2310 = vmul.f32 %v2307, 1.442695
    %v2311 = vpow.pop %v2310
    %v2312 = vmul.f32 %v2308, 1.442695
    %v2313 = vpow.pop %v2312
    %v2314 = vmul.f32 %v2309, 1.442695
    %v2315 = vpow.pop %v2314
    %v2316 = vadd.f32 %v2311, 1.0
    %v2317 = vadd.f32 %v2313, 1.0
    %v2318 = vadd.f32 %v2315, 1.0
    %v2319 = vrcp.pop %v2316
    %v2320 = vmul.f32 1.0, %v2319
    %v2321 = vrcp.pop %v2317
    %v2322 = vmul.f32 1.0, %v2321
    %v2323 = vrcp.pop %v2318
    %v2324 = vmul.f32 1.0, %v2323
    %v2325 = vtanh.pop %v2305
    %v2326 = vmul.f32 %v2322, %v2139
    %v2327 = vmul.f32 %v2320, %v2325
    %v2328 = vadd.f32 %v2326, %v2327
    %v2329 = vtanh.pop %v2328
    %v2330 = vmul.f32 %v2324, %v2329
    %v2331 = vld [vmem:[%s979] sm:$0xff]
    %v2333 = vcombine.high %v2331, %v2331
    %v2335 = vunpack.c.l.s4 1983009808
    %v2336 = vunpack.c.0.s8 %v2335
    %v2337 = vlaneseq
    %v2338 = vshrl.u32 %v2337, 7
    %v2339 = vsub.s32 %v2336, %v2338
    %v2340 = vrot.slane %v2331, %v2339
    %v2342 = vunpack.c.l.s4 1983009808
    %v2343 = vunpack.c.0.s8 %v2342
    %v2344 = vlaneseq
    %v2345 = vshrl.u32 %v2344, 7
    %v2346 = vsub.s32 %v2343, %v2345
    %v2347 = vrot.slane %v2333, %v2346
    %v2348 = vcombine.high %v2340, %v2340
    %v2349 = vcombine.high %v2347, %v2347
    %2354 = vmatprep.subr.mxu0 %v1512
    %2355 = vmatpush1.msra.mxu0 %v1511
    %2356 = vmatprep.subr.mxu0 %v1516
    %2357 = vmatpush1.msra.mxu0 %v1515
    %2358 = vmatprep.subr.mxu0 %v1520
    %2359 = vmatpush1.msra.mxu0 %v1519
    %2360 = vmatprep.subr.mxu0 %v1524
    %2361 = vmatpush1.msra.mxu0 %v1523
    %2362 = vmatprep.subr.mxu0 %v1528
    %2363 = vmatpush1.msra.mxu0 %v1527
    %2364 = vmatprep.subr.mxu0 %v1532
    %2365 = vmatpush1.msra.mxu0 %v1531
    %2366 = vmatprep.subr.mxu0 %v1536
    %2367 = vmatpush1.msra.mxu0 %v1535
    %2368 = vmatprep.subr.mxu0 %v1540
    %2369 = vmatpush1.msra.mxu0 %v1539
    %2370 = vmatprep.subr.mxu0 %v1544
    %2371 = vmatpush1.msra.mxu0 %v1543
    %2372 = vmatprep.subr.mxu0 %v1548
    %2373 = vmatpush1.msra.mxu0 %v1547
    %2374 = vmatprep.subr.mxu0 %v1552
    %2375 = vmatpush1.msra.mxu0 %v1551
    %2376 = vmatprep.subr.mxu0 %v1556
    %2377 = vmatpush1.msra.mxu0 %v1555
    %2378 = vmatprep.subr.mxu0 %v1560
    %2379 = vmatpush1.msra.mxu0 %v1559
    %2380 = vmatprep.subr.mxu0 %v1564
    %2381 = vmatpush1.msra.mxu0 %v1563
    %2382 = vmatprep.subr.mxu0 %v1568
    %2383 = vmatpush1.msra.mxu0 %v1567
    %2384 = vmatprep.subr.mxu0 %v1572
    %2385 = vmatpush1.msra.mxu0 %v1571
    %2386 = vmatprep.subr.mxu0 0.0
    %2387 = vmatpush1.msra.mxu0 0.0
    %2388 = vmatprep.subr.mxu0 0.0
    %2389 = vmatpush1.msra.mxu0 0.0
    %2390 = vmatprep.subr.mxu0 0.0
    %2391 = vmatpush1.msra.mxu0 0.0
    %2392 = vmatprep.subr.mxu0 0.0
    %2393 = vmatpush1.msra.mxu0 0.0
    %2394 = vmatprep.subr.mxu0 0.0
    %2395 = vmatpush1.msra.mxu0 0.0
    %2396 = vmatprep.subr.mxu0 0.0
    %2397 = vmatpush1.msra.mxu0 0.0
    %2398 = vmatprep.subr.mxu0 0.0
    %2399 = vmatpush1.msra.mxu0 0.0
    %2400 = vmatprep.subr.mxu0 0.0
    %2401 = vmatpush1.msra.mxu0 0.0
    %2402 = vmatprep.subr.mxu0 0.0
    %2403 = vmatpush1.msra.mxu0 0.0
    %2404 = vmatprep.subr.mxu0 0.0
    %2405 = vmatpush1.msra.mxu0 0.0
    %2406 = vmatprep.subr.mxu0 0.0
    %2407 = vmatpush1.msra.mxu0 0.0
    %2408 = vmatprep.subr.mxu0 0.0
    %2409 = vmatpush1.msra.mxu0 0.0
    %2410 = vmatprep.subr.mxu0 0.0
    %2411 = vmatpush1.msra.mxu0 0.0
    %2412 = vmatprep.subr.mxu0 0.0
    %2413 = vmatpush1.msra.mxu0 0.0
    %2414 = vmatprep.subr.mxu0 0.0
    %2415 = vmatpush1.msra.mxu0 0.0
    %2416 = vmatprep.subr.mxu0 0.0
    %2417 = vmatpush1.msra.mxu0 0.0
    %2418 = vmatprep.mubr.f32.mxu0 0.0
    %2419 = vmatmul.mubr.f32.gmra.mrb[0].mxu0 %v2330
    %v2420 = vpop.f32.mrb[0].mxu0
    %v2421 = vadd.f32 %v2340, %v2420
    %v2422 = vpop.f32.mrb[0].mxu0
    %v2423 = vadd.f32 %v2348, %v2422
    %2424 = vdwg.mxu0
    %2425 = vmatprep.subr.mxu0 %v1514
    %2426 = vmatpush1.msra.mxu0 %v1513
    %2427 = vmatprep.subr.mxu0 %v1518
    %2428 = vmatpush1.msra.mxu0 %v1517
    %2429 = vmatprep.subr.mxu0 %v1522
    %2430 = vmatpush1.msra.mxu0 %v1521
    %2431 = vmatprep.subr.mxu0 %v1526
    %2432 = vmatpush1.msra.mxu0 %v1525
    %2433 = vmatprep.subr.mxu0 %v1530
    %2434 = vmatpush1.msra.mxu0 %v1529
    %2435 = vmatprep.subr.mxu0 %v1534
    %2436 = vmatpush1.msra.mxu0 %v1533
    %2437 = vmatprep.subr.mxu0 %v1538
    %2438 = vmatpush1.msra.mxu0 %v1537
    %2439 = vmatprep.subr.mxu0 %v1542
    %2440 = vmatpush1.msra.mxu0 %v1541
    %2441 = vmatprep.subr.mxu0 %v1546
    %2442 = vmatpush1.msra.mxu0 %v1545
    %2443 = vmatprep.subr.mxu0 %v1550
    %2444 = vmatpush1.msra.mxu0 %v1549
    %2445 = vmatprep.subr.mxu0 %v1554
    %2446 = vmatpush1.msra.mxu0 %v1553
    %2447 = vmatprep.subr.mxu0 %v1558
    %2448 = vmatpush1.msra.mxu0 %v1557
    %2449 = vmatprep.subr.mxu0 %v1562
    %2450 = vmatpush1.msra.mxu0 %v1561
    %2451 = vmatprep.subr.mxu0 %v1566
    %2452 = vmatpush1.msra.mxu0 %v1565
    %2453 = vmatprep.subr.mxu0 %v1570
    %2454 = vmatpush1.msra.mxu0 %v1569
    %2455 = vmatprep.subr.mxu0 %v1574
    %2456 = vmatpush1.msra.mxu0 %v1573
    %2457 = vmatprep.subr.mxu0 0.0
    %2458 = vmatpush1.msra.mxu0 0.0
    %2459 = vmatprep.subr.mxu0 0.0
    %2460 = vmatpush1.msra.mxu0 0.0
    %2461 = vmatprep.subr.mxu0 0.0
    %2462 = vmatpush1.msra.mxu0 0.0
    %2463 = vmatprep.subr.mxu0 0.0
    %2464 = vmatpush1.msra.mxu0 0.0
    %2465 = vmatprep.subr.mxu0 0.0
    %2466 = vmatpush1.msra.mxu0 0.0
    %2467 = vmatprep.subr.mxu0 0.0
    %2468 = vmatpush1.msra.mxu0 0.0
    %2469 = vmatprep.subr.mxu0 0.0
    %2470 = vmatpush1.msra.mxu0 0.0
    %2471 = vmatprep.subr.mxu0 0.0
    %2472 = vmatpush1.msra.mxu0 0.0
    %2473 = vmatprep.subr.mxu0 0.0
    %2474 = vmatpush1.msra.mxu0 0.0
    %2475 = vmatprep.subr.mxu0 0.0
    %2476 = vmatpush1.msra.mxu0 0.0
    %2477 = vmatprep.subr.mxu0 0.0
    %2478 = vmatpush1.msra.mxu0 0.0
    %2479 = vmatprep.subr.mxu0 0.0
    %2480 = vmatpush1.msra.mxu0 0.0
    %2481 = vmatprep.subr.mxu0 0.0
    %2482 = vmatpush1.msra.mxu0 0.0
    %2483 = vmatprep.subr.mxu0 0.0
    %2484 = vmatpush1.msra.mxu0 0.0
    %2485 = vmatprep.subr.mxu0 0.0
    %2486 = vmatpush1.msra.mxu0 0.0
    %2487 = vmatprep.subr.mxu0 0.0
    %2488 = vmatpush1.msra.mxu0 0.0
    %2489 = vmatprep.mubr.f32.mxu0 0.0
    %2490 = vmatmul.mubr.f32.gmra.mrb[0].mxu0 %v2330
    %v2491 = vpop.f32.mrb[0].mxu0
    %v2492 = vadd.f32 %v2347, %v2491
    %v2493 = vpop.f32.mrb[0].mxu0
    %v2494 = vadd.f32 %v2349, %v2493
    %2495 = vdwg.mxu0
    %v2496 = vxor.u32 %v2421, 2147483648
    %v2497 = vxor.u32 %v2423, 2147483648
    %v2498 = vxor.u32 %v2492, 2147483648
    %v2499 = vmul.f32 %v2496, 1.442695
    %v2500 = vpow.pop %v2499
    %v2501 = vmul.f32 %v2497, 1.442695
    %v2502 = vpow.pop %v2501
    %v2503 = vmul.f32 %v2498, 1.442695
    %v2504 = vpow.pop %v2503
    %v2505 = vadd.f32 %v2500, 1.0
    %v2506 = vadd.f32 %v2502, 1.0
    %v2507 = vadd.f32 %v2504, 1.0
    %v2508 = vrcp.pop %v2505
    %v2509 = vmul.f32 1.0, %v2508
    %v2510 = vrcp.pop %v2506
    %v2511 = vmul.f32 1.0, %v2510
    %v2512 = vrcp.pop %v2507
    %v2513 = vmul.f32 1.0, %v2512
    %v2514 = vtanh.pop %v2494
    %v2515 = vmul.f32 %v2511, %v2328
    %v2516 = vmul.f32 %v2509, %v2514
    %v2517 = vadd.f32 %v2515, %v2516
    %v2518 = vtanh.pop %v2517
    %v2519 = vmul.f32 %v2513, %v2518
    %v2520 = vld [vmem:[%s1150] sm:$0xff]
    %v2522 = vcombine.high %v2520, %v2520
    %v2524 = vunpack.c.l.s4 1983009808
    %v2525 = vunpack.c.0.s8 %v2524
    %v2526 = vlaneseq
    %v2527 = vshrl.u32 %v2526, 7
    %v2528 = vsub.s32 %v2525, %v2527
    %v2529 = vrot.slane %v2520, %v2528
    %v2531 = vunpack.c.l.s4 1983009808
    %v2532 = vunpack.c.0.s8 %v2531
    %v2533 = vlaneseq
    %v2534 = vshrl.u32 %v2533, 7
    %v2535 = vsub.s32 %v2532, %v2534
    %v2536 = vrot.slane %v2522, %v2535
    %v2537 = vcombine.high %v2529, %v2529
    %v2538 = vcombine.high %v2536, %v2536
    %2543 = vmatprep.subr.mxu0 %v1512
    %2544 = vmatpush1.msra.mxu0 %v1511
    %2545 = vmatprep.subr.mxu0 %v1516
    %2546 = vmatpush1.msra.mxu0 %v1515
    %2547 = vmatprep.subr.mxu0 %v1520
    %2548 = vmatpush1.msra.mxu0 %v1519
    %2549 = vmatprep.subr.mxu0 %v1524
    %2550 = vmatpush1.msra.mxu0 %v1523
    %2551 = vmatprep.subr.mxu0 %v1528
    %2552 = vmatpush1.msra.mxu0 %v1527
    %2553 = vmatprep.subr.mxu0 %v1532
    %2554 = vmatpush1.msra.mxu0 %v1531
    %2555 = vmatprep.subr.mxu0 %v1536
    %2556 = vmatpush1.msra.mxu0 %v1535
    %2557 = vmatprep.subr.mxu0 %v1540
    %2558 = vmatpush1.msra.mxu0 %v1539
    %2559 = vmatprep.subr.mxu0 %v1544
    %2560 = vmatpush1.msra.mxu0 %v1543
    %2561 = vmatprep.subr.mxu0 %v1548
    %2562 = vmatpush1.msra.mxu0 %v1547
    %2563 = vmatprep.subr.mxu0 %v1552
    %2564 = vmatpush1.msra.mxu0 %v1551
    %2565 = vmatprep.subr.mxu0 %v1556
    %2566 = vmatpush1.msra.mxu0 %v1555
    %2567 = vmatprep.subr.mxu0 %v1560
    %2568 = vmatpush1.msra.mxu0 %v1559
    %2569 = vmatprep.subr.mxu0 %v1564
    %2570 = vmatpush1.msra.mxu0 %v1563
    %2571 = vmatprep.subr.mxu0 %v1568
    %2572 = vmatpush1.msra.mxu0 %v1567
    %2573 = vmatprep.subr.mxu0 %v1572
    %2574 = vmatpush1.msra.mxu0 %v1571
    %2575 = vmatprep.subr.mxu0 0.0
    %2576 = vmatpush1.msra.mxu0 0.0
    %2577 = vmatprep.subr.mxu0 0.0
    %2578 = vmatpush1.msra.mxu0 0.0
    %2579 = vmatprep.subr.mxu0 0.0
    %2580 = vmatpush1.msra.mxu0 0.0
    %2581 = vmatprep.subr.mxu0 0.0
    %2582 = vmatpush1.msra.mxu0 0.0
    %2583 = vmatprep.subr.mxu0 0.0
    %2584 = vmatpush1.msra.mxu0 0.0
    %2585 = vmatprep.subr.mxu0 0.0
    %2586 = vmatpush1.msra.mxu0 0.0
    %2587 = vmatprep.subr.mxu0 0.0
    %2588 = vmatpush1.msra.mxu0 0.0
    %2589 = vmatprep.subr.mxu0 0.0
    %2590 = vmatpush1.msra.mxu0 0.0
    %2591 = vmatprep.subr.mxu0 0.0
    %2592 = vmatpush1.msra.mxu0 0.0
    %2593 = vmatprep.subr.mxu0 0.0
    %2594 = vmatpush1.msra.mxu0 0.0
    %2595 = vmatprep.subr.mxu0 0.0
    %2596 = vmatpush1.msra.mxu0 0.0
    %2597 = vmatprep.subr.mxu0 0.0
    %2598 = vmatpush1.msra.mxu0 0.0
    %2599 = vmatprep.subr.mxu0 0.0
    %2600 = vmatpush1.msra.mxu0 0.0
    %2601 = vmatprep.subr.mxu0 0.0
    %2602 = vmatpush1.msra.mxu0 0.0
    %2603 = vmatprep.subr.mxu0 0.0
    %2604 = vmatpush1.msra.mxu0 0.0
    %2605 = vmatprep.subr.mxu0 0.0
    %2606 = vmatpush1.msra.mxu0 0.0
    %2607 = vmatprep.mubr.f32.mxu0 0.0
    %2608 = vmatmul.mubr.f32.gmra.mrb[0].mxu0 %v2519
    %v2609 = vpop.f32.mrb[0].mxu0
    %v2610 = vadd.f32 %v2529, %v2609
    %v2611 = vpop.f32.mrb[0].mxu0
    %v2612 = vadd.f32 %v2537, %v2611
    %2613 = vdwg.mxu0
    %2614 = vmatprep.subr.mxu0 %v1514
    %2615 = vmatpush1.msra.mxu0 %v1513
    %2616 = vmatprep.subr.mxu0 %v1518
    %2617 = vmatpush1.msra.mxu0 %v1517
    %2618 = vmatprep.subr.mxu0 %v1522
    %2619 = vmatpush1.msra.mxu0 %v1521
    %2620 = vmatprep.subr.mxu0 %v1526
    %2621 = vmatpush1.msra.mxu0 %v1525
    %2622 = vmatprep.subr.mxu0 %v1530
    %2623 = vmatpush1.msra.mxu0 %v1529
    %2624 = vmatprep.subr.mxu0 %v1534
    %2625 = vmatpush1.msra.mxu0 %v1533
    %2626 = vmatprep.subr.mxu0 %v1538
    %2627 = vmatpush1.msra.mxu0 %v1537
    %2628 = vmatprep.subr.mxu0 %v1542
    %2629 = vmatpush1.msra.mxu0 %v1541
    %2630 = vmatprep.subr.mxu0 %v1546
    %2631 = vmatpush1.msra.mxu0 %v1545
    %2632 = vmatprep.subr.mxu0 %v1550
    %2633 = vmatpush1.msra.mxu0 %v1549
    %2634 = vmatprep.subr.mxu0 %v1554
    %2635 = vmatpush1.msra.mxu0 %v1553
    %2636 = vmatprep.subr.mxu0 %v1558
    %2637 = vmatpush1.msra.mxu0 %v1557
    %2638 = vmatprep.subr.mxu0 %v1562
    %2639 = vmatpush1.msra.mxu0 %v1561
    %2640 = vmatprep.subr.mxu0 %v1566
    %2641 = vmatpush1.msra.mxu0 %v1565
    %2642 = vmatprep.subr.mxu0 %v1570
    %2643 = vmatpush1.msra.mxu0 %v1569
    %2644 = vmatprep.subr.mxu0 %v1574
    %2645 = vmatpush1.msra.mxu0 %v1573
    %2646 = vmatprep.subr.mxu0 0.0
    %2647 = vmatpush1.msra.mxu0 0.0
    %2648 = vmatprep.subr.mxu0 0.0
    %2649 = vmatpush1.msra.mxu0 0.0
    %2650 = vmatprep.subr.mxu0 0.0
    %2651 = vmatpush1.msra.mxu0 0.0
    %2652 = vmatprep.subr.mxu0 0.0
    %2653 = vmatpush1.msra.mxu0 0.0
    %2654 = vmatprep.subr.mxu0 0.0
    %2655 = vmatpush1.msra.mxu0 0.0
    %2656 = vmatprep.subr.mxu0 0.0
    %2657 = vmatpush1.msra.mxu0 0.0
    %2658 = vmatprep.subr.mxu0 0.0
    %2659 = vmatpush1.msra.mxu0 0.0
    %2660 = vmatprep.subr.mxu0 0.0
    %2661 = vmatpush1.msra.mxu0 0.0
    %2662 = vmatprep.subr.mxu0 0.0
    %2663 = vmatpush1.msra.mxu0 0.0
    %2664 = vmatprep.subr.mxu0 0.0
    %2665 = vmatpush1.msra.mxu0 0.0
    %2666 = vmatprep.subr.mxu0 0.0
    %2667 = vmatpush1.msra.mxu0 0.0
    %2668 = vmatprep.subr.mxu0 0.0
    %2669 = vmatpush1.msra.mxu0 0.0
    %2670 = vmatprep.subr.mxu0 0.0
    %2671 = vmatpush1.msra.mxu0 0.0
    %2672 = vmatprep.subr.mxu0 0.0
    %2673 = vmatpush1.msra.mxu0 0.0
    %2674 = vmatprep.subr.mxu0 0.0
    %2675 = vmatpush1.msra.mxu0 0.0
    %2676 = vmatprep.subr.mxu0 0.0
    %2677 = vmatpush1.msra.mxu0 0.0
    %2678 = vmatprep.mubr.f32.mxu0 0.0
    %2679 = vmatmul.mubr.f32.gmra.mrb[0].mxu0 %v2519
    %v2680 = vpop.f32.mrb[0].mxu0
    %v2681 = vadd.f32 %v2536, %v2680
    %v2682 = vpop.f32.mrb[0].mxu0
    %v2683 = vadd.f32 %v2538, %v2682
    %2684 = vdwg.mxu0
    %v2685 = vxor.u32 %v2610, 2147483648
    %v2686 = vxor.u32 %v2612, 2147483648
    %v2687 = vxor.u32 %v2681, 2147483648
    %v2688 = vmul.f32 %v2685, 1.442695
    %v2689 = vpow.pop %v2688
    %v2690 = vmul.f32 %v2686, 1.442695
    %v2691 = vpow.pop %v2690
    %v2692 = vmul.f32 %v2687, 1.442695
    %v2693 = vpow.pop %v2692
    %v2694 = vadd.f32 %v2689, 1.0
    %v2695 = vadd.f32 %v2691, 1.0
    %v2696 = vadd.f32 %v2693, 1.0
    %v2697 = vrcp.pop %v2694
    %v2698 = vmul.f32 1.0, %v2697
    %v2699 = vrcp.pop %v2695
    %v2700 = vmul.f32 1.0, %v2699
    %v2701 = vrcp.pop %v2696
    %v2702 = vmul.f32 1.0, %v2701
    %v2703 = vtanh.pop %v2683
    %v2704 = vmul.f32 %v2700, %v2517
    %v2705 = vmul.f32 %v2698, %v2703
    %v2706 = vadd.f32 %v2704, %v2705
    %v2707 = vtanh.pop %v2706
    %v2708 = vmul.f32 %v2702, %v2707
    %v2709 = vld [vmem:[%s1321] sm:$0xff]
    %v2711 = vcombine.high %v2709, %v2709
    %v2713 = vunpack.c.l.s4 1983009808
    %v2714 = vunpack.c.0.s8 %v2713
    %v2715 = vlaneseq
    %v2716 = vshrl.u32 %v2715, 7
    %v2717 = vsub.s32 %v2714, %v2716
    %v2718 = vrot.slane %v2709, %v2717
    %v2720 = vunpack.c.l.s4 1983009808
    %v2721 = vunpack.c.0.s8 %v2720
    %v2722 = vlaneseq
    %v2723 = vshrl.u32 %v2722, 7
    %v2724 = vsub.s32 %v2721, %v2723
    %v2725 = vrot.slane %v2711, %v2724
    %v2726 = vcombine.high %v2718, %v2718
    %v2727 = vcombine.high %v2725, %v2725
    %2732 = vmatprep.subr.mxu0 %v1512
    %2733 = vmatpush1.msra.mxu0 %v1511
    %2734 = vmatprep.subr.mxu0 %v1516
    %2735 = vmatpush1.msra.mxu0 %v1515
    %2736 = vmatprep.subr.mxu0 %v1520
    %2737 = vmatpush1.msra.mxu0 %v1519
    %2738 = vmatprep.subr.mxu0 %v1524
    %2739 = vmatpush1.msra.mxu0 %v1523
    %2740 = vmatprep.subr.mxu0 %v1528
    %2741 = vmatpush1.msra.mxu0 %v1527
    %2742 = vmatprep.subr.mxu0 %v1532
    %2743 = vmatpush1.msra.mxu0 %v1531
    %2744 = vmatprep.subr.mxu0 %v1536
    %2745 = vmatpush1.msra.mxu0 %v1535
    %2746 = vmatprep.subr.mxu0 %v1540
    %2747 = vmatpush1.msra.mxu0 %v1539
    %2748 = vmatprep.subr.mxu0 %v1544
    %2749 = vmatpush1.msra.mxu0 %v1543
    %2750 = vmatprep.subr.mxu0 %v1548
    %2751 = vmatpush1.msra.mxu0 %v1547
    %2752 = vmatprep.subr.mxu0 %v1552
    %2753 = vmatpush1.msra.mxu0 %v1551
    %2754 = vmatprep.subr.mxu0 %v1556
    %2755 = vmatpush1.msra.mxu0 %v1555
    %2756 = vmatprep.subr.mxu0 %v1560
    %2757 = vmatpush1.msra.mxu0 %v1559
    %2758 = vmatprep.subr.mxu0 %v1564
    %2759 = vmatpush1.msra.mxu0 %v1563
    %2760 = vmatprep.subr.mxu0 %v1568
    %2761 = vmatpush1.msra.mxu0 %v1567
    %2762 = vmatprep.subr.mxu0 %v1572
    %2763 = vmatpush1.msra.mxu0 %v1571
    %2764 = vmatprep.subr.mxu0 0.0
    %2765 = vmatpush1.msra.mxu0 0.0
    %2766 = vmatprep.subr.mxu0 0.0
    %2767 = vmatpush1.msra.mxu0 0.0
    %2768 = vmatprep.subr.mxu0 0.0
    %2769 = vmatpush1.msra.mxu0 0.0
    %2770 = vmatprep.subr.mxu0 0.0
    %2771 = vmatpush1.msra.mxu0 0.0
    %2772 = vmatprep.subr.mxu0 0.0
    %2773 = vmatpush1.msra.mxu0 0.0
    %2774 = vmatprep.subr.mxu0 0.0
    %2775 = vmatpush1.msra.mxu0 0.0
    %2776 = vmatprep.subr.mxu0 0.0
    %2777 = vmatpush1.msra.mxu0 0.0
    %2778 = vmatprep.subr.mxu0 0.0
    %2779 = vmatpush1.msra.mxu0 0.0
    %2780 = vmatprep.subr.mxu0 0.0
    %2781 = vmatpush1.msra.mxu0 0.0
    %2782 = vmatprep.subr.mxu0 0.0
    %2783 = vmatpush1.msra.mxu0 0.0
    %2784 = vmatprep.subr.mxu0 0.0
    %2785 = vmatpush1.msra.mxu0 0.0
    %2786 = vmatprep.subr.mxu0 0.0
    %2787 = vmatpush1.msra.mxu0 0.0
    %2788 = vmatprep.subr.mxu0 0.0
    %2789 = vmatpush1.msra.mxu0 0.0
    %2790 = vmatprep.subr.mxu0 0.0
    %2791 = vmatpush1.msra.mxu0 0.0
    %2792 = vmatprep.subr.mxu0 0.0
    %2793 = vmatpush1.msra.mxu0 0.0
    %2794 = vmatprep.subr.mxu0 0.0
    %2795 = vmatpush1.msra.mxu0 0.0
    %2796 = vmatprep.mubr.f32.mxu0 0.0
    %2797 = vmatmul.mubr.f32.gmra.mrb[0].mxu0 %v2708
    %v2798 = vpop.f32.mrb[0].mxu0
    %v2799 = vadd.f32 %v2718, %v2798
    %v2800 = vpop.f32.mrb[0].mxu0
    %v2801 = vadd.f32 %v2726, %v2800
    %2802 = vdwg.mxu0
    %2803 = vmatprep.subr.mxu0 %v1514
    %2804 = vmatpush1.msra.mxu0 %v1513
    %2805 = vmatprep.subr.mxu0 %v1518
    %2806 = vmatpush1.msra.mxu0 %v1517
    %2807 = vmatprep.subr.mxu0 %v1522
    %2808 = vmatpush1.msra.mxu0 %v1521
    %2809 = vmatprep.subr.mxu0 %v1526
    %2810 = vmatpush1.msra.mxu0 %v1525
    %2811 = vmatprep.subr.mxu0 %v1530
    %2812 = vmatpush1.msra.mxu0 %v1529
    %2813 = vmatprep.subr.mxu0 %v1534
    %2814 = vmatpush1.msra.mxu0 %v1533
    %2815 = vmatprep.subr.mxu0 %v1538
    %2816 = vmatpush1.msra.mxu0 %v1537
    %2817 = vmatprep.subr.mxu0 %v1542
    %2818 = vmatpush1.msra.mxu0 %v1541
    %2819 = vmatprep.subr.mxu0 %v1546
    %2820 = vmatpush1.msra.mxu0 %v1545
    %2821 = vmatprep.subr.mxu0 %v1550
    %2822 = vmatpush1.msra.mxu0 %v1549
    %2823 = vmatprep.subr.mxu0 %v1554
    %2824 = vmatpush1.msra.mxu0 %v1553
    %2825 = vmatprep.subr.mxu0 %v1558
    %2826 = vmatpush1.msra.mxu0 %v1557
    %2827 = vmatprep.subr.mxu0 %v1562
    %2828 = vmatpush1.msra.mxu0 %v1561
    %2829 = vmatprep.subr.mxu0 %v1566
    %2830 = vmatpush1.msra.mxu0 %v1565
    %2831 = vmatprep.subr.mxu0 %v1570
    %2832 = vmatpush1.msra.mxu0 %v1569
    %2833 = vmatprep.subr.mxu0 %v1574
    %2834 = vmatpush1.msra.mxu0 %v1573
    %2835 = vmatprep.subr.mxu0 0.0
    %2836 = vmatpush1.msra.mxu0 0.0
    %2837 = vmatprep.subr.mxu0 0.0
    %2838 = vmatpush1.msra.mxu0 0.0
    %2839 = vmatprep.subr.mxu0 0.0
    %2840 = vmatpush1.msra.mxu0 0.0
    %2841 = vmatprep.subr.mxu0 0.0
    %2842 = vmatpush1.msra.mxu0 0.0
    %2843 = vmatprep.subr.mxu0 0.0
    %2844 = vmatpush1.msra.mxu0 0.0
    %2845 = vmatprep.subr.mxu0 0.0
    %2846 = vmatpush1.msra.mxu0 0.0
    %2847 = vmatprep.subr.mxu0 0.0
    %2848 = vmatpush1.msra.mxu0 0.0
    %2849 = vmatprep.subr.mxu0 0.0
    %2850 = vmatpush1.msra.mxu0 0.0
    %2851 = vmatprep.subr.mxu0 0.0
    %2852 = vmatpush1.msra.mxu0 0.0
    %2853 = vmatprep.subr.mxu0 0.0
    %2854 = vmatpush1.msra.mxu0 0.0
    %2855 = vmatprep.subr.mxu0 0.0
    %2856 = vmatpush1.msra.mxu0 0.0
    %2857 = vmatprep.subr.mxu0 0.0
    %2858 = vmatpush1.msra.mxu0 0.0
    %2859 = vmatprep.subr.mxu0 0.0
    %2860 = vmatpush1.msra.mxu0 0.0
    %2861 = vmatprep.subr.mxu0 0.0
    %2862 = vmatpush1.msra.mxu0 0.0
    %2863 = vmatprep.subr.mxu0 0.0
    %2864 = vmatpush1.msra.mxu0 0.0
    %2865 = vmatprep.subr.mxu0 0.0
    %2866 = vmatpush1.msra.mxu0 0.0
    %2867 = vmatprep.mubr.f32.mxu0 0.0
    %2868 = vmatmul.mubr.f32.gmra.mrb[0].mxu0 %v2708
    %v2869 = vpop.f32.mrb[0].mxu0
    %v2870 = vadd.f32 %v2725, %v2869
    %v2871 = vpop.f32.mrb[0].mxu0
    %v2872 = vadd.f32 %v2727, %v2871
    %2873 = vdwg.mxu0
    %v2874 = vxor.u32 %v2799, 2147483648
    %v2875 = vxor.u32 %v2801, 2147483648
    %v2876 = vxor.u32 %v2870, 2147483648
    %v2877 = vmul.f32 %v2874, 1.442695
    %v2878 = vpow.pop %v2877
    %v2879 = vmul.f32 %v2875, 1.442695
    %v2880 = vpow.pop %v2879
    %v2881 = vmul.f32 %v2876, 1.442695
    %v2882 = vpow.pop %v2881
    %v2883 = vadd.f32 %v2878, 1.0
    %v2884 = vadd.f32 %v2880, 1.0
    %v2885 = vadd.f32 %v2882, 1.0
    %v2886 = vrcp.pop %v2883
    %v2887 = vmul.f32 1.0, %v2886
    %v2888 = vrcp.pop %v2884
    %v2889 = vmul.f32 1.0, %v2888
    %v2890 = vrcp.pop %v2885
    %v2891 = vmul.f32 1.0, %v2890
    %v2892 = vtanh.pop %v2872
    %v2893 = vmul.f32 %v2889, %v2706
    %v2894 = vmul.f32 %v2887, %v2892
    %v2895 = vadd.f32 %v2893, %v2894
    %v2896 = vtanh.pop %v2895
    %v2897 = vmul.f32 %v2891, %v2896
    %v2898 = vld [vmem:[%s1341] sm:$0xff]
    %v2900 = vcombine.high %v2898, %v2898
    %v2902 = vunpack.c.l.s4 1983009808
    %v2903 = vunpack.c.0.s8 %v2902
    %v2904 = vlaneseq
    %v2905 = vshrl.u32 %v2904, 7
    %v2906 = vsub.s32 %v2903, %v2905
    %v2907 = vrot.slane %v2898, %v2906
    %v2909 = vunpack.c.l.s4 1983009808
    %v2910 = vunpack.c.0.s8 %v2909
    %v2911 = vlaneseq
    %v2912 = vshrl.u32 %v2911, 7
    %v2913 = vsub.s32 %v2910, %v2912
    %v2914 = vrot.slane %v2900, %v2913
    %v2915 = vcombine.high %v2907, %v2907
    %v2916 = vcombine.high %v2914, %v2914
    %2921 = vmatprep.subr.mxu0 %v1512
    %2922 = vmatpush1.msra.mxu0 %v1511
    %2923 = vmatprep.subr.mxu0 %v1516
    %2924 = vmatpush1.msra.mxu0 %v1515
    %2925 = vmatprep.subr.mxu0 %v1520
    %2926 = vmatpush1.msra.mxu0 %v1519
    %2927 = vmatprep.subr.mxu0 %v1524
    %2928 = vmatpush1.msra.mxu0 %v1523
    %2929 = vmatprep.subr.mxu0 %v1528
    %2930 = vmatpush1.msra.mxu0 %v1527
    %2931 = vmatprep.subr.mxu0 %v1532
    %2932 = vmatpush1.msra.mxu0 %v1531
    %2933 = vmatprep.subr.mxu0 %v1536
    %2934 = vmatpush1.msra.mxu0 %v1535
    %2935 = vmatprep.subr.mxu0 %v1540
    %2936 = vmatpush1.msra.mxu0 %v1539
    %2937 = vmatprep.subr.mxu0 %v1544
    %2938 = vmatpush1.msra.mxu0 %v1543
    %2939 = vmatprep.subr.mxu0 %v1548
    %2940 = vmatpush1.msra.mxu0 %v1547
    %2941 = vmatprep.subr.mxu0 %v1552
    %2942 = vmatpush1.msra.mxu0 %v1551
    %2943 = vmatprep.subr.mxu0 %v1556
    %2944 = vmatpush1.msra.mxu0 %v1555
    %2945 = vmatprep.subr.mxu0 %v1560
    %2946 = vmatpush1.msra.mxu0 %v1559
    %2947 = vmatprep.subr.mxu0 %v1564
    %2948 = vmatpush1.msra.mxu0 %v1563
    %2949 = vmatprep.subr.mxu0 %v1568
    %2950 = vmatpush1.msra.mxu0 %v1567
    %2951 = vmatprep.subr.mxu0 %v1572
    %2952 = vmatpush1.msra.mxu0 %v1571
    %2953 = vmatprep.subr.mxu0 0.0
    %2954 = vmatpush1.msra.mxu0 0.0
    %2955 = vmatprep.subr.mxu0 0.0
    %2956 = vmatpush1.msra.mxu0 0.0
    %2957 = vmatprep.subr.mxu0 0.0
    %2958 = vmatpush1.msra.mxu0 0.0
    %2959 = vmatprep.subr.mxu0 0.0
    %2960 = vmatpush1.msra.mxu0 0.0
    %2961 = vmatprep.subr.mxu0 0.0
    %2962 = vmatpush1.msra.mxu0 0.0
    %2963 = vmatprep.subr.mxu0 0.0
    %2964 = vmatpush1.msra.mxu0 0.0
    %2965 = vmatprep.subr.mxu0 0.0
    %2966 = vmatpush1.msra.mxu0 0.0
    %2967 = vmatprep.subr.mxu0 0.0
    %2968 = vmatpush1.msra.mxu0 0.0
    %2969 = vmatprep.subr.mxu0 0.0
    %2970 = vmatpush1.msra.mxu0 0.0
    %2971 = vmatprep.subr.mxu0 0.0
    %2972 = vmatpush1.msra.mxu0 0.0
    %2973 = vmatprep.subr.mxu0 0.0
    %2974 = vmatpush1.msra.mxu0 0.0
    %2975 = vmatprep.subr.mxu0 0.0
    %2976 = vmatpush1.msra.mxu0 0.0
    %2977 = vmatprep.subr.mxu0 0.0
    %2978 = vmatpush1.msra.mxu0 0.0
    %2979 = vmatprep.subr.mxu0 0.0
    %2980 = vmatpush1.msra.mxu0 0.0
    %2981 = vmatprep.subr.mxu0 0.0
    %2982 = vmatpush1.msra.mxu0 0.0
    %2983 = vmatprep.subr.mxu0 0.0
    %2984 = vmatpush1.msra.mxu0 0.0
    %2985 = vmatprep.mubr.f32.mxu0 0.0
    %2986 = vmatmul.mubr.f32.gmra.mrb[0].mxu0 %v2897
    %v2987 = vpop.f32.mrb[0].mxu0
    %v2988 = vadd.f32 %v2907, %v2987
    %v2989 = vpop.f32.mrb[0].mxu0
    %v2990 = vadd.f32 %v2915, %v2989
    %2991 = vdwg.mxu0
    %2992 = vmatprep.subr.mxu0 %v1514
    %2993 = vmatpush1.msra.mxu0 %v1513
    %2994 = vmatprep.subr.mxu0 %v1518
    %2995 = vmatpush1.msra.mxu0 %v1517
    %2996 = vmatprep.subr.mxu0 %v1522
    %2997 = vmatpush1.msra.mxu0 %v1521
    %2998 = vmatprep.subr.mxu0 %v1526
    %2999 = vmatpush1.msra.mxu0 %v1525
    %3000 = vmatprep.subr.mxu0 %v1530
    %3001 = vmatpush1.msra.mxu0 %v1529
    %3002 = vmatprep.subr.mxu0 %v1534
    %3003 = vmatpush1.msra.mxu0 %v1533
    %3004 = vmatprep.subr.mxu0 %v1538
    %3005 = vmatpush1.msra.mxu0 %v1537
    %3006 = vmatprep.subr.mxu0 %v1542
    %3007 = vmatpush1.msra.mxu0 %v1541
    %3008 = vmatprep.subr.mxu0 %v1546
    %3009 = vmatpush1.msra.mxu0 %v1545
    %3010 = vmatprep.subr.mxu0 %v1550
    %3011 = vmatpush1.msra.mxu0 %v1549
    %3012 = vmatprep.subr.mxu0 %v1554
    %3013 = vmatpush1.msra.mxu0 %v1553
    %3014 = vmatprep.subr.mxu0 %v1558
    %3015 = vmatpush1.msra.mxu0 %v1557
    %3016 = vmatprep.subr.mxu0 %v1562
    %3017 = vmatpush1.msra.mxu0 %v1561
    %3018 = vmatprep.subr.mxu0 %v1566
    %3019 = vmatpush1.msra.mxu0 %v1565
    %3020 = vmatprep.subr.mxu0 %v1570
    %3021 = vmatpush1.msra.mxu0 %v1569
    %3022 = vmatprep.subr.mxu0 %v1574
    %3023 = vmatpush1.msra.mxu0 %v1573
    %3024 = vmatprep.subr.mxu0 0.0
    %3025 = vmatpush1.msra.mxu0 0.0
    %3026 = vmatprep.subr.mxu0 0.0
    %3027 = vmatpush1.msra.mxu0 0.0
    %3028 = vmatprep.subr.mxu0 0.0
    %3029 = vmatpush1.msra.mxu0 0.0
    %3030 = vmatprep.subr.mxu0 0.0
    %3031 = vmatpush1.msra.mxu0 0.0
    %3032 = vmatprep.subr.mxu0 0.0
    %3033 = vmatpush1.msra.mxu0 0.0
    %3034 = vmatprep.subr.mxu0 0.0
    %3035 = vmatpush1.msra.mxu0 0.0
    %3036 = vmatprep.subr.mxu0 0.0
    %3037 = vmatpush1.msra.mxu0 0.0
    %3038 = vmatprep.subr.mxu0 0.0
    %3039 = vmatpush1.msra.mxu0 0.0
    %3040 = vmatprep.subr.mxu0 0.0
    %3041 = vmatpush1.msra.mxu0 0.0
    %3042 = vmatprep.subr.mxu0 0.0
    %3043 = vmatpush1.msra.mxu0 0.0
    %3044 = vmatprep.subr.mxu0 0.0
    %3045 = vmatpush1.msra.mxu0 0.0
    %3046 = vmatprep.subr.mxu0 0.0
    %3047 = vmatpush1.msra.mxu0 0.0
    %3048 = vmatprep.subr.mxu0 0.0
    %3049 = vmatpush1.msra.mxu0 0.0
    %3050 = vmatprep.subr.mxu0 0.0
    %3051 = vmatpush1.msra.mxu0 0.0
    %3052 = vmatprep.subr.mxu0 0.0
    %3053 = vmatpush1.msra.mxu0 0.0
    %3054 = vmatprep.subr.mxu0 0.0
    %3055 = vmatpush1.msra.mxu0 0.0
    %3056 = vmatprep.mubr.f32.mxu0 0.0
    %3057 = vmatmul.mubr.f32.gmra.mrb[0].mxu0 %v2897
    %v3058 = vpop.f32.mrb[0].mxu0
    %v3059 = vadd.f32 %v2914, %v3058
    %v3060 = vpop.f32.mrb[0].mxu0
    %v3061 = vadd.f32 %v2916, %v3060
    %3062 = vdwg.mxu0
    %v3063 = vxor.u32 %v2988, 2147483648
    %v3064 = vxor.u32 %v2990, 2147483648
    %v3065 = vxor.u32 %v3059, 2147483648
    %v3066 = vmul.f32 %v3063, 1.442695
    %v3067 = vpow.pop %v3066
    %v3068 = vmul.f32 %v3064, 1.442695
    %v3069 = vpow.pop %v3068
    %v3070 = vmul.f32 %v3065, 1.442695
    %v3071 = vpow.pop %v3070
    %v3072 = vadd.f32 %v3067, 1.0
    %v3073 = vadd.f32 %v3069, 1.0
    %v3074 = vadd.f32 %v3071, 1.0
    %v3075 = vrcp.pop %v3072
    %v3076 = vmul.f32 1.0, %v3075
    %v3077 = vrcp.pop %v3073
    %v3078 = vmul.f32 1.0, %v3077
    %v3079 = vrcp.pop %v3074
    %v3080 = vmul.f32 1.0, %v3079
    %v3081 = vtanh.pop %v3061
    %v3082 = vmul.f32 %v3078, %v2895
    %v3083 = vmul.f32 %v3076, %v3081
    %v3084 = vadd.f32 %v3082, %v3083
    %v3085 = vtanh.pop %v3084
    %v3086 = vmul.f32 %v3080, %v3085
    %v3087 = vld [vmem:[#allocation9] sm:$0xff]
    %v3088 = vld [vmem:[#allocation9 + $0x8] sm:$0xff]
    %v3089 = vld [vmem:[#allocation9 + $0x10] sm:$0xff]
    %v3090 = vld [vmem:[#allocation9 + $0x18] sm:$0xff]
    %v3091 = vld [vmem:[#allocation9 + $0x20] sm:$0xff]
    %v3092 = vld [vmem:[#allocation9 + $0x28] sm:$0xff]
    %v3093 = vld [vmem:[#allocation9 + $0x30] sm:$0xff]
    %v3094 = vld [vmem:[#allocation9 + $0x38] sm:$0xff]
    %v3095 = vld [vmem:[%s5] sm:$0x1]
    %v3097 = vlaneseq
    %v3098 = vshrl.u32 %v3097, 7
    %v3099 = vsub.s32 0, %v3098
    %v3100 = vrot.slane %v3095, %v3099
    %vm3102 = vcmask 523264
    %v3104 = vsel %vm3102, %v3086, 0
    %3106 = vmatprep.subr.mxu0 0.0
    %3107 = vmatpush1.msra.mxu0 %v3087
    %3108 = vmatprep.subr.mxu0 0.0
    %3109 = vmatpush1.msra.mxu0 %v3088
    %3110 = vmatprep.subr.mxu0 0.0
    %3111 = vmatpush1.msra.mxu0 %v3089
    %3112 = vmatprep.subr.mxu0 0.0
    %3113 = vmatpush1.msra.mxu0 %v3090
    %3114 = vmatprep.subr.mxu0 0.0
    %3115 = vmatpush1.msra.mxu0 %v3091
    %3116 = vmatprep.subr.mxu0 0.0
    %3117 = vmatpush1.msra.mxu0 %v3092
    %3118 = vmatprep.subr.mxu0 0.0
    %3119 = vmatpush1.msra.mxu0 %v3093
    %3120 = vmatprep.subr.mxu0 0.0
    %3121 = vmatpush1.msra.mxu0 %v3094
    %3122 = vmatprep.subr.mxu0 0.0
    %3123 = vmatpush1.msra.mxu0 0.0
    %3124 = vmatprep.subr.mxu0 0.0
    %3125 = vmatpush1.msra.mxu0 0.0
    %3126 = vmatprep.subr.mxu0 0.0
    %3127 = vmatpush1.msra.mxu0 0.0
    %3128 = vmatprep.subr.mxu0 0.0
    %3129 = vmatpush1.msra.mxu0 0.0
    %3130 = vmatprep.subr.mxu0 0.0
    %3131 = vmatpush1.msra.mxu0 0.0
    %3132 = vmatprep.subr.mxu0 0.0
    %3133 = vmatpush1.msra.mxu0 0.0
    %3134 = vmatprep.subr.mxu0 0.0
    %3135 = vmatpush1.msra.mxu0 0.0
    %3136 = vmatprep.subr.mxu0 0.0
    %3137 = vmatpush1.msra.mxu0 0.0
    %3138 = vmatprep.subr.mxu0 0.0
    %3139 = vmatpush1.msra.mxu0 0.0
    %3140 = vmatprep.subr.mxu0 0.0
    %3141 = vmatpush1.msra.mxu0 0.0
    %3142 = vmatprep.subr.mxu0 0.0
    %3143 = vmatpush1.msra.mxu0 0.0
    %3144 = vmatprep.subr.mxu0 0.0
    %3145 = vmatpush1.msra.mxu0 0.0
    %3146 = vmatprep.subr.mxu0 0.0
    %3147 = vmatpush1.msra.mxu0 0.0
    %3148 = vmatprep.subr.mxu0 0.0
    %3149 = vmatpush1.msra.mxu0 0.0
    %3150 = vmatprep.subr.mxu0 0.0
    %3151 = vmatpush1.msra.mxu0 0.0
    %3152 = vmatprep.subr.mxu0 0.0
    %3153 = vmatpush1.msra.mxu0 0.0
    %3154 = vmatprep.subr.mxu0 0.0
    %3155 = vmatpush1.msra.mxu0 0.0
    %3156 = vmatprep.subr.mxu0 0.0
    %3157 = vmatpush1.msra.mxu0 0.0
    %3158 = vmatprep.subr.mxu0 0.0
    %3159 = vmatpush1.msra.mxu0 0.0
    %3160 = vmatprep.subr.mxu0 0.0
    %3161 = vmatpush1.msra.mxu0 0.0
    %3162 = vmatprep.subr.mxu0 0.0
    %3163 = vmatpush1.msra.mxu0 0.0
    %3164 = vmatprep.subr.mxu0 0.0
    %3165 = vmatpush1.msra.mxu0 0.0
    %3166 = vmatprep.subr.mxu0 0.0
    %3167 = vmatpush1.msra.mxu0 0.0
    %3168 = vmatprep.subr.mxu0 0.0
    %3169 = vmatpush1.msra.mxu0 0.0
    %3170 = vmatprep.mubr.f32.mxu0 0.0
    %3171 = vmatmul.mubr.f32.gmra.mrb[0].mxu0 %v3104
    %v3172 = vpop.f32.mrb[0].mxu0
    %v3173 = vadd.f32 %v3100, %v3172
    %v3174 = vpop.f32.mrb[0].mxu0
    %3175 = vdwg.mxu0
    %3176 = vst [vmem:[#allocation11] sm:$0x3] %v3173
    // Predicated region
    $region42: #{tpu_custom_call.1} parent=1 // pred_check
      _
    $region43: #{tpu_custom_call.1} parent=1 // pred_check_branch
      %3178 = sbr.rel (0) target = $region45
    $region44: #{tpu_custom_call.1} parent=1 // pred_region
      %s3180 = ssub.s32 32, 32
      %3181 = vsyncadd [#allocation5], %s3180
      %s3183 = sshll.u32 [#allocation11], 4
      %s3184 = int_to_ptr.vmem [resolvable:$true] %s3183
      %3186 = dma.vmem_to_hbm [thread:$0]  %s3184, 32, %s6, [#allocation5]
    $region45: #{tpu_custom_call.1} parent=1 // pred_fallthru
      _
    // Predicated region
    $region46: #{tpu_custom_call.1} parent=1 // pred_check
      _
    $region47: #{tpu_custom_call.1} parent=1 // pred_check_branch
      %3188 = sbr.rel (0) target = $region49
    $region48: #{tpu_custom_call.1} parent=1 // pred_region
      %3189 = dma.done [#allocation5], 32
    $region49: #{tpu_custom_call.1} parent=1 // pred_fallthru
      _
    %3190 = vsyncpa [#allocation4], 1
    %3191 = vsyncpa [#allocation7], 1
    %3192 = vsyncpa [#allocation10], 1
    %3193 = vsyncpa [#allocation5], 1

</llo_original>
